<compile_context>
chip_gen: v5e
topology: v5e:2x2
jax: 0.10.0
libtpu: 0.0.40
codegen_flags: <defaults>
</compile_context>

<pallas_src>
import functools

import jax
import jax.numpy as jnp
from jax.experimental import pallas as pl
from jax.experimental.pallas import tpu as pltpu


def _round_up(v, m):
    return (v + m - 1) // m * m


# --------------------------------------------------------------------------
# Fused relational-conv kernel (edge messages + scatter-mean + root + bias
# [+ log_softmax epilogue for the last layer])
# --------------------------------------------------------------------------
def _rgcn_conv_kernel(xj_ref, coeff_ref, rmsg_ref, dst_ref, x_ref, deginv_ref,
                      basis2d_ref, rootw_ref, bias_ref, o_ref, acc_ref, *,
                      num_bases, cout, valid_out, apply_log_softmax):
    i = pl.program_id(0)          # node tile  (parallel)
    j = pl.program_id(1)          # edge tile  (reduction, last)

    @pl.when(j == 0)
    def _init():
        acc_ref[...] = jnp.zeros_like(acc_ref)

    # ---- per-edge messages: one wide MXU matmul (bf16 in, f32 accum) ----
    xj = xj_ref[...].astype(jnp.bfloat16)                       # (T, Cin)
    basis2d = basis2d_ref[...].astype(jnp.bfloat16)             # (Cin, B*Cout)
    tmp = jnp.dot(xj, basis2d,
                  preferred_element_type=jnp.float32)           # (T, B*Cout)
    coeff = coeff_ref[...]                                      # (T, B)  f32
    med = rmsg_ref[...]                                         # (T, Cout) f32  (= r @ W_rel)
    for b in range(num_bases):                                  # cheap VPU fma passes
        med = med + coeff[:, b:b + 1] * tmp[:, b * cout:(b + 1) * cout]

    # ---- scatter-add into this node tile via a local 0/1 selection matmul ----
    tn = acc_ref.shape[0]
    t = med.shape[0]
    node_ids = i * tn + jax.lax.broadcasted_iota(jnp.int32, (tn, t), 0)   # (TN, T)
    sel = (dst_ref[...] == node_ids).astype(jnp.bfloat16)                 # exact 0/1
    acc_ref[...] += jnp.dot(sel, med.astype(jnp.bfloat16),
                            preferred_element_type=jnp.float32)           # (TN, Cout)

    # ---- finalize: mean-normalize + root weight + bias (+ log_softmax) ----
    @pl.when(j == pl.num_programs(1) - 1)
    def _finalize():
        xr = x_ref[...].astype(jnp.bfloat16)
        out = (acc_ref[...] * deginv_ref[...]                    # f32 degree normalize
               + jnp.dot(xr, rootw_ref[...].astype(jnp.bfloat16),
                         preferred_element_type=jnp.float32)
               + bias_ref[...])
        if apply_log_softmax:
            lane = jax.lax.broadcasted_iota(jnp.int32, out.shape, 1)
            mask = lane < valid_out                              # ignore padded lanes
            z = jnp.where(mask, out, -jnp.inf)
            z = z - jnp.max(z, axis=1, keepdims=True)
            ez = jnp.where(mask, jnp.exp(z), 0.0)
            lse = jnp.log(jnp.sum(ez, axis=1, keepdims=True))
            out = jnp.where(mask, z - lse, 0.0)
        o_ref[...] = out


def relational_conv(xj, coeff, rmsg, dst, x, deg_inv, basis2d, rootw, bias, *,
                    num_bases, cout_pad, valid_out, apply_log_softmax,
                    edge_tile, node_tile):
    e_pad, cin_pad = xj.shape
    n_pad = x.shape[0]
    grid = (n_pad // node_tile, e_pad // edge_tile)

    kern = functools.partial(_rgcn_conv_kernel, num_bases=num_bases,
                             cout=cout_pad, valid_out=valid_out,
                             apply_log_softmax=apply_log_softmax)

    in_specs = [
        pl.BlockSpec((edge_tile, cin_pad), lambda i, j: (j, 0)),            # xj (gathered x[src])
        pl.BlockSpec((edge_tile, num_bases), lambda i, j: (j, 0)),          # coeff[edge_type]
        pl.BlockSpec((edge_tile, cout_pad), lambda i, j: (j, 0)),           # r @ W_rel per edge
        pl.BlockSpec((1, edge_tile), lambda i, j: (0, j)),                  # dst indices
        pl.BlockSpec((node_tile, cin_pad), lambda i, j: (i, 0)),            # x (root term)
        pl.BlockSpec((node_tile, 1), lambda i, j: (i, 0)),                  # 1/deg
        pl.BlockSpec((cin_pad, num_bases * cout_pad), lambda i, j: (0, 0)),  # basis2d
        pl.BlockSpec((cin_pad, cout_pad), lambda i, j: (0, 0)),             # root weight
        pl.BlockSpec((1, cout_pad), lambda i, j: (0, 0)),                   # bias
    ]
    out_spec = pl.BlockSpec((node_tile, cout_pad), lambda i, j: (i, 0))

    return pl.pallas_call(
        kern,
        out_shape=jax.ShapeDtypeStruct((n_pad, cout_pad), jnp.float32),
        grid_spec=pltpu.PrefetchScalarGridSpec(
            num_scalar_prefetch=0,
            grid=grid,
            in_specs=in_specs,
            out_specs=out_spec,
            scratch_shapes=[pltpu.VMEM((node_tile, cout_pad), jnp.float32)],
        ),
        compiler_params=pltpu.CompilerParams(
            dimension_semantics=("parallel", "arbitrary"),
            vmem_limit_bytes=32 * 1024 * 1024,
        ),
    )(xj, coeff, rmsg, dst, x, deg_inv, basis2d, rootw, bias)


# --------------------------------------------------------------------------
# Parameter init + forward glue (cheap JAX ops: padding, small einsums, gathers)
# --------------------------------------------------------------------------
def init_net_params(key, ent_dim, relation_num, class_num, hidden=50, num_bases=5):
    ks = jax.random.split(key, 8)
    num_edge_types = 2 * relation_num
    return {
        # nn.Parameter(torch.rand([100, 50])) -> uniform [0, 1)
        "rel_weight": jax.random.uniform(ks[0], (ent_dim, hidden), jnp.float32),
        "conv1": dict(
            basis=0.1 * jax.random.normal(ks[1], (num_bases, ent_dim, hidden), jnp.float32),
            comp=0.1 * jax.random.normal(ks[2], (num_edge_types, num_bases), jnp.float32),
            root=0.1 * jax.random.normal(ks[3], (ent_dim, hidden), jnp.float32),
            bias=jnp.zeros((1, hidden), jnp.float32),
        ),
        "conv2": dict(
            basis=0.1 * jax.random.normal(ks[4], (num_bases, hidden, class_num), jnp.float32),
            comp=0.1 * jax.random.normal(ks[5], (num_edge_types, num_bases), jnp.float32),
            root=0.1 * jax.random.normal(ks[6], (hidden, class_num), jnp.float32),
            bias=jnp.zeros((1, class_num), jnp.float32),
        ),
    }


def _prep_layer(conv_params, rel_table, cin_real, cin_pad, cout_real, cout_pad,
                edge_type, e_pad):
    """Pad weights to lane-dense shapes; precompute per-relation-type r@W."""
    basis = conv_params["basis"]          # (B, cin_real, cout_real)
    comp = conv_params["comp"]            # (2R, B)
    root = conv_params["root"]            # (cin_real, cout_real)
    bias = conv_params["bias"]            # (1, cout_real)
    nb = basis.shape[0]
    e = edge_type.shape[0]

    basis_p = jnp.zeros((nb, cin_pad, cout_pad), jnp.float32)
    basis_p = basis_p.at[:, :cin_real, :cout_real].set(basis)
    # basis2d[i, b*Cout + o] = basis_p[b, i, o]  -> one wide MXU matmul in-kernel
    basis2d = jnp.transpose(basis_p, (1, 0, 2)).reshape(cin_pad, nb * cout_pad)

    # Per-relation-type TransE contribution r @ W_t (only 2R rows, not per edge).
    rel_p = jnp.zeros((rel_table.shape[0], cin_pad), jnp.float32)
    rel_p = rel_p.at[:, :cin_real].set(rel_table)
    w_t = jnp.einsum("tb,bio->tio", comp, basis_p)            # (2R, cin_pad, cout_pad)
    rcontrib = jnp.einsum("ti,tio->to", rel_p, w_t)           # (2R, cout_pad)

    coeff_e = comp[edge_type]                                 # (E, B)
    rmsg_e = rcontrib[edge_type]                              # (E, cout_pad)

    root_p = jnp.zeros((cin_pad, cout_pad), jnp.float32).at[:cin_real, :cout_real].set(root)
    bias_p = jnp.zeros((1, cout_pad), jnp.float32).at[:, :cout_real].set(bias)

    coeff_p = jnp.zeros((e_pad, nb), jnp.float32).at[:e].set(coeff_e)       # padded edges -> 0
    rmsg_p = jnp.zeros((e_pad, cout_pad), jnp.float32).at[:e].set(rmsg_e)   # padded edges -> 0
    return basis2d, root_p, bias_p, coeff_p, rmsg_p


def net_forward(params, rel_embedding, x, edge_index, edge_type, target_node,
                *, node_tile=None, edge_tile=None):
    n, ent_dim = x.shape
    hidden = params["conv1"]["root"].shape[1]
    class_num = params["conv2"]["root"].shape[1]
    num_bases = params["conv1"]["basis"].shape[0]

    cin1 = _round_up(ent_dim, 128)      # 100 -> 128
    c1out = _round_up(hidden, 128)      # 50  -> 128
    c2out = _round_up(class_num, 128)   # 8   -> 128

    src, dst = edge_index[0], edge_index[1]
    e = src.shape[0]

    if edge_tile is None:
        edge_tile = min(512, _round_up(e, 128))
    if node_tile is None:
        node_tile = min(128, _round_up(n, 8))
    e_pad = _round_up(e, edge_tile)
    n_pad = _round_up(n, node_tile)

    # self.rel_embedding = cat([rel_embedding, rel_embedding], dim=0)
    rel2x = jnp.concatenate([rel_embedding, rel_embedding], axis=0)       # (2R, 100)

    # x[target_node] = 0
    x = x.at[target_node].set(0.0)
    x_p = jnp.zeros((n_pad, cin1), jnp.float32).at[:n, :ent_dim].set(x)

    # Degree (scatter-mean normalization) + dst indices for the in-kernel scatter.
    deg = jnp.zeros((n_pad,), jnp.float32).at[dst].add(1.0)
    deg_inv = (1.0 / jnp.maximum(deg, 1.0)).reshape(n_pad, 1)
    dst_p = jnp.zeros((1, e_pad), jnp.int32).at[0, :e].set(dst.astype(jnp.int32))

    # ---- conv1 ----
    basis2d1, root1, bias1, coeff1, rmsg1 = _prep_layer(
        params["conv1"], rel2x, ent_dim, cin1, hidden, c1out, edge_type, e_pad)
    xj1 = jnp.zeros((e_pad, cin1), jnp.float32).at[:e].set(x_p[src])      # index-based gather
    h1 = relational_conv(xj1, coeff1, rmsg1, dst_p, x_p, deg_inv,
                         basis2d1, root1, bias1,
                         num_bases=num_bases, cout_pad=c1out, valid_out=hidden,
                         apply_log_softmax=False,
                         edge_tile=edge_tile, node_tile=node_tile)        # (n_pad, 128)

    # ---- conv2 (rel_embedding2 = rel_embedding @ rel_weight, per relation type) ----
    rel_proj = rel2x @ params["rel_weight"]                               # (2R, 50)
    basis2d2, root2, bias2, coeff2, rmsg2 = _prep_layer(
        params["conv2"], rel_proj, hidden, c1out, class_num, c2out, edge_type, e_pad)
    xj2 = jnp.zeros((e_pad, c1out), jnp.float32).at[:e].set(h1[src])      # index-based gather
    out = relational_conv(xj2, coeff2, rmsg2, dst_p, h1, deg_inv,
                          basis2d2, root2, bias2,
                          num_bases=num_bases, cout_pad=c2out, valid_out=class_num,
                          apply_log_softmax=True,                         # fused epilogue
                          edge_tile=edge_tile, node_tile=node_tile)

    return out[:n, :class_num]


# --------------------------------------------------------------------------
if __name__ == "__main__":
    key = jax.random.PRNGKey(0)
    N, E, R, CLASS_NUM = 64, 512, 6, 8
    ENT_DIM = 100   # module hard-codes rel_weight shape [100, 50]
    ks = jax.random.split(key, 6)

    x = jax.random.normal(ks[0], (N, ENT_DIM), jnp.float32)
    rel_embedding = jax.random.normal(ks[1], (R, ENT_DIM), jnp.float32)
    edge_index = jax.random.randint(ks[2], (2, E), 0, N, dtype=jnp.int32)
    edge_type = jax.random.randint(ks[3], (E,), 0, 2 * R, dtype=jnp.int32)
    target_node = 3

    params = init_net_params(ks[4], ENT_DIM, R, CLASS_NUM)

    fwd = jax.jit(functools.partial(net_forward, node_tile=32, edge_tile=128))
    out = fwd(params, rel_embedding, x, edge_index, edge_type, target_node)
    out = jax.block_until_ready(out)

    assert out.shape == (N, CLASS_NUM)
    assert bool(jnp.all(jnp.isfinite(out)))
    # log_softmax rows must exponentiate-sum to 1 (epilogue is f32)
    row_sums = jnp.sum(jnp.exp(out), axis=1)
    assert bool(jnp.all(jnp.abs(row_sums - 1.0) < 1e-3))
    print("KERNEL_OK")
</pallas_src>

<mosaic_0001>
module attributes {stable_mosaic.version = 11 : i64} {
  func.func @_rgcn_conv_kernel(%arg0: i32, %arg1: i32, %arg2: memref<128x128xf32, #tpu.memory_space<vmem>>, %arg3: memref<128x5xf32, #tpu.memory_space<vmem>>, %arg4: memref<128x128xf32, #tpu.memory_space<vmem>>, %arg5: memref<1x128xi32, #tpu.memory_space<vmem>>, %arg6: memref<32x128xf32, #tpu.memory_space<vmem>>, %arg7: memref<32x1xf32, #tpu.memory_space<vmem>>, %arg8: memref<128x640xf32, #tpu.memory_space<vmem>>, %arg9: memref<128x128xf32, #tpu.memory_space<vmem>>, %arg10: memref<1x128xf32, #tpu.memory_space<vmem>>, %arg11: memref<32x128xf32, #tpu.memory_space<vmem>>, %arg12: memref<32x128xf32, #tpu.memory_space<vmem>>) attributes {dimension_semantics = [#tpu.dimension_semantics<parallel>, #tpu.dimension_semantics<arbitrary>], iteration_bounds = array<i64: 2, 4>, scalar_prefetch = 0 : i64, scratch_operands = 1 : i64, tpu.core_type = #tpu.core_type<tc>, window_params = [{transform_indices = @transform_0, window_bounds = array<i64: 128, 128>}, {transform_indices = @transform_1, window_bounds = array<i64: 128, 5>}, {transform_indices = @transform_2, window_bounds = array<i64: 128, 128>}, {transform_indices = @transform_3, window_bounds = array<i64: 1, 128>}, {transform_indices = @transform_4, window_bounds = array<i64: 32, 128>}, {transform_indices = @transform_5, window_bounds = array<i64: 32, 1>}, {pipeline_mode = #tpu.pipeline_mode<synchronous>, transform_indices = @transform_6, window_bounds = array<i64: 128, 640>}, {pipeline_mode = #tpu.pipeline_mode<synchronous>, transform_indices = @transform_7, window_bounds = array<i64: 128, 128>}, {pipeline_mode = #tpu.pipeline_mode<synchronous>, transform_indices = @transform_8, window_bounds = array<i64: 1, 128>}, {transform_indices = @transform_9, window_bounds = array<i64: 32, 128>}]} {
    %c0_i32 = arith.constant 0 : i32
    %0 = arith.cmpi eq, %arg1, %c0_i32 : i32
    %1 = arith.extui %0 : i1 to i32
    %c0_i32_0 = arith.constant 0 : i32
    %2 = arith.cmpi ne, %1, %c0_i32_0 : i32
    scf.if %2 {
      %cst_16 = arith.constant 0.000000e+00 : f32
      %53 = vector.broadcast %cst_16 : f32 to vector<32x128xf32>
      %c0_17 = arith.constant 0 : index
      %c0_18 = arith.constant 0 : index
      %54 = vector.load %arg12[%c0_17, %c0_18] : memref<32x128xf32, #tpu.memory_space<vmem>>, vector<32x128xf32>
      tpu.vector_store %arg12[%c0_17, %c0_18], %53 {strides = array<i32>} : memref<32x128xf32, #tpu.memory_space<vmem>>, vector<32x128xf32>,
    } else {
    }
    %c0 = arith.constant 0 : index
    %c0_1 = arith.constant 0 : index
    %3 = vector.load %arg2[%c0, %c0_1] : memref<128x128xf32, #tpu.memory_space<vmem>>, vector<128x128xf32>
    %4 = arith.truncf %3 : vector<128x128xf32> to vector<128x128xbf16>
    %c0_2 = arith.constant 0 : index
    %c0_3 = arith.constant 0 : index
    %5 = vector.load %arg8[%c0_2, %c0_3] : memref<128x640xf32, #tpu.memory_space<vmem>>, vector<128x640xf32>
    %6 = arith.truncf %5 : vector<128x640xf32> to vector<128x640xbf16>
    %cst = arith.constant dense<0.000000e+00> : vector<128x640xf32>
    %7 = tpu.matmul %4, %6, %cst {dimension_numbers = #tpu.dot_dimension_numbers<[1], [0], [0], [1], [0, 0, 1, 1], [], []>} : vector<128x128xbf16>, vector<128x640xbf16>, vector<128x640xf32> -> vector<128x640xf32>
    %c0_4 = arith.constant 0 : index
    %c0_5 = arith.constant 0 : index
    %8 = vector.load %arg3[%c0_4, %c0_5] : memref<128x5xf32, #tpu.memory_space<vmem>>, vector<128x5xf32>
    %c0_6 = arith.constant 0 : index
    %c0_7 = arith.constant 0 : index
    %9 = vector.load %arg4[%c0_6, %c0_7] : memref<128x128xf32, #tpu.memory_space<vmem>>, vector<128x128xf32>
    %10 = vector.extract_strided_slice %8 {offsets = [0, 0], sizes = [128, 1], strides = [1, 1]} : vector<128x5xf32> to vector<128x1xf32>
    %11 = vector.extract_strided_slice %7 {offsets = [0, 0], sizes = [128, 128], strides = [1, 1]} : vector<128x640xf32> to vector<128x128xf32>
    %12 = vector.broadcast %10 : vector<128x1xf32> to vector<128x128xf32>
    %13 = arith.mulf %12, %11 : vector<128x128xf32>
    %14 = arith.addf %9, %13 : vector<128x128xf32>
    %15 = vector.extract_strided_slice %8 {offsets = [0, 1], sizes = [128, 1], strides = [1, 1]} : vector<128x5xf32> to vector<128x1xf32>
    %16 = vector.extract_strided_slice %7 {offsets = [0, 128], sizes = [128, 128], strides = [1, 1]} : vector<128x640xf32> to vector<128x128xf32>
    %17 = vector.broadcast %15 : vector<128x1xf32> to vector<128x128xf32>
    %18 = arith.mulf %17, %16 : vector<128x128xf32>
    %19 = arith.addf %14, %18 : vector<128x128xf32>
    %20 = vector.extract_strided_slice %8 {offsets = [0, 2], sizes = [128, 1], strides = [1, 1]} : vector<128x5xf32> to vector<128x1xf32>
    %21 = vector.extract_strided_slice %7 {offsets = [0, 256], sizes = [128, 128], strides = [1, 1]} : vector<128x640xf32> to vector<128x128xf32>
    %22 = vector.broadcast %20 : vector<128x1xf32> to vector<128x128xf32>
    %23 = arith.mulf %22, %21 : vector<128x128xf32>
    %24 = arith.addf %19, %23 : vector<128x128xf32>
    %25 = vector.extract_strided_slice %8 {offsets = [0, 3], sizes = [128, 1], strides = [1, 1]} : vector<128x5xf32> to vector<128x1xf32>
    %26 = vector.extract_strided_slice %7 {offsets = [0, 384], sizes = [128, 128], strides = [1, 1]} : vector<128x640xf32> to vector<128x128xf32>
    %27 = vector.broadcast %25 : vector<128x1xf32> to vector<128x128xf32>
    %28 = arith.mulf %27, %26 : vector<128x128xf32>
    %29 = arith.addf %24, %28 : vector<128x128xf32>
    %30 = vector.extract_strided_slice %8 {offsets = [0, 4], sizes = [128, 1], strides = [1, 1]} : vector<128x5xf32> to vector<128x1xf32>
    %31 = vector.extract_strided_slice %7 {offsets = [0, 512], sizes = [128, 128], strides = [1, 1]} : vector<128x640xf32> to vector<128x128xf32>
    %32 = vector.broadcast %30 : vector<128x1xf32> to vector<128x128xf32>
    %33 = arith.mulf %32, %31 : vector<128x128xf32>
    %34 = arith.addf %29, %33 : vector<128x128xf32>
    %c32_i32 = arith.constant 32 : i32
    %35 = arith.muli %arg0, %c32_i32 : i32
    %36 = tpu.iota {dimensions = array<i32: 0>} : vector<32x128xi32>
    %37 = vector.broadcast %35 : i32 to vector<32x128xi32>
    %38 = arith.addi %37, %36 : vector<32x128xi32>
    %c0_8 = arith.constant 0 : index
    %c0_9 = arith.constant 0 : index
    %39 = vector.load %arg5[%c0_8, %c0_9] : memref<1x128xi32, #tpu.memory_space<vmem>>, vector<1x128xi32>
    %40 = vector.broadcast %39 : vector<1x128xi32> to vector<32x128xi32>
    %41 = arith.cmpi eq, %40, %38 : vector<32x128xi32>
    %42 = arith.extui %41 : vector<32x128xi1> to vector<32x128xi32>
    %43 = arith.sitofp %42 : vector<32x128xi32> to vector<32x128xf32>
    %44 = arith.truncf %43 : vector<32x128xf32> to vector<32x128xbf16>
    %c0_10 = arith.constant 0 : index
    %c0_11 = arith.constant 0 : index
    %45 = vector.load %arg12[%c0_10, %c0_11] : memref<32x128xf32, #tpu.memory_space<vmem>>, vector<32x128xf32>
    %46 = arith.truncf %34 : vector<128x128xf32> to vector<128x128xbf16>
    %cst_12 = arith.constant dense<0.000000e+00> : vector<32x128xf32>
    %47 = tpu.matmul %44, %46, %cst_12 {dimension_numbers = #tpu.dot_dimension_numbers<[1], [0], [0], [1], [0, 0, 1, 1], [], []>} : vector<32x128xbf16>, vector<128x128xbf16>, vector<32x128xf32> -> vector<32x128xf32>
    %48 = arith.addf %45, %47 : vector<32x128xf32>
    %c0_13 = arith.constant 0 : index
    %c0_14 = arith.constant 0 : index
    %49 = vector.load %arg12[%c0_13, %c0_14] : memref<32x128xf32, #tpu.memory_space<vmem>>, vector<32x128xf32>
    tpu.vector_store %arg12[%c0_13, %c0_14], %48 {strides = array<i32>} : memref<32x128xf32, #tpu.memory_space<vmem>>, vector<32x128xf32>,
    %c3_i32 = arith.constant 3 : i32
    %50 = arith.cmpi eq, %arg1, %c3_i32 : i32
    %51 = arith.extui %50 : i1 to i32
    %c0_i32_15 = arith.constant 0 : i32
    %52 = arith.cmpi ne, %51, %c0_i32_15 : i32
    scf.if %52 {
      %c0_16 = arith.constant 0 : index
      %c0_17 = arith.constant 0 : index
      %53 = vector.load %arg6[%c0_16, %c0_17] : memref<32x128xf32, #tpu.memory_space<vmem>>, vector<32x128xf32>
      %54 = arith.truncf %53 : vector<32x128xf32> to vector<32x128xbf16>
      %c0_18 = arith.constant 0 : index
      %c0_19 = arith.constant 0 : index
      %55 = vector.load %arg12[%c0_18, %c0_19] : memref<32x128xf32, #tpu.memory_space<vmem>>, vector<32x128xf32>
      %c0_20 = arith.constant 0 : index
      %c0_21 = arith.constant 0 : index
      %56 = vector.load %arg7[%c0_20, %c0_21] : memref<32x1xf32, #tpu.memory_space<vmem>>, vector<32x1xf32>
      %57 = vector.broadcast %56 : vector<32x1xf32> to vector<32x128xf32>
      %58 = arith.mulf %55, %57 : vector<32x128xf32>
      %c0_22 = arith.constant 0 : index
      %c0_23 = arith.constant 0 : index
      %59 = vector.load %arg9[%c0_22, %c0_23] : memref<128x128xf32, #tpu.memory_space<vmem>>, vector<128x128xf32>
      %60 = arith.truncf %59 : vector<128x128xf32> to vector<128x128xbf16>
      %cst_24 = arith.constant dense<0.000000e+00> : vector<32x128xf32>
      %61 = tpu.matmul %54, %60, %cst_24 {dimension_numbers = #tpu.dot_dimension_numbers<[1], [0], [0], [1], [0, 0, 1, 1], [], []>} : vector<32x128xbf16>, vector<128x128xbf16>, vector<32x128xf32> -> vector<32x128xf32>
      %62 = arith.addf %58, %61 : vector<32x128xf32>
      %c0_25 = arith.constant 0 : index
      %c0_26 = arith.constant 0 : index
      %63 = vector.load %arg10[%c0_25, %c0_26] : memref<1x128xf32, #tpu.memory_space<vmem>>, vector<1x128xf32>
      %64 = vector.broadcast %63 : vector<1x128xf32> to vector<32x128xf32>
      %65 = arith.addf %62, %64 : vector<32x128xf32>
      %c0_27 = arith.constant 0 : index
      %c0_28 = arith.constant 0 : index
      %66 = vector.load %arg11[%c0_27, %c0_28] : memref<32x128xf32, #tpu.memory_space<vmem>>, vector<32x128xf32>
      tpu.vector_store %arg11[%c0_27, %c0_28], %65 {strides = array<i32>} : memref<32x128xf32, #tpu.memory_space<vmem>>, vector<32x128xf32>,
    } else {
    }
    return
  }
  func.func @transform_0(%arg0: i32, %arg1: i32) -> (i32, i32) {
    %c0_i32 = arith.constant 0 : i32
    %c0_i32_0 = arith.constant 0 : i32
    return %arg1, %c0_i32 : i32, i32
  }
  func.func @transform_1(%arg0: i32, %arg1: i32) -> (i32, i32) {
    %c0_i32 = arith.constant 0 : i32
    %c0_i32_0 = arith.constant 0 : i32
    return %arg1, %c0_i32 : i32, i32
  }
  func.func @transform_2(%arg0: i32, %arg1: i32) -> (i32, i32) {
    %c0_i32 = arith.constant 0 : i32
    %c0_i32_0 = arith.constant 0 : i32
    return %arg1, %c0_i32 : i32, i32
  }
  func.func @transform_3(%arg0: i32, %arg1: i32) -> (i32, i32) {
    %c0_i32 = arith.constant 0 : i32
    %c0_i32_0 = arith.constant 0 : i32
    return %c0_i32, %arg1 : i32, i32
  }
  func.func @transform_4(%arg0: i32, %arg1: i32) -> (i32, i32) {
    %c0_i32 = arith.constant 0 : i32
    %c0_i32_0 = arith.constant 0 : i32
    return %arg0, %c0_i32 : i32, i32
  }
  func.func @transform_5(%arg0: i32, %arg1: i32) -> (i32, i32) {
    %c0_i32 = arith.constant 0 : i32
    %c0_i32_0 = arith.constant 0 : i32
    return %arg0, %c0_i32 : i32, i32
  }
  func.func @transform_6(%arg0: i32, %arg1: i32) -> (i32, i32) {
    %c0_i32 = arith.constant 0 : i32
    %c0_i32_0 = arith.constant 0 : i32
    %c0_i32_1 = arith.constant 0 : i32
    return %c0_i32, %c0_i32_0 : i32, i32
  }
  func.func @transform_7(%arg0: i32, %arg1: i32) -> (i32, i32) {
    %c0_i32 = arith.constant 0 : i32
    %c0_i32_0 = arith.constant 0 : i32
    %c0_i32_1 = arith.constant 0 : i32
    return %c0_i32, %c0_i32_0 : i32, i32
  }
  func.func @transform_8(%arg0: i32, %arg1: i32) -> (i32, i32) {
    %c0_i32 = arith.constant 0 : i32
    %c0_i32_0 = arith.constant 0 : i32
    %c0_i32_1 = arith.constant 0 : i32
    return %c0_i32, %c0_i32_0 : i32, i32
  }
  func.func @transform_9(%arg0: i32, %arg1: i32) -> (i32, i32) {
    %c0_i32 = arith.constant 0 : i32
    %c0_i32_0 = arith.constant 0 : i32
    return %arg0, %c0_i32 : i32, i32
  }
}

module attributes {stable_mosaic.version = 11 : i64} {
  func.func @_rgcn_conv_kernel(%arg0: i32, %arg1: i32, %arg2: memref<128x128xf32, #tpu.memory_space<vmem>>, %arg3: memref<128x5xf32, #tpu.memory_space<vmem>>, %arg4: memref<128x128xf32, #tpu.memory_space<vmem>>, %arg5: memref<1x128xi32, #tpu.memory_space<vmem>>, %arg6: memref<32x128xf32, #tpu.memory_space<vmem>>, %arg7: memref<32x1xf32, #tpu.memory_space<vmem>>, %arg8: memref<128x640xf32, #tpu.memory_space<vmem>>, %arg9: memref<128x128xf32, #tpu.memory_space<vmem>>, %arg10: memref<1x128xf32, #tpu.memory_space<vmem>>, %arg11: memref<32x128xf32, #tpu.memory_space<vmem>>, %arg12: memref<32x128xf32, #tpu.memory_space<vmem>>) attributes {dimension_semantics = [#tpu.dimension_semantics<parallel>, #tpu.dimension_semantics<arbitrary>], iteration_bounds = array<i64: 2, 4>, scalar_prefetch = 0 : i64, scratch_operands = 1 : i64, tpu.core_type = #tpu.core_type<tc>, window_params = [{transform_indices = @transform_0, window_bounds = array<i64: 128, 128>}, {transform_indices = @transform_1, window_bounds = array<i64: 128, 5>}, {transform_indices = @transform_2, window_bounds = array<i64: 128, 128>}, {transform_indices = @transform_3, window_bounds = array<i64: 1, 128>}, {transform_indices = @transform_4, window_bounds = array<i64: 32, 128>}, {transform_indices = @transform_5, window_bounds = array<i64: 32, 1>}, {pipeline_mode = #tpu.pipeline_mode<synchronous>, transform_indices = @transform_6, window_bounds = array<i64: 128, 640>}, {pipeline_mode = #tpu.pipeline_mode<synchronous>, transform_indices = @transform_7, window_bounds = array<i64: 128, 128>}, {pipeline_mode = #tpu.pipeline_mode<synchronous>, transform_indices = @transform_8, window_bounds = array<i64: 1, 128>}, {transform_indices = @transform_9, window_bounds = array<i64: 32, 128>}]} {
    %c0_i32 = arith.constant 0 : i32
    %0 = arith.cmpi eq, %arg1, %c0_i32 : i32
    %1 = arith.extui %0 : i1 to i32
    %c0_i32_0 = arith.constant 0 : i32
    %2 = arith.cmpi ne, %1, %c0_i32_0 : i32
    scf.if %2 {
      %cst_16 = arith.constant 0.000000e+00 : f32
      %53 = vector.broadcast %cst_16 : f32 to vector<32x128xf32>
      %c0_17 = arith.constant 0 : index
      %c0_18 = arith.constant 0 : index
      %54 = vector.load %arg12[%c0_17, %c0_18] : memref<32x128xf32, #tpu.memory_space<vmem>>, vector<32x128xf32>
      tpu.vector_store %arg12[%c0_17, %c0_18], %53 {strides = array<i32>} : memref<32x128xf32, #tpu.memory_space<vmem>>, vector<32x128xf32>,
    } else {
    }
    %c0 = arith.constant 0 : index
    %c0_1 = arith.constant 0 : index
    %3 = vector.load %arg2[%c0, %c0_1] : memref<128x128xf32, #tpu.memory_space<vmem>>, vector<128x128xf32>
    %4 = arith.truncf %3 : vector<128x128xf32> to vector<128x128xbf16>
    %c0_2 = arith.constant 0 : index
    %c0_3 = arith.constant 0 : index
    %5 = vector.load %arg8[%c0_2, %c0_3] : memref<128x640xf32, #tpu.memory_space<vmem>>, vector<128x640xf32>
    %6 = arith.truncf %5 : vector<128x640xf32> to vector<128x640xbf16>
    %cst = arith.constant dense<0.000000e+00> : vector<128x640xf32>
    %7 = tpu.matmul %4, %6, %cst {dimension_numbers = #tpu.dot_dimension_numbers<[1], [0], [0], [1], [0, 0, 1, 1], [], []>} : vector<128x128xbf16>, vector<128x640xbf16>, vector<128x640xf32> -> vector<128x640xf32>
    %c0_4 = arith.constant 0 : index
    %c0_5 = arith.constant 0 : index
    %8 = vector.load %arg3[%c0_4, %c0_5] : memref<128x5xf32, #tpu.memory_space<vmem>>, vector<128x5xf32>
    %c0_6 = arith.constant 0 : index
    %c0_7 = arith.constant 0 : index
    %9 = vector.load %arg4[%c0_6, %c0_7] : memref<128x128xf32, #tpu.memory_space<vmem>>, vector<128x128xf32>
    %10 = vector.extract_strided_slice %8 {offsets = [0, 0], sizes = [128, 1], strides = [1, 1]} : vector<128x5xf32> to vector<128x1xf32>
    %11 = vector.extract_strided_slice %7 {offsets = [0, 0], sizes = [128, 128], strides = [1, 1]} : vector<128x640xf32> to vector<128x128xf32>
    %12 = vector.broadcast %10 : vector<128x1xf32> to vector<128x128xf32>
    %13 = arith.mulf %12, %11 : vector<128x128xf32>
    %14 = arith.addf %9, %13 : vector<128x128xf32>
    %15 = vector.extract_strided_slice %8 {offsets = [0, 1], sizes = [128, 1], strides = [1, 1]} : vector<128x5xf32> to vector<128x1xf32>
    %16 = vector.extract_strided_slice %7 {offsets = [0, 128], sizes = [128, 128], strides = [1, 1]} : vector<128x640xf32> to vector<128x128xf32>
    %17 = vector.broadcast %15 : vector<128x1xf32> to vector<128x128xf32>
    %18 = arith.mulf %17, %16 : vector<128x128xf32>
    %19 = arith.addf %14, %18 : vector<128x128xf32>
    %20 = vector.extract_strided_slice %8 {offsets = [0, 2], sizes = [128, 1], strides = [1, 1]} : vector<128x5xf32> to vector<128x1xf32>
    %21 = vector.extract_strided_slice %7 {offsets = [0, 256], sizes = [128, 128], strides = [1, 1]} : vector<128x640xf32> to vector<128x128xf32>
    %22 = vector.broadcast %20 : vector<128x1xf32> to vector<128x128xf32>
    %23 = arith.mulf %22, %21 : vector<128x128xf32>
    %24 = arith.addf %19, %23 : vector<128x128xf32>
    %25 = vector.extract_strided_slice %8 {offsets = [0, 3], sizes = [128, 1], strides = [1, 1]} : vector<128x5xf32> to vector<128x1xf32>
    %26 = vector.extract_strided_slice %7 {offsets = [0, 384], sizes = [128, 128], strides = [1, 1]} : vector<128x640xf32> to vector<128x128xf32>
    %27 = vector.broadcast %25 : vector<128x1xf32> to vector<128x128xf32>
    %28 = arith.mulf %27, %26 : vector<128x128xf32>
    %29 = arith.addf %24, %28 : vector<128x128xf32>
    %30 = vector.extract_strided_slice %8 {offsets = [0, 4], sizes = [128, 1], strides = [1, 1]} : vector<128x5xf32> to vector<128x1xf32>
    %31 = vector.extract_strided_slice %7 {offsets = [0, 512], sizes = [128, 128], strides = [1, 1]} : vector<128x640xf32> to vector<128x128xf32>
    %32 = vector.broadcast %30 : vector<128x1xf32> to vector<128x128xf32>
    %33 = arith.mulf %32, %31 : vector<128x128xf32>
    %34 = arith.addf %29, %33 : vector<128x128xf32>
    %c32_i32 = arith.constant 32 : i32
    %35 = arith.muli %arg0, %c32_i32 : i32
    %36 = tpu.iota {dimensions = array<i32: 0>} : vector<32x128xi32>
    %37 = vector.broadcast %35 : i32 to vector<32x128xi32>
    %38 = arith.addi %37, %36 : vector<32x128xi32>
    %c0_8 = arith.constant 0 : index
    %c0_9 = arith.constant 0 : index
    %39 = vector.load %arg5[%c0_8, %c0_9] : memref<1x128xi32, #tpu.memory_space<vmem>>, vector<1x128xi32>
    %40 = vector.broadcast %39 : vector<1x128xi32> to vector<32x128xi32>
    %41 = arith.cmpi eq, %40, %38 : vector<32x128xi32>
    %42 = arith.extui %41 : vector<32x128xi1> to vector<32x128xi32>
    %43 = arith.sitofp %42 : vector<32x128xi32> to vector<32x128xf32>
    %44 = arith.truncf %43 : vector<32x128xf32> to vector<32x128xbf16>
    %c0_10 = arith.constant 0 : index
    %c0_11 = arith.constant 0 : index
    %45 = vector.load %arg12[%c0_10, %c0_11] : memref<32x128xf32, #tpu.memory_space<vmem>>, vector<32x128xf32>
    %46 = arith.truncf %34 : vector<128x128xf32> to vector<128x128xbf16>
    %cst_12 = arith.constant dense<0.000000e+00> : vector<32x128xf32>
    %47 = tpu.matmul %44, %46, %cst_12 {dimension_numbers = #tpu.dot_dimension_numbers<[1], [0], [0], [1], [0, 0, 1, 1], [], []>} : vector<32x128xbf16>, vector<128x128xbf16>, vector<32x128xf32> -> vector<32x128xf32>
    %48 = arith.addf %45, %47 : vector<32x128xf32>
    %c0_13 = arith.constant 0 : index
    %c0_14 = arith.constant 0 : index
    %49 = vector.load %arg12[%c0_13, %c0_14] : memref<32x128xf32, #tpu.memory_space<vmem>>, vector<32x128xf32>
    tpu.vector_store %arg12[%c0_13, %c0_14], %48 {strides = array<i32>} : memref<32x128xf32, #tpu.memory_space<vmem>>, vector<32x128xf32>,
    %c3_i32 = arith.constant 3 : i32
    %50 = arith.cmpi eq, %arg1, %c3_i32 : i32
    %51 = arith.extui %50 : i1 to i32
    %c0_i32_15 = arith.constant 0 : i32
    %52 = arith.cmpi ne, %51, %c0_i32_15 : i32
    scf.if %52 {
      %c0_16 = arith.constant 0 : index
      %c0_17 = arith.constant 0 : index
      %53 = vector.load %arg6[%c0_16, %c0_17] : memref<32x128xf32, #tpu.memory_space<vmem>>, vector<32x128xf32>
      %54 = arith.truncf %53 : vector<32x128xf32> to vector<32x128xbf16>
      %c0_18 = arith.constant 0 : index
      %c0_19 = arith.constant 0 : index
      %55 = vector.load %arg12[%c0_18, %c0_19] : memref<32x128xf32, #tpu.memory_space<vmem>>, vector<32x128xf32>
      %c0_20 = arith.constant 0 : index
      %c0_21 = arith.constant 0 : index
      %56 = vector.load %arg7[%c0_20, %c0_21] : memref<32x1xf32, #tpu.memory_space<vmem>>, vector<32x1xf32>
      %57 = vector.broadcast %56 : vector<32x1xf32> to vector<32x128xf32>
      %58 = arith.mulf %55, %57 : vector<32x128xf32>
      %c0_22 = arith.constant 0 : index
      %c0_23 = arith.constant 0 : index
      %59 = vector.load %arg9[%c0_22, %c0_23] : memref<128x128xf32, #tpu.memory_space<vmem>>, vector<128x128xf32>
      %60 = arith.truncf %59 : vector<128x128xf32> to vector<128x128xbf16>
      %cst_24 = arith.constant dense<0.000000e+00> : vector<32x128xf32>
      %61 = tpu.matmul %54, %60, %cst_24 {dimension_numbers = #tpu.dot_dimension_numbers<[1], [0], [0], [1], [0, 0, 1, 1], [], []>} : vector<32x128xbf16>, vector<128x128xbf16>, vector<32x128xf32> -> vector<32x128xf32>
      %62 = arith.addf %58, %61 : vector<32x128xf32>
      %c0_25 = arith.constant 0 : index
      %c0_26 = arith.constant 0 : index
      %63 = vector.load %arg10[%c0_25, %c0_26] : memref<1x128xf32, #tpu.memory_space<vmem>>, vector<1x128xf32>
      %64 = vector.broadcast %63 : vector<1x128xf32> to vector<32x128xf32>
      %65 = arith.addf %62, %64 : vector<32x128xf32>
      %66 = tpu.iota {dimensions = array<i32: 1>} : vector<32x128xi32>
      %c8_i32 = arith.constant 8 : i32
      %67 = vector.broadcast %c8_i32 : i32 to vector<32x128xi32>
      %68 = arith.cmpi slt, %66, %67 : vector<32x128xi32>
      %cst_27 = arith.constant 0xFF800000 : f32
      %69 = vector.broadcast %cst_27 : f32 to vector<32x128xf32>
      %70 = arith.select %68, %65, %69 : vector<32x128xi1>, vector<32x128xf32>
      %cst_28 = arith.constant dense<0xFF800000> : vector<32xf32>
      %71 = vector.multi_reduction <maximumf>, %70, %cst_28 [1] : vector<32x128xf32> to vector<32xf32>
      %72 = vector.shape_cast %71 : vector<32xf32> to vector<32x1xf32>
      %73 = vector.broadcast %72 : vector<32x1xf32> to vector<32x128xf32>
      %74 = arith.subf %70, %73 : vector<32x128xf32>
      %75 = math.exp %74 : vector<32x128xf32>
      %cst_29 = arith.constant 0.000000e+00 : f32
      %76 = vector.broadcast %cst_29 : f32 to vector<32x128xf32>
      %77 = arith.select %68, %75, %76 : vector<32x128xi1>, vector<32x128xf32>
      %cst_30 = arith.constant dense<0.000000e+00> : vector<32xf32>
      %78 = vector.multi_reduction <add>, %77, %cst_30 [1] : vector<32x128xf32> to vector<32xf32>
      %79 = vector.shape_cast %78 : vector<32xf32> to vector<32x1xf32>
      %80 = math.log %79 : vector<32x1xf32>
      %81 = vector.broadcast %80 : vector<32x1xf32> to vector<32x128xf32>
      %82 = arith.subf %74, %81 : vector<32x128xf32>
      %cst_31 = arith.constant 0.000000e+00 : f32
      %83 = vector.broadcast %cst_31 : f32 to vector<32x128xf32>
      %84 = arith.select %68, %82, %83 : vector<32x128xi1>, vector<32x128xf32>
      %c0_32 = arith.constant 0 : index
      %c0_33 = arith.constant 0 : index
      %85 = vector.load %arg11[%c0_32, %c0_33] : memref<32x128xf32, #tpu.memory_space<vmem>>, vector<32x128xf32>
      tpu.vector_store %arg11[%c0_32, %c0_33], %84 {strides = array<i32>} : memref<32x128xf32, #tpu.memory_space<vmem>>, vector<32x128xf32>,
    } else {
    }
    return
  }
  func.func @transform_0(%arg0: i32, %arg1: i32) -> (i32, i32) {
    %c0_i32 = arith.constant 0 : i32
    %c0_i32_0 = arith.constant 0 : i32
    return %arg1, %c0_i32 : i32, i32
  }
  func.func @transform_1(%arg0: i32, %arg1: i32) -> (i32, i32) {
    %c0_i32 = arith.constant 0 : i32
    %c0_i32_0 = arith.constant 0 : i32
    return %arg1, %c0_i32 : i32, i32
  }
  func.func @transform_2(%arg0: i32, %arg1: i32) -> (i32, i32) {
    %c0_i32 = arith.constant 0 : i32
    %c0_i32_0 = arith.constant 0 : i32
    return %arg1, %c0_i32 : i32, i32
  }
  func.func @transform_3(%arg0: i32, %arg1: i32) -> (i32, i32) {
    %c0_i32 = arith.constant 0 : i32
    %c0_i32_0 = arith.constant 0 : i32
    return %c0_i32, %arg1 : i32, i32
  }
  func.func @transform_4(%arg0: i32, %arg1: i32) -> (i32, i32) {
    %c0_i32 = arith.constant 0 : i32
    %c0_i32_0 = arith.constant 0 : i32
    return %arg0, %c0_i32 : i32, i32
  }
  func.func @transform_5(%arg0: i32, %arg1: i32) -> (i32, i32) {
    %c0_i32 = arith.constant 0 : i32
    %c0_i32_0 = arith.constant 0 : i32
    return %arg0, %c0_i32 : i32, i32
  }
  func.func @transform_6(%arg0: i32, %arg1: i32) -> (i32, i32) {
    %c0_i32 = arith.constant 0 : i32
    %c0_i32_0 = arith.constant 0 : i32
    %c0_i32_1 = arith.constant 0 : i32
    return %c0_i32, %c0_i32_0 : i32, i32
  }
  func.func @transform_7(%arg0: i32, %arg1: i32) -> (i32, i32) {
    %c0_i32 = arith.constant 0 : i32
    %c0_i32_0 = arith.constant 0 : i32
    %c0_i32_1 = arith.constant 0 : i32
    return %c0_i32, %c0_i32_0 : i32, i32
  }
  func.func @transform_8(%arg0: i32, %arg1: i32) -> (i32, i32) {
    %c0_i32 = arith.constant 0 : i32
    %c0_i32_0 = arith.constant 0 : i32
    %c0_i32_1 = arith.constant 0 : i32
    return %c0_i32, %c0_i32_0 : i32, i32
  }
  func.func @transform_9(%arg0: i32, %arg1: i32) -> (i32, i32) {
    %c0_i32 = arith.constant 0 : i32
    %c0_i32_0 = arith.constant 0 : i32
    return %arg0, %c0_i32 : i32, i32
  }
}

</mosaic_0001>

<llo_original>
// kernel: net_forward.2
$region0: #{net_forward.2}
  #allocation0 [shape = 'u32[]', space=smem, size = 0x4, offset = 0x4, fixed_abs, tag = 'smem constant byte address 0x4 - core index']
  #allocation1 [shape = 'u32[72,128]{1,0:T(1,128)}', space=vmem, size = 0x9000, scoped, tag = 'internal scratch']
  #allocation2 [shape = 'f32[32,128]{1,0:T(8,128)}', space=vmem, size = 0x4000, scoped, tag = 'scratch operand']
  %s0 = inlined_call_operand.vmem [shape: f32[512,128], index: 0, kind: input, shape index: {}]
  %s1 = inlined_call_operand.vmem [shape: f32[512,5], index: 1, kind: input, shape index: {}]
  %s2 = inlined_call_operand.vmem [shape: f32[512,128], index: 2, kind: input, shape index: {}]
  %s3 = inlined_call_operand.vmem [shape: s32[1,512], index: 3, kind: input, shape index: {}]
  %s4 = inlined_call_operand.vmem [shape: f32[64,128], index: 4, kind: input, shape index: {}]
  %s5 = inlined_call_operand.vmem [shape: f32[64,1], index: 5, kind: input, shape index: {}]
  %s6 = inlined_call_operand.vmem [shape: f32[128,640], index: 6, kind: input, shape index: {}]
  %s7 = inlined_call_operand.vmem [shape: f32[128,128], index: 7, kind: input, shape index: {}]
  %s8 = inlined_call_operand.vmem [shape: f32[1,128], index: 8, kind: input, shape index: {}]
  %s9 = inlined_call_operand.vmem [shape: f32[64,128], index: 9, kind: output, shape index: {}]
  %s10 = sld [smem:[#allocation0]]
  $region77: #{net_forward.2} parent=0
    _
  %s12 = ssub.s32 1, %s10
  %s13 = scalar_select 0, %s12, %s10
  loop: start=0, step=1, limit=10
  $region2: #{net_forward.2} parent=0 // loop_pre_header
    _
  $region3: #{net_forward.2} parent=0 // loop_header
    %s15 = sphi 0, %s19
    %p16 = scmp.ge.s32.totalorder %s15, 10
    %s22 = sphi 0, %s34
    %s23 = sphi 0, %s30
    %s24 = sphi 0, %s22
    %s25 = sphi 0, %s23
    %s26 = sphi 0, %s24
    %s27 = sphi 0, %s25
    %s37 = sphi 0, %s39
    %s40 = sphi 0, %s37
    %s41 = sphi 0, %s40
    %s57 = sphi 0, %s41
    %s63 = sphi 0, %s65
    %s66 = sphi 0, %s63
    %s67 = sphi 0, %s66
    %s83 = sphi 0, %s67
    %s89 = sphi 0, %s91
    %s92 = sphi 0, %s89
    %s93 = sphi 0, %s92
    %s109 = sphi 0, %s93
    %s115 = sphi 0, %s117
    %s118 = sphi 0, %s115
    %s119 = sphi 0, %s118
    %s135 = sphi 0, %s119
    %s141 = sphi 0, %s143
    %s144 = sphi 0, %s141
    %s145 = sphi 0, %s144
    %s161 = sphi 0, %s145
    %s167 = sphi 0, %s169
    %s170 = sphi 0, %s167
    %s171 = sphi 0, %s170
    %s187 = sphi 0, %s171
    %s191 = sphi 0, %s191
    %s193 = sphi 0, %s191
    %s194 = sphi 0, %s193
    %s208 = sphi 0, %s194
    %s212 = sphi 0, %s212
    %s214 = sphi 0, %s212
    %s215 = sphi 0, %s214
    %s229 = sphi 0, %s215
    %s233 = sphi 0, %s233
    %s235 = sphi 0, %s233
    %s236 = sphi 0, %s235
    %s250 = sphi 0, %s236
    %s256 = sphi 0, %s258
    %s259 = sphi 0, %s256
    %s260 = sphi 0, %s259
    %s276 = sphi 0, %s260
  $region4: #{net_forward.2} parent=0 // loop_header_branch
    %18 = sbr.rel (%p16) target = $region8
  $region5: #{net_forward.2} parent=0 // loop_body
    %s20 = ssub.s32 %s15, 1
    %s21 = ssub.s32 %s15, 2
    %s28 = sadd.s32 1, %s23
    %p29 = scmp.ge.s32.totalorder %s28, 4
    %s30 = scalar_select %p29, 0, %s28
    %s31 = sadd.s32 1, %s22
    %s32 = scalar_select %p29, %s31, %s22
    %p33 = scmp.ge.s32.totalorder %s32, 2
    %s34 = scalar_select %p33, 0, %s32
    %s35 = ssub.s32 %s23, %s30
    %p36 = scmp.eq.s32.totalorder %s35, 0
    %s38 = sadd.s32 %s37, 1
    %s39 = scalar_select %p36, %s37, %s38
    %p42 = pneg %p36
    %p43 = scmp.eq.s32.totalorder %s15, 7
    %p44 = por %p42, %p43
    %p45 = scmp.ne.s32.totalorder %s37, %s40
    %p46 = scmp.eq.s32.totalorder %s15, 0
    %p47 = por %p45, %p46
    %p48 = scmp.ne.s32.totalorder %s37, %s40
    %p49 = scmp.eq.s32.totalorder %s20, 7
    %p50 = por %p48, %p49
    %p51 = scmp.ne.s32.totalorder %s40, %s41
    %p52 = scmp.eq.s32.totalorder %s20, 0
    %p53 = por %p51, %p52
    %p54 = scmp.ne.s32.totalorder %s40, %s41
    %p55 = scmp.eq.s32.totalorder %s21, 7
    %p56 = por %p54, %p55
    %p58 = scmp.ne.s32.totalorder %s41, %s57
    %p59 = scmp.eq.s32.totalorder %s21, 0
    %p60 = por %p58, %p59
    %s61 = ssub.s32 %s23, %s30
    %p62 = scmp.eq.s32.totalorder %s61, 0
    %s64 = sadd.s32 %s63, 1
    %s65 = scalar_select %p62, %s63, %s64
    %p68 = pneg %p62
    %p69 = scmp.eq.s32.totalorder %s15, 7
    %p70 = por %p68, %p69
    %p71 = scmp.ne.s32.totalorder %s63, %s66
    %p72 = scmp.eq.s32.totalorder %s15, 0
    %p73 = por %p71, %p72
    %p74 = scmp.ne.s32.totalorder %s63, %s66
    %p75 = scmp.eq.s32.totalorder %s20, 7
    %p76 = por %p74, %p75
    %p77 = scmp.ne.s32.totalorder %s66, %s67
    %p78 = scmp.eq.s32.totalorder %s20, 0
    %p79 = por %p77, %p78
    %p80 = scmp.ne.s32.totalorder %s66, %s67
    %p81 = scmp.eq.s32.totalorder %s21, 7
    %p82 = por %p80, %p81
    %p84 = scmp.ne.s32.totalorder %s67, %s83
    %p85 = scmp.eq.s32.totalorder %s21, 0
    %p86 = por %p84, %p85
    %s87 = ssub.s32 %s23, %s30
    %p88 = scmp.eq.s32.totalorder %s87, 0
    %s90 = sadd.s32 %s89, 1
    %s91 = scalar_select %p88, %s89, %s90
    %p94 = pneg %p88
    %p95 = scmp.eq.s32.totalorder %s15, 7
    %p96 = por %p94, %p95
    %p97 = scmp.ne.s32.totalorder %s89, %s92
    %p98 = scmp.eq.s32.totalorder %s15, 0
    %p99 = por %p97, %p98
    %p100 = scmp.ne.s32.totalorder %s89, %s92
    %p101 = scmp.eq.s32.totalorder %s20, 7
    %p102 = por %p100, %p101
    %p103 = scmp.ne.s32.totalorder %s92, %s93
    %p104 = scmp.eq.s32.totalorder %s20, 0
    %p105 = por %p103, %p104
    %p106 = scmp.ne.s32.totalorder %s92, %s93
    %p107 = scmp.eq.s32.totalorder %s21, 7
    %p108 = por %p106, %p107
    %p110 = scmp.ne.s32.totalorder %s93, %s109
    %p111 = scmp.eq.s32.totalorder %s21, 0
    %p112 = por %p110, %p111
    %s113 = ssub.s32 %s23, %s30
    %p114 = scmp.eq.s32.totalorder %s113, 0
    %s116 = sadd.s32 %s115, 1
    %s117 = scalar_select %p114, %s115, %s116
    %p120 = pneg %p114
    %p121 = scmp.eq.s32.totalorder %s15, 7
    %p122 = por %p120, %p121
    %p123 = scmp.ne.s32.totalorder %s115, %s118
    %p124 = scmp.eq.s32.totalorder %s15, 0
    %p125 = por %p123, %p124
    %p126 = scmp.ne.s32.totalorder %s115, %s118
    %p127 = scmp.eq.s32.totalorder %s20, 7
    %p128 = por %p126, %p127
    %p129 = scmp.ne.s32.totalorder %s118, %s119
    %p130 = scmp.eq.s32.totalorder %s20, 0
    %p131 = por %p129, %p130
    %p132 = scmp.ne.s32.totalorder %s118, %s119
    %p133 = scmp.eq.s32.totalorder %s21, 7
    %p134 = por %p132, %p133
    %p136 = scmp.ne.s32.totalorder %s119, %s135
    %p137 = scmp.eq.s32.totalorder %s21, 0
    %p138 = por %p136, %p137
    %s139 = ssub.s32 %s22, %s34
    %p140 = scmp.eq.s32.totalorder %s139, 0
    %s142 = sadd.s32 %s141, 1
    %s143 = scalar_select %p140, %s141, %s142
    %p146 = pneg %p140
    %p147 = scmp.eq.s32.totalorder %s15, 7
    %p148 = por %p146, %p147
    %p149 = scmp.ne.s32.totalorder %s141, %s144
    %p150 = scmp.eq.s32.totalorder %s15, 0
    %p151 = por %p149, %p150
    %p152 = scmp.ne.s32.totalorder %s141, %s144
    %p153 = scmp.eq.s32.totalorder %s20, 7
    %p154 = por %p152, %p153
    %p155 = scmp.ne.s32.totalorder %s144, %s145
    %p156 = scmp.eq.s32.totalorder %s20, 0
    %p157 = por %p155, %p156
    %p158 = scmp.ne.s32.totalorder %s144, %s145
    %p159 = scmp.eq.s32.totalorder %s21, 7
    %p160 = por %p158, %p159
    %p162 = scmp.ne.s32.totalorder %s145, %s161
    %p163 = scmp.eq.s32.totalorder %s21, 0
    %p164 = por %p162, %p163
    %s165 = ssub.s32 %s22, %s34
    %p166 = scmp.eq.s32.totalorder %s165, 0
    %s168 = sadd.s32 %s167, 1
    %s169 = scalar_select %p166, %s167, %s168
    %p172 = pneg %p166
    %p173 = scmp.eq.s32.totalorder %s15, 7
    %p174 = por %p172, %p173
    %p175 = scmp.ne.s32.totalorder %s167, %s170
    %p176 = scmp.eq.s32.totalorder %s15, 0
    %p177 = por %p175, %p176
    %p178 = scmp.ne.s32.totalorder %s167, %s170
    %p179 = scmp.eq.s32.totalorder %s20, 7
    %p180 = por %p178, %p179
    %p181 = scmp.ne.s32.totalorder %s170, %s171
    %p182 = scmp.eq.s32.totalorder %s20, 0
    %p183 = por %p181, %p182
    %p184 = scmp.ne.s32.totalorder %s170, %s171
    %p185 = scmp.eq.s32.totalorder %s21, 7
    %p186 = por %p184, %p185
    %p188 = scmp.ne.s32.totalorder %s171, %s187
    %p189 = scmp.eq.s32.totalorder %s21, 0
    %p190 = por %p188, %p189
    %s192 = sadd.s32 %s191, 1
    %p195 = scmp.eq.s32.totalorder %s15, 7
    %p196 = scmp.ne.s32.totalorder %s191, %s193
    %p197 = scmp.eq.s32.totalorder %s15, 0
    %p198 = por %p196, %p197
    %p199 = scmp.ne.s32.totalorder %s191, %s193
    %p200 = scmp.eq.s32.totalorder %s20, 7
    %p201 = por %p199, %p200
    %p202 = scmp.ne.s32.totalorder %s193, %s194
    %p203 = scmp.eq.s32.totalorder %s20, 0
    %p204 = por %p202, %p203
    %p205 = scmp.ne.s32.totalorder %s193, %s194
    %p206 = scmp.eq.s32.totalorder %s21, 7
    %p207 = por %p205, %p206
    %p209 = scmp.ne.s32.totalorder %s194, %s208
    %p210 = scmp.eq.s32.totalorder %s21, 0
    %p211 = por %p209, %p210
    %s213 = sadd.s32 %s212, 1
    %p216 = scmp.eq.s32.totalorder %s15, 7
    %p217 = scmp.ne.s32.totalorder %s212, %s214
    %p218 = scmp.eq.s32.totalorder %s15, 0
    %p219 = por %p217, %p218
    %p220 = scmp.ne.s32.totalorder %s212, %s214
    %p221 = scmp.eq.s32.totalorder %s20, 7
    %p222 = por %p220, %p221
    %p223 = scmp.ne.s32.totalorder %s214, %s215
    %p224 = scmp.eq.s32.totalorder %s20, 0
    %p225 = por %p223, %p224
    %p226 = scmp.ne.s32.totalorder %s214, %s215
    %p227 = scmp.eq.s32.totalorder %s21, 7
    %p228 = por %p226, %p227
    %p230 = scmp.ne.s32.totalorder %s215, %s229
    %p231 = scmp.eq.s32.totalorder %s21, 0
    %p232 = por %p230, %p231
    %s234 = sadd.s32 %s233, 1
    %p237 = scmp.eq.s32.totalorder %s15, 7
    %p238 = scmp.ne.s32.totalorder %s233, %s235
    %p239 = scmp.eq.s32.totalorder %s15, 0
    %p240 = por %p238, %p239
    %p241 = scmp.ne.s32.totalorder %s233, %s235
    %p242 = scmp.eq.s32.totalorder %s20, 7
    %p243 = por %p241, %p242
    %p244 = scmp.ne.s32.totalorder %s235, %s236
    %p245 = scmp.eq.s32.totalorder %s20, 0
    %p246 = por %p244, %p245
    %p247 = scmp.ne.s32.totalorder %s235, %s236
    %p248 = scmp.eq.s32.totalorder %s21, 7
    %p249 = por %p247, %p248
    %p251 = scmp.ne.s32.totalorder %s236, %s250
    %p252 = scmp.eq.s32.totalorder %s21, 0
    %p253 = por %p251, %p252
    %s254 = ssub.s32 %s22, %s34
    %p255 = scmp.eq.s32.totalorder %s254, 0
    %s257 = sadd.s32 %s256, 1
    %s258 = scalar_select %p255, %s256, %s257
    %p261 = pneg %p255
    %p262 = scmp.eq.s32.totalorder %s15, 7
    %p263 = por %p261, %p262
    %p264 = scmp.ne.s32.totalorder %s256, %s259
    %p265 = scmp.eq.s32.totalorder %s15, 0
    %p266 = por %p264, %p265
    %p267 = scmp.ne.s32.totalorder %s256, %s259
    %p268 = scmp.eq.s32.totalorder %s20, 7
    %p269 = por %p267, %p268
    %p270 = scmp.ne.s32.totalorder %s259, %s260
    %p271 = scmp.eq.s32.totalorder %s20, 0
    %p272 = por %p270, %p271
    %p273 = scmp.ne.s32.totalorder %s259, %s260
    %p274 = scmp.eq.s32.totalorder %s21, 7
    %p275 = por %p273, %p274
    %p277 = scmp.ne.s32.totalorder %s260, %s276
    %p278 = scmp.eq.s32.totalorder %s21, 0
    %p279 = por %p277, %p278
    %p280 = scmp.le.s32.totalorder 1, %s15
    %p281 = scmp.lt.s32.totalorder %s15, 9
    %p282 = pnand %p280, %p281
    %p283 = pneg %p282
    // Predicated region
    $region9: #{net_forward.2} parent=5 // pred_check
      _
    $region10: #{net_forward.2} parent=5 // pred_check_branch
      %285 = sbr.rel (%p282) target = $region12
    $region11: #{net_forward.2} parent=5 // pred_region
      %s286 = ssub.s32 %s15, 1
      // Predicated region
      $region13: #{net_forward.2} parent=11 // pred_check
        %p287 = pneg %p204
      $region14: #{net_forward.2} parent=11 // pred_check_branch
        %289 = sbr.rel (%p287) target = $region16
      $region15: #{net_forward.2} parent=11 // pred_region
        _
      $region16: #{net_forward.2} parent=11 // pred_fallthru
        _
      // Predicated region
      $region17: #{net_forward.2} parent=11 // pred_check
        %p290 = pneg %p225
      $region18: #{net_forward.2} parent=11 // pred_check_branch
        %292 = sbr.rel (%p290) target = $region20
      $region19: #{net_forward.2} parent=11 // pred_region
        _
      $region20: #{net_forward.2} parent=11 // pred_fallthru
        _
      // Predicated region
      $region21: #{net_forward.2} parent=11 // pred_check
        %p293 = pneg %p246
      $region22: #{net_forward.2} parent=11 // pred_check_branch
        %295 = sbr.rel (%p293) target = $region24
      $region23: #{net_forward.2} parent=11 // pred_region
        _
      $region24: #{net_forward.2} parent=11 // pred_fallthru
        _
    $region12: #{net_forward.2} parent=5 // pred_fallthru
      _
    %p296 = scmp.lt.s32.totalorder %s15, 8
    // Predicated region
    $region25: #{net_forward.2} parent=5 // pred_check
      %p297 = pneg %p296
    $region26: #{net_forward.2} parent=5 // pred_check_branch
      %299 = sbr.rel (%p297) target = $region28
    $region27: #{net_forward.2} parent=5 // pred_region
      // Predicated region
      $region29: #{net_forward.2} parent=27 // pred_check
        %p300 = pneg %p47
      $region30: #{net_forward.2} parent=27 // pred_check_branch
        %302 = sbr.rel (%p300) target = $region32
      $region31: #{net_forward.2} parent=27 // pred_region
        %s303 = smul.u32 16, %s23
        %p304 = scmp.lt.s32.totalorder %s303, 63
        %s305 = scalar_select %p304, %s303, 63
        %s306 = smul.addr %s305, 8
        %s307 = scalar_lea.vmem %s0, %s306
        %s308 = smul.u32 16, %s23
      $region32: #{net_forward.2} parent=27 // pred_fallthru
        _
      // Predicated region
      $region33: #{net_forward.2} parent=27 // pred_check
        %p309 = pneg %p73
      $region34: #{net_forward.2} parent=27 // pred_check_branch
        %311 = sbr.rel (%p309) target = $region36
      $region35: #{net_forward.2} parent=27 // pred_region
        %s312 = smul.u32 16, %s23
        %p313 = scmp.lt.s32.totalorder %s312, 63
        %s314 = scalar_select %p313, %s312, 63
        %s315 = smul.addr %s314, 8
        %s316 = scalar_lea.vmem %s1, %s315
        %s317 = smul.u32 16, %s23
      $region36: #{net_forward.2} parent=27 // pred_fallthru
        _
      // Predicated region
      $region37: #{net_forward.2} parent=27 // pred_check
        %p318 = pneg %p99
      $region38: #{net_forward.2} parent=27 // pred_check_branch
        %320 = sbr.rel (%p318) target = $region40
      $region39: #{net_forward.2} parent=27 // pred_region
        %s321 = smul.u32 16, %s23
        %p322 = scmp.lt.s32.totalorder %s321, 63
        %s323 = scalar_select %p322, %s321, 63
        %s324 = smul.addr %s323, 8
        %s325 = scalar_lea.vmem %s2, %s324
        %s326 = smul.u32 16, %s23
      $region40: #{net_forward.2} parent=27 // pred_fallthru
        _
      // Predicated region
      $region41: #{net_forward.2} parent=27 // pred_check
        %p327 = pneg %p125
      $region42: #{net_forward.2} parent=27 // pred_check_branch
        %329 = sbr.rel (%p327) target = $region44
      $region43: #{net_forward.2} parent=27 // pred_region
        %p330 = scmp.lt.s32.totalorder %s23, 3
        %s331 = scalar_select %p330, %s23, 3
        %s332 = scalar_lea.vmem %s3, %s331
      $region44: #{net_forward.2} parent=27 // pred_fallthru
        _
      // Predicated region
      $region45: #{net_forward.2} parent=27 // pred_check
        %p333 = pneg %p151
      $region46: #{net_forward.2} parent=27 // pred_check_branch
        %335 = sbr.rel (%p333) target = $region48
      $region47: #{net_forward.2} parent=27 // pred_region
        %s336 = smul.u32 4, %s22
        %p337 = scmp.lt.s32.totalorder %s336, 7
        %s338 = scalar_select %p337, %s336, 7
        %s339 = smul.addr %s338, 8
        %s340 = scalar_lea.vmem %s4, %s339
        %s341 = smul.u32 4, %s22
      $region48: #{net_forward.2} parent=27 // pred_fallthru
        _
      // Predicated region
      $region49: #{net_forward.2} parent=27 // pred_check
        %p342 = pneg %p177
      $region50: #{net_forward.2} parent=27 // pred_check_branch
        %344 = sbr.rel (%p342) target = $region52
      $region51: #{net_forward.2} parent=27 // pred_region
        %s345 = smul.u32 4, %s22
        %p346 = scmp.lt.s32.totalorder %s345, 7
        %s347 = scalar_select %p346, %s345, 7
        %s348 = smul.addr %s347, 8
        %s349 = scalar_lea.vmem %s5, %s348
        %s350 = smul.u32 4, %s22
      $region52: #{net_forward.2} parent=27 // pred_fallthru
        _
    $region28: #{net_forward.2} parent=5 // pred_fallthru
      _
    %p351 = scmp.le.s32.totalorder 1, %s15
    %p352 = scmp.lt.s32.totalorder %s15, 9
    %p353 = pnand %p351, %p352
    %p354 = pneg %p353
    // Predicated region
    $region53: #{net_forward.2} parent=5 // pred_check
      _
    $region54: #{net_forward.2} parent=5 // pred_check_branch
      %356 = sbr.rel (%p353) target = $region56
    $region55: #{net_forward.2} parent=5 // pred_region
      %s357 = ssub.s32 %s15, 1
      %s358 = smul.u32 16, %s25
      %p359 = scmp.lt.s32.totalorder %s358, 63
      %s360 = scalar_select %p359, %s358, 63
      %s361 = smul.addr %s360, 8
      %s362 = scalar_lea.vmem %s0, %s361
      %p363 = pneg %p53
      %p364 = pneg %p50
      %s365 = smul.u32 16, %s25
      %p366 = scmp.lt.s32.totalorder %s365, 63
      %s367 = scalar_select %p366, %s365, 63
      %s368 = smul.addr %s367, 8
      %s369 = scalar_lea.vmem %s1, %s368
      %p370 = pneg %p79
      %p371 = pneg %p76
      %s372 = smul.u32 16, %s25
      %p373 = scmp.lt.s32.totalorder %s372, 63
      %s374 = scalar_select %p373, %s372, 63
      %s375 = smul.addr %s374, 8
      %s376 = scalar_lea.vmem %s2, %s375
      %p377 = pneg %p105
      %p378 = pneg %p102
      %p379 = scmp.lt.s32.totalorder %s25, 3
      %s380 = scalar_select %p379, %s25, 3
      %s381 = scalar_lea.vmem %s3, %s380
      %p382 = pneg %p131
      %p383 = pneg %p128
      %s384 = smul.u32 4, %s24
      %p385 = scmp.lt.s32.totalorder %s384, 7
      %s386 = scalar_select %p385, %s384, 7
      %s387 = smul.addr %s386, 8
      %s388 = scalar_lea.vmem %s4, %s387
      %p389 = pneg %p157
      %p390 = pneg %p154
      %s391 = smul.u32 4, %s24
      %p392 = scmp.lt.s32.totalorder %s391, 7
      %s393 = scalar_select %p392, %s391, 7
      %s394 = smul.addr %s393, 8
      %s395 = scalar_lea.vmem %s5, %s394
      %p396 = pneg %p183
      %p397 = pneg %p180
      %p398 = pneg %p204
      %p399 = pneg %p201
      %p400 = pneg %p225
      %p401 = pneg %p222
      %p402 = pneg %p246
      %p403 = pneg %p243
      %p404 = pneg %p272
      %p405 = pneg %p269
      %s406 = smul.u32 4, %s24
      %p407 = scmp.lt.s32.totalorder %s406, 7
      %s408 = scalar_select %p407, %s406, 7
      %s409 = smul.addr %s408, 8
      %s410 = scalar_lea.vmem %s9, %s409
      %s411 = smul.u32 16, %s25
      %p412 = scmp.lt.s32.totalorder %s411, 63
      %s413 = scalar_select %p412, %s411, 63
      %s414 = smul.addr %s413, 8
      %s415 = scalar_lea.vmem %s0, %s414
      %s416 = smul.u32 16, %s25
      %s417 = smul.u32 16, %s25
      %p418 = scmp.lt.s32.totalorder %s417, 63
      %s419 = scalar_select %p418, %s417, 63
      %s420 = smul.addr %s419, 8
      %s421 = scalar_lea.vmem %s1, %s420
      %s422 = smul.u32 16, %s25
      %s423 = smul.u32 16, %s25
      %p424 = scmp.lt.s32.totalorder %s423, 63
      %s425 = scalar_select %p424, %s423, 63
      %s426 = smul.addr %s425, 8
      %s427 = scalar_lea.vmem %s2, %s426
      %s428 = smul.u32 16, %s25
      %p429 = scmp.lt.s32.totalorder %s25, 3
      %s430 = scalar_select %p429, %s25, 3
      %s431 = scalar_lea.vmem %s3, %s430
      %s432 = smul.u32 4, %s24
      %p433 = scmp.lt.s32.totalorder %s432, 7
      %s434 = scalar_select %p433, %s432, 7
      %s435 = smul.addr %s434, 8
      %s436 = scalar_lea.vmem %s4, %s435
      %s437 = smul.u32 4, %s24
      %s438 = smul.u32 4, %s24
      %p439 = scmp.lt.s32.totalorder %s438, 7
      %s440 = scalar_select %p439, %s438, 7
      %s441 = smul.addr %s440, 8
      %s442 = scalar_lea.vmem %s5, %s441
      %s443 = smul.u32 4, %s24
      %s444 = smul.u32 4, %s24
      %p445 = scmp.lt.s32.totalorder %s444, 7
      %s446 = scalar_select %p445, %s444, 7
      %s447 = smul.addr %s446, 8
      %s448 = scalar_lea.vmem %s9, %s447
      %s449 = smul.u32 4, %s24
      %p450 = scmp.eq.s32.totalorder %s25, 0
      // Predicated region
      $region57: #{net_forward.2} parent=55 // pred_check
        %p451 = pneg %p450
      $region58: #{net_forward.2} parent=55 // pred_check_branch
        %453 = sbr.rel (%p451) target = $region60
      $region59: #{net_forward.2} parent=55 // pred_region
        %454 = vst [vmem:[#allocation2] sm:$0xff] 0.0
        %455 = vst [vmem:[#allocation2 + $0x8] sm:$0xff] 0.0
        %456 = vst [vmem:[#allocation2 + $0x10] sm:$0xff] 0.0
        %457 = vst [vmem:[#allocation2 + $0x18] sm:$0xff] 0.0
      $region60: #{net_forward.2} parent=55 // pred_fallthru
        _
      %v458 = vld [vmem:[%s415] sm:$0xff]
      %v459 = vld [vmem:[%s415 + $0x8] sm:$0xff]
      %v460 = vld [vmem:[%s415 + $0x10] sm:$0xff]
      %v461 = vld [vmem:[%s415 + $0x18] sm:$0xff]
      %v462 = vld [vmem:[%s415 + $0x20] sm:$0xff]
      %v463 = vld [vmem:[%s415 + $0x28] sm:$0xff]
      %v464 = vld [vmem:[%s415 + $0x30] sm:$0xff]
      %v465 = vld [vmem:[%s415 + $0x38] sm:$0xff]
      %v466 = vld [vmem:[%s415 + $0x40] sm:$0xff]
      %v467 = vld [vmem:[%s415 + $0x48] sm:$0xff]
      %v468 = vld [vmem:[%s415 + $0x50] sm:$0xff]
      %v469 = vld [vmem:[%s415 + $0x58] sm:$0xff]
      %v470 = vld [vmem:[%s415 + $0x60] sm:$0xff]
      %v471 = vld [vmem:[%s415 + $0x68] sm:$0xff]
      %v472 = vld [vmem:[%s415 + $0x70] sm:$0xff]
      %v473 = vld [vmem:[%s415 + $0x78] sm:$0xff]
      %v474 = vpack.c.bf16 %v459, %v458
      %v475 = vpack.c.bf16 %v461, %v460
      %v476 = vpack.c.bf16 %v463, %v462
      %v477 = vpack.c.bf16 %v465, %v464
      %v478 = vpack.c.bf16 %v467, %v466
      %v479 = vpack.c.bf16 %v469, %v468
      %v480 = vpack.c.bf16 %v471, %v470
      %v481 = vpack.c.bf16 %v473, %v472
      %v482 = vld [vmem:[%s6] sm:$0xff]
      %v483 = vld [vmem:[%s6 + $0x8] sm:$0xff]
      %v484 = vld [vmem:[%s6 + $0x10] sm:$0xff]
      %v485 = vld [vmem:[%s6 + $0x18] sm:$0xff]
      %v486 = vld [vmem:[%s6 + $0x20] sm:$0xff]
      %v487 = vld [vmem:[%s6 + $0x28] sm:$0xff]
      %v488 = vld [vmem:[%s6 + $0x30] sm:$0xff]
      %v489 = vld [vmem:[%s6 + $0x38] sm:$0xff]
      %v490 = vld [vmem:[%s6 + $0x40] sm:$0xff]
      %v491 = vld [vmem:[%s6 + $0x48] sm:$0xff]
      %v492 = vld [vmem:[%s6 + $0x50] sm:$0xff]
      %v493 = vld [vmem:[%s6 + $0x58] sm:$0xff]
      %v494 = vld [vmem:[%s6 + $0x60] sm:$0xff]
      %v495 = vld [vmem:[%s6 + $0x68] sm:$0xff]
      %v496 = vld [vmem:[%s6 + $0x70] sm:$0xff]
      %v497 = vld [vmem:[%s6 + $0x78] sm:$0xff]
      %v498 = vld [vmem:[%s6 + $0x80] sm:$0xff]
      %v499 = vld [vmem:[%s6 + $0x88] sm:$0xff]
      %v500 = vld [vmem:[%s6 + $0x90] sm:$0xff]
      %v501 = vld [vmem:[%s6 + $0x98] sm:$0xff]
      %v502 = vld [vmem:[%s6 + $0xa0] sm:$0xff]
      %v503 = vld [vmem:[%s6 + $0xa8] sm:$0xff]
      %v504 = vld [vmem:[%s6 + $0xb0] sm:$0xff]
      %v505 = vld [vmem:[%s6 + $0xb8] sm:$0xff]
      %v506 = vld [vmem:[%s6 + $0xc0] sm:$0xff]
      %v507 = vld [vmem:[%s6 + $0xc8] sm:$0xff]
      %v508 = vld [vmem:[%s6 + $0xd0] sm:$0xff]
      %v509 = vld [vmem:[%s6 + $0xd8] sm:$0xff]
      %v510 = vld [vmem:[%s6 + $0xe0] sm:$0xff]
      %v511 = vld [vmem:[%s6 + $0xe8] sm:$0xff]
      %v512 = vld [vmem:[%s6 + $0xf0] sm:$0xff]
      %v513 = vld [vmem:[%s6 + $0xf8] sm:$0xff]
      %v514 = vld [vmem:[%s6 + $0x100] sm:$0xff]
      %v515 = vld [vmem:[%s6 + $0x108] sm:$0xff]
      %v516 = vld [vmem:[%s6 + $0x110] sm:$0xff]
      %v517 = vld [vmem:[%s6 + $0x118] sm:$0xff]
      %v518 = vld [vmem:[%s6 + $0x120] sm:$0xff]
      %v519 = vld [vmem:[%s6 + $0x128] sm:$0xff]
      %v520 = vld [vmem:[%s6 + $0x130] sm:$0xff]
      %v521 = vld [vmem:[%s6 + $0x138] sm:$0xff]
      %v522 = vld [vmem:[%s6 + $0x140] sm:$0xff]
      %v523 = vld [vmem:[%s6 + $0x148] sm:$0xff]
      %v524 = vld [vmem:[%s6 + $0x150] sm:$0xff]
      %v525 = vld [vmem:[%s6 + $0x158] sm:$0xff]
      %v526 = vld [vmem:[%s6 + $0x160] sm:$0xff]
      %v527 = vld [vmem:[%s6 + $0x168] sm:$0xff]
      %v528 = vld [vmem:[%s6 + $0x170] sm:$0xff]
      %v529 = vld [vmem:[%s6 + $0x178] sm:$0xff]
      %v530 = vld [vmem:[%s6 + $0x180] sm:$0xff]
      %v531 = vld [vmem:[%s6 + $0x188] sm:$0xff]
      %v532 = vld [vmem:[%s6 + $0x190] sm:$0xff]
      %v533 = vld [vmem:[%s6 + $0x198] sm:$0xff]
      %v534 = vld [vmem:[%s6 + $0x1a0] sm:$0xff]
      %v535 = vld [vmem:[%s6 + $0x1a8] sm:$0xff]
      %v536 = vld [vmem:[%s6 + $0x1b0] sm:$0xff]
      %v537 = vld [vmem:[%s6 + $0x1b8] sm:$0xff]
      %v538 = vld [vmem:[%s6 + $0x1c0] sm:$0xff]
      %v539 = vld [vmem:[%s6 + $0x1c8] sm:$0xff]
      %v540 = vld [vmem:[%s6 + $0x1d0] sm:$0xff]
      %v541 = vld [vmem:[%s6 + $0x1d8] sm:$0xff]
      %v542 = vld [vmem:[%s6 + $0x1e0] sm:$0xff]
      %v543 = vld [vmem:[%s6 + $0x1e8] sm:$0xff]
      %v544 = vld [vmem:[%s6 + $0x1f0] sm:$0xff]
      %v545 = vld [vmem:[%s6 + $0x1f8] sm:$0xff]
      %v546 = vld [vmem:[%s6 + $0x200] sm:$0xff]
      %v547 = vld [vmem:[%s6 + $0x208] sm:$0xff]
      %v548 = vld [vmem:[%s6 + $0x210] sm:$0xff]
      %v549 = vld [vmem:[%s6 + $0x218] sm:$0xff]
      %v550 = vld [vmem:[%s6 + $0x220] sm:$0xff]
      %v551 = vld [vmem:[%s6 + $0x228] sm:$0xff]
      %v552 = vld [vmem:[%s6 + $0x230] sm:$0xff]
      %v553 = vld [vmem:[%s6 + $0x238] sm:$0xff]
      %v554 = vld [vmem:[%s6 + $0x240] sm:$0xff]
      %v555 = vld [vmem:[%s6 + $0x248] sm:$0xff]
      %v556 = vld [vmem:[%s6 + $0x250] sm:$0xff]
      %v557 = vld [vmem:[%s6 + $0x258] sm:$0xff]
      %v558 = vld [vmem:[%s6 + $0x260] sm:$0xff]
      %v559 = vld [vmem:[%s6 + $0x268] sm:$0xff]
      %v560 = vld [vmem:[%s6 + $0x270] sm:$0xff]
      %v561 = vld [vmem:[%s6 + $0x278] sm:$0xff]
      %v562 = vpack.c.bf16 %v487, %v482
      %v563 = vpack.c.bf16 %v488, %v483
      %v564 = vpack.c.bf16 %v489, %v484
      %v565 = vpack.c.bf16 %v490, %v485
      %v566 = vpack.c.bf16 %v491, %v486
      %v567 = vpack.c.bf16 %v497, %v492
      %v568 = vpack.c.bf16 %v498, %v493
      %v569 = vpack.c.bf16 %v499, %v494
      %v570 = vpack.c.bf16 %v500, %v495
      %v571 = vpack.c.bf16 %v501, %v496
      %v572 = vpack.c.bf16 %v507, %v502
      %v573 = vpack.c.bf16 %v508, %v503
      %v574 = vpack.c.bf16 %v509, %v504
      %v575 = vpack.c.bf16 %v510, %v505
      %v576 = vpack.c.bf16 %v511, %v506
      %v577 = vpack.c.bf16 %v517, %v512
      %v578 = vpack.c.bf16 %v518, %v513
      %v579 = vpack.c.bf16 %v519, %v514
      %v580 = vpack.c.bf16 %v520, %v515
      %v581 = vpack.c.bf16 %v521, %v516
      %v582 = vpack.c.bf16 %v527, %v522
      %v583 = vpack.c.bf16 %v528, %v523
      %v584 = vpack.c.bf16 %v529, %v524
      %v585 = vpack.c.bf16 %v530, %v525
      %v586 = vpack.c.bf16 %v531, %v526
      %v587 = vpack.c.bf16 %v537, %v532
      %v588 = vpack.c.bf16 %v538, %v533
      %v589 = vpack.c.bf16 %v539, %v534
      %v590 = vpack.c.bf16 %v540, %v535
      %v591 = vpack.c.bf16 %v541, %v536
      %v592 = vpack.c.bf16 %v547, %v542
      %v593 = vpack.c.bf16 %v548, %v543
      %v594 = vpack.c.bf16 %v549, %v544
      %v595 = vpack.c.bf16 %v550, %v545
      %v596 = vpack.c.bf16 %v551, %v546
      %v597 = vpack.c.bf16 %v557, %v552
      %v598 = vpack.c.bf16 %v558, %v553
      %v599 = vpack.c.bf16 %v559, %v554
      %v600 = vpack.c.bf16 %v560, %v555
      %v601 = vpack.c.bf16 %v561, %v556
      %602 = vmatpush.bf16.msra.mxu0 %v597
      %603 = vmatpush.bf16.msra.mxu0 %v592
      %604 = vmatpush.bf16.msra.mxu0 %v587
      %605 = vmatpush.bf16.msra.mxu0 %v582
      %606 = vmatpush.bf16.msra.mxu0 %v577
      %607 = vmatpush.bf16.msra.mxu0 %v572
      %608 = vmatpush.bf16.msra.mxu0 %v567
      %609 = vmatpush.bf16.msra.mxu0 %v562
      %610 = vmatmul.bf16.gmra.mxu0 %v474
      %v611 = vpop.f32.mrf.mxu0
      %v612 = vadd.f32 0.0, %v611
      %v613 = vpop.f32.mrf.mxu0
      %v614 = vadd.f32 0.0, %v613
      %615 = vmatmul.bf16.gmra.mxu0 %v475
      %v616 = vpop.f32.mrf.mxu0
      %v617 = vadd.f32 0.0, %v616
      %v618 = vpop.f32.mrf.mxu0
      %v619 = vadd.f32 0.0, %v618
      %620 = vmatmul.bf16.gmra.mxu0 %v476
      %v621 = vpop.f32.mrf.mxu0
      %v622 = vadd.f32 0.0, %v621
      %v623 = vpop.f32.mrf.mxu0
      %v624 = vadd.f32 0.0, %v623
      %625 = vmatmul.bf16.gmra.mxu0 %v477
      %v626 = vpop.f32.mrf.mxu0
      %v627 = vadd.f32 0.0, %v626
      %v628 = vpop.f32.mrf.mxu0
      %v629 = vadd.f32 0.0, %v628
      %630 = vmatmul.bf16.gmra.mxu0 %v478
      %v631 = vpop.f32.mrf.mxu0
      %v632 = vadd.f32 0.0, %v631
      %v633 = vpop.f32.mrf.mxu0
      %v634 = vadd.f32 0.0, %v633
      %635 = vmatmul.bf16.gmra.mxu0 %v479
      %v636 = vpop.f32.mrf.mxu0
      %v637 = vadd.f32 0.0, %v636
      %v638 = vpop.f32.mrf.mxu0
      %v639 = vadd.f32 0.0, %v638
      %640 = vmatmul.bf16.gmra.mxu0 %v480
      %v641 = vpop.f32.mrf.mxu0
      %v642 = vadd.f32 0.0, %v641
      %v643 = vpop.f32.mrf.mxu0
      %v644 = vadd.f32 0.0, %v643
      %645 = vmatmul.bf16.gmra.mxu0 %v481
      %v646 = vpop.f32.mrf.mxu0
      %v647 = vadd.f32 0.0, %v646
      %v648 = vpop.f32.mrf.mxu0
      %v649 = vadd.f32 0.0, %v648
      %650 = vdwg.mxu0
      %651 = vmatpush.bf16.msra.mxu0 %v598
      %652 = vmatpush.bf16.msra.mxu0 %v593
      %653 = vmatpush.bf16.msra.mxu0 %v588
      %654 = vmatpush.bf16.msra.mxu0 %v583
      %655 = vmatpush.bf16.msra.mxu0 %v578
      %656 = vmatpush.bf16.msra.mxu0 %v573
      %657 = vmatpush.bf16.msra.mxu0 %v568
      %658 = vmatpush.bf16.msra.mxu0 %v563
      %659 = vmatmul.bf16.gmra.mxu0 %v474
      %v660 = vpop.f32.mrf.mxu0
      %v661 = vadd.f32 0.0, %v660
      %v662 = vpop.f32.mrf.mxu0
      %v663 = vadd.f32 0.0, %v662
      %664 = vmatmul.bf16.gmra.mxu0 %v475
      %v665 = vpop.f32.mrf.mxu0
      %v666 = vadd.f32 0.0, %v665
      %v667 = vpop.f32.mrf.mxu0
      %v668 = vadd.f32 0.0, %v667
      %669 = vmatmul.bf16.gmra.mxu0 %v476
      %v670 = vpop.f32.mrf.mxu0
      %v671 = vadd.f32 0.0, %v670
      %v672 = vpop.f32.mrf.mxu0
      %v673 = vadd.f32 0.0, %v672
      %674 = vmatmul.bf16.gmra.mxu0 %v477
      %v675 = vpop.f32.mrf.mxu0
      %v676 = vadd.f32 0.0, %v675
      %v677 = vpop.f32.mrf.mxu0
      %v678 = vadd.f32 0.0, %v677
      %679 = vmatmul.bf16.gmra.mxu0 %v478
      %v680 = vpop.f32.mrf.mxu0
      %v681 = vadd.f32 0.0, %v680
      %v682 = vpop.f32.mrf.mxu0
      %v683 = vadd.f32 0.0, %v682
      %684 = vmatmul.bf16.gmra.mxu0 %v479
      %v685 = vpop.f32.mrf.mxu0
      %v686 = vadd.f32 0.0, %v685
      %v687 = vpop.f32.mrf.mxu0
      %v688 = vadd.f32 0.0, %v687
      %689 = vmatmul.bf16.gmra.mxu0 %v480
      %v690 = vpop.f32.mrf.mxu0
      %v691 = vadd.f32 0.0, %v690
      %v692 = vpop.f32.mrf.mxu0
      %v693 = vadd.f32 0.0, %v692
      %694 = vmatmul.bf16.gmra.mxu0 %v481
      %v695 = vpop.f32.mrf.mxu0
      %v696 = vadd.f32 0.0, %v695
      %v697 = vpop.f32.mrf.mxu0
      %v698 = vadd.f32 0.0, %v697
      %699 = vdwg.mxu0
      %700 = vmatpush.bf16.msra.mxu0 %v599
      %701 = vmatpush.bf16.msra.mxu0 %v594
      %702 = vmatpush.bf16.msra.mxu0 %v589
      %703 = vmatpush.bf16.msra.mxu0 %v584
      %704 = vmatpush.bf16.msra.mxu0 %v579
      %705 = vmatpush.bf16.msra.mxu0 %v574
      %706 = vmatpush.bf16.msra.mxu0 %v569
      %707 = vmatpush.bf16.msra.mxu0 %v564
      %708 = vmatmul.bf16.gmra.mxu0 %v474
      %v709 = vpop.f32.mrf.mxu0
      %v710 = vadd.f32 0.0, %v709
      %v711 = vpop.f32.mrf.mxu0
      %v712 = vadd.f32 0.0, %v711
      %713 = vmatmul.bf16.gmra.mxu0 %v475
      %v714 = vpop.f32.mrf.mxu0
      %v715 = vadd.f32 0.0, %v714
      %v716 = vpop.f32.mrf.mxu0
      %v717 = vadd.f32 0.0, %v716
      %718 = vmatmul.bf16.gmra.mxu0 %v476
      %v719 = vpop.f32.mrf.mxu0
      %v720 = vadd.f32 0.0, %v719
      %v721 = vpop.f32.mrf.mxu0
      %v722 = vadd.f32 0.0, %v721
      %723 = vmatmul.bf16.gmra.mxu0 %v477
      %v724 = vpop.f32.mrf.mxu0
      %v725 = vadd.f32 0.0, %v724
      %v726 = vpop.f32.mrf.mxu0
      %v727 = vadd.f32 0.0, %v726
      %728 = vmatmul.bf16.gmra.mxu0 %v478
      %v729 = vpop.f32.mrf.mxu0
      %v730 = vadd.f32 0.0, %v729
      %v731 = vpop.f32.mrf.mxu0
      %v732 = vadd.f32 0.0, %v731
      %733 = vmatmul.bf16.gmra.mxu0 %v479
      %v734 = vpop.f32.mrf.mxu0
      %v735 = vadd.f32 0.0, %v734
      %v736 = vpop.f32.mrf.mxu0
      %v737 = vadd.f32 0.0, %v736
      %738 = vmatmul.bf16.gmra.mxu0 %v480
      %v739 = vpop.f32.mrf.mxu0
      %v740 = vadd.f32 0.0, %v739
      %v741 = vpop.f32.mrf.mxu0
      %v742 = vadd.f32 0.0, %v741
      %743 = vmatmul.bf16.gmra.mxu0 %v481
      %v744 = vpop.f32.mrf.mxu0
      %v745 = vadd.f32 0.0, %v744
      %v746 = vpop.f32.mrf.mxu0
      %v747 = vadd.f32 0.0, %v746
      %748 = vdwg.mxu0
      %749 = vmatpush.bf16.msra.mxu0 %v600
      %750 = vmatpush.bf16.msra.mxu0 %v595
      %751 = vmatpush.bf16.msra.mxu0 %v590
      %752 = vmatpush.bf16.msra.mxu0 %v585
      %753 = vmatpush.bf16.msra.mxu0 %v580
      %754 = vmatpush.bf16.msra.mxu0 %v575
      %755 = vmatpush.bf16.msra.mxu0 %v570
      %756 = vmatpush.bf16.msra.mxu0 %v565
      %757 = vmatmul.bf16.gmra.mxu0 %v474
      %v758 = vpop.f32.mrf.mxu0
      %v759 = vadd.f32 0.0, %v758
      %v760 = vpop.f32.mrf.mxu0
      %v761 = vadd.f32 0.0, %v760
      %762 = vmatmul.bf16.gmra.mxu0 %v475
      %v763 = vpop.f32.mrf.mxu0
      %v764 = vadd.f32 0.0, %v763
      %v765 = vpop.f32.mrf.mxu0
      %v766 = vadd.f32 0.0, %v765
      %767 = vmatmul.bf16.gmra.mxu0 %v476
      %v768 = vpop.f32.mrf.mxu0
      %v769 = vadd.f32 0.0, %v768
      %v770 = vpop.f32.mrf.mxu0
      %v771 = vadd.f32 0.0, %v770
      %772 = vmatmul.bf16.gmra.mxu0 %v477
      %v773 = vpop.f32.mrf.mxu0
      %v774 = vadd.f32 0.0, %v773
      %v775 = vpop.f32.mrf.mxu0
      %v776 = vadd.f32 0.0, %v775
      %777 = vmatmul.bf16.gmra.mxu0 %v478
      %v778 = vpop.f32.mrf.mxu0
      %v779 = vadd.f32 0.0, %v778
      %v780 = vpop.f32.mrf.mxu0
      %v781 = vadd.f32 0.0, %v780
      %782 = vmatmul.bf16.gmra.mxu0 %v479
      %v783 = vpop.f32.mrf.mxu0
      %v784 = vadd.f32 0.0, %v783
      %v785 = vpop.f32.mrf.mxu0
      %v786 = vadd.f32 0.0, %v785
      %787 = vmatmul.bf16.gmra.mxu0 %v480
      %v788 = vpop.f32.mrf.mxu0
      %v789 = vadd.f32 0.0, %v788
      %v790 = vpop.f32.mrf.mxu0
      %v791 = vadd.f32 0.0, %v790
      %792 = vmatmul.bf16.gmra.mxu0 %v481
      %v793 = vpop.f32.mrf.mxu0
      %v794 = vadd.f32 0.0, %v793
      %v795 = vpop.f32.mrf.mxu0
      %v796 = vadd.f32 0.0, %v795
      %797 = vdwg.mxu0
      %798 = vmatpush.bf16.msra.mxu0 %v601
      %799 = vmatpush.bf16.msra.mxu0 %v596
      %800 = vmatpush.bf16.msra.mxu0 %v591
      %801 = vmatpush.bf16.msra.mxu0 %v586
      %802 = vmatpush.bf16.msra.mxu0 %v581
      %803 = vmatpush.bf16.msra.mxu0 %v576
      %804 = vmatpush.bf16.msra.mxu0 %v571
      %805 = vmatpush.bf16.msra.mxu0 %v566
      %806 = vmatmul.bf16.gmra.mxu0 %v474
      %v807 = vpop.f32.mrf.mxu0
      %v808 = vadd.f32 0.0, %v807
      %v809 = vpop.f32.mrf.mxu0
      %v810 = vadd.f32 0.0, %v809
      %811 = vmatmul.bf16.gmra.mxu0 %v475
      %v812 = vpop.f32.mrf.mxu0
      %v813 = vadd.f32 0.0, %v812
      %v814 = vpop.f32.mrf.mxu0
      %v815 = vadd.f32 0.0, %v814
      %816 = vmatmul.bf16.gmra.mxu0 %v476
      %v817 = vpop.f32.mrf.mxu0
      %v818 = vadd.f32 0.0, %v817
      %v819 = vpop.f32.mrf.mxu0
      %v820 = vadd.f32 0.0, %v819
      %821 = vmatmul.bf16.gmra.mxu0 %v477
      %v822 = vpop.f32.mrf.mxu0
      %v823 = vadd.f32 0.0, %v822
      %v824 = vpop.f32.mrf.mxu0
      %v825 = vadd.f32 0.0, %v824
      %826 = vmatmul.bf16.gmra.mxu0 %v478
      %v827 = vpop.f32.mrf.mxu0
      %v828 = vadd.f32 0.0, %v827
      %v829 = vpop.f32.mrf.mxu0
      %v830 = vadd.f32 0.0, %v829
      %831 = vmatmul.bf16.gmra.mxu0 %v479
      %v832 = vpop.f32.mrf.mxu0
      %v833 = vadd.f32 0.0, %v832
      %v834 = vpop.f32.mrf.mxu0
      %v835 = vadd.f32 0.0, %v834
      %836 = vmatmul.bf16.gmra.mxu0 %v480
      %v837 = vpop.f32.mrf.mxu0
      %v838 = vadd.f32 0.0, %v837
      %v839 = vpop.f32.mrf.mxu0
      %v840 = vadd.f32 0.0, %v839
      %841 = vmatmul.bf16.gmra.mxu0 %v481
      %v842 = vpop.f32.mrf.mxu0
      %v843 = vadd.f32 0.0, %v842
      %v844 = vpop.f32.mrf.mxu0
      %v845 = vadd.f32 0.0, %v844
      %846 = vdwg.mxu0
      %v847 = vld [vmem:[%s421] sm:$0xff]
      %v848 = vld [vmem:[%s421 + $0x8] sm:$0xff]
      %v849 = vld [vmem:[%s421 + $0x10] sm:$0xff]
      %v850 = vld [vmem:[%s421 + $0x18] sm:$0xff]
      %v851 = vld [vmem:[%s421 + $0x20] sm:$0xff]
      %v852 = vld [vmem:[%s421 + $0x28] sm:$0xff]
      %v853 = vld [vmem:[%s421 + $0x30] sm:$0xff]
      %v854 = vld [vmem:[%s421 + $0x38] sm:$0xff]
      %v855 = vld [vmem:[%s421 + $0x40] sm:$0xff]
      %v856 = vld [vmem:[%s421 + $0x48] sm:$0xff]
      %v857 = vld [vmem:[%s421 + $0x50] sm:$0xff]
      %v858 = vld [vmem:[%s421 + $0x58] sm:$0xff]
      %v859 = vld [vmem:[%s421 + $0x60] sm:$0xff]
      %v860 = vld [vmem:[%s421 + $0x68] sm:$0xff]
      %v861 = vld [vmem:[%s421 + $0x70] sm:$0xff]
      %v862 = vld [vmem:[%s421 + $0x78] sm:$0xff]
      %v863 = vld [vmem:[%s427] sm:$0xff]
      %v864 = vld [vmem:[%s427 + $0x8] sm:$0xff]
      %v865 = vld [vmem:[%s427 + $0x10] sm:$0xff]
      %v866 = vld [vmem:[%s427 + $0x18] sm:$0xff]
      %v867 = vld [vmem:[%s427 + $0x20] sm:$0xff]
      %v868 = vld [vmem:[%s427 + $0x28] sm:$0xff]
      %v869 = vld [vmem:[%s427 + $0x30] sm:$0xff]
      %v870 = vld [vmem:[%s427 + $0x38] sm:$0xff]
      %v871 = vld [vmem:[%s427 + $0x40] sm:$0xff]
      %v872 = vld [vmem:[%s427 + $0x48] sm:$0xff]
      %v873 = vld [vmem:[%s427 + $0x50] sm:$0xff]
      %v874 = vld [vmem:[%s427 + $0x58] sm:$0xff]
      %v875 = vld [vmem:[%s427 + $0x60] sm:$0xff]
      %v876 = vld [vmem:[%s427 + $0x68] sm:$0xff]
      %v877 = vld [vmem:[%s427 + $0x70] sm:$0xff]
      %v878 = vld [vmem:[%s427 + $0x78] sm:$0xff]
      %880 = vset.pattern.permute.xlu0 0
      %881 = vperm.xlu0 %880, %v847
      %v882 = vpop.permute.xlu0 %881
      %885 = vset.pattern.permute.xlu0 0
      %886 = vperm.xlu0 %885, %v848
      %v887 = vpop.permute.xlu0 %886
      %890 = vset.pattern.permute.xlu0 0
      %891 = vperm.xlu0 %890, %v849
      %v892 = vpop.permute.xlu0 %891
      %895 = vset.pattern.permute.xlu0 0
      %896 = vperm.xlu0 %895, %v850
      %v897 = vpop.permute.xlu0 %896
      %900 = vset.pattern.permute.xlu0 0
      %901 = vperm.xlu0 %900, %v851
      %v902 = vpop.permute.xlu0 %901
      %905 = vset.pattern.permute.xlu0 0
      %906 = vperm.xlu0 %905, %v852
      %v907 = vpop.permute.xlu0 %906
      %910 = vset.pattern.permute.xlu0 0
      %911 = vperm.xlu0 %910, %v853
      %v912 = vpop.permute.xlu0 %911
      %915 = vset.pattern.permute.xlu0 0
      %916 = vperm.xlu0 %915, %v854
      %v917 = vpop.permute.xlu0 %916
      %920 = vset.pattern.permute.xlu0 0
      %921 = vperm.xlu0 %920, %v855
      %v922 = vpop.permute.xlu0 %921
      %925 = vset.pattern.permute.xlu0 0
      %926 = vperm.xlu0 %925, %v856
      %v927 = vpop.permute.xlu0 %926
      %930 = vset.pattern.permute.xlu0 0
      %931 = vperm.xlu0 %930, %v857
      %v932 = vpop.permute.xlu0 %931
      %935 = vset.pattern.permute.xlu0 0
      %936 = vperm.xlu0 %935, %v858
      %v937 = vpop.permute.xlu0 %936
      %940 = vset.pattern.permute.xlu0 0
      %941 = vperm.xlu0 %940, %v859
      %v942 = vpop.permute.xlu0 %941
      %945 = vset.pattern.permute.xlu0 0
      %946 = vperm.xlu0 %945, %v860
      %v947 = vpop.permute.xlu0 %946
      %950 = vset.pattern.permute.xlu0 0
      %951 = vperm.xlu0 %950, %v861
      %v952 = vpop.permute.xlu0 %951
      %955 = vset.pattern.permute.xlu0 0
      %956 = vperm.xlu0 %955, %v862
      %v957 = vpop.permute.xlu0 %956
      %v959 = vmul.f32 %v882, %v612
      %v960 = vmul.f32 %v887, %v614
      %v961 = vmul.f32 %v892, %v617
      %v962 = vmul.f32 %v897, %v619
      %v963 = vmul.f32 %v902, %v622
      %v964 = vmul.f32 %v907, %v624
      %v965 = vmul.f32 %v912, %v627
      %v966 = vmul.f32 %v917, %v629
      %v967 = vmul.f32 %v922, %v632
      %v968 = vmul.f32 %v927, %v634
      %v969 = vmul.f32 %v932, %v637
      %v970 = vmul.f32 %v937, %v639
      %v971 = vmul.f32 %v942, %v642
      %v972 = vmul.f32 %v947, %v644
      %v973 = vmul.f32 %v952, %v647
      %v974 = vmul.f32 %v957, %v649
      %v975 = vadd.f32 %v863, %v959
      %v976 = vadd.f32 %v864, %v960
      %v977 = vadd.f32 %v865, %v961
      %v978 = vadd.f32 %v866, %v962
      %v979 = vadd.f32 %v867, %v963
      %v980 = vadd.f32 %v868, %v964
      %v981 = vadd.f32 %v869, %v965
      %v982 = vadd.f32 %v870, %v966
      %v983 = vadd.f32 %v871, %v967
      %v984 = vadd.f32 %v872, %v968
      %v985 = vadd.f32 %v873, %v969
      %v986 = vadd.f32 %v874, %v970
      %v987 = vadd.f32 %v875, %v971
      %v988 = vadd.f32 %v876, %v972
      %v989 = vadd.f32 %v877, %v973
      %v990 = vadd.f32 %v878, %v974
      %991 = vset.pattern.permute.xlu0 1
      %992 = vperm.xlu0 %991, %v847
      %v993 = vpop.permute.xlu0 %992
      %995 = vset.pattern.permute.xlu0 1
      %996 = vperm.xlu0 %995, %v848
      %v997 = vpop.permute.xlu0 %996
      %999 = vset.pattern.permute.xlu0 1
      %1000 = vperm.xlu0 %999, %v849
      %v1001 = vpop.permute.xlu0 %1000
      %1003 = vset.pattern.permute.xlu0 1
      %1004 = vperm.xlu0 %1003, %v850
      %v1005 = vpop.permute.xlu0 %1004
      %1007 = vset.pattern.permute.xlu0 1
      %1008 = vperm.xlu0 %1007, %v851
      %v1009 = vpop.permute.xlu0 %1008
      %1011 = vset.pattern.permute.xlu0 1
      %1012 = vperm.xlu0 %1011, %v852
      %v1013 = vpop.permute.xlu0 %1012
      %1015 = vset.pattern.permute.xlu0 1
      %1016 = vperm.xlu0 %1015, %v853
      %v1017 = vpop.permute.xlu0 %1016
      %1019 = vset.pattern.permute.xlu0 1
      %1020 = vperm.xlu0 %1019, %v854
      %v1021 = vpop.permute.xlu0 %1020
      %1023 = vset.pattern.permute.xlu0 1
      %1024 = vperm.xlu0 %1023, %v855
      %v1025 = vpop.permute.xlu0 %1024
      %1027 = vset.pattern.permute.xlu0 1
      %1028 = vperm.xlu0 %1027, %v856
      %v1029 = vpop.permute.xlu0 %1028
      %1031 = vset.pattern.permute.xlu0 1
      %1032 = vperm.xlu0 %1031, %v857
      %v1033 = vpop.permute.xlu0 %1032
      %1035 = vset.pattern.permute.xlu0 1
      %1036 = vperm.xlu0 %1035, %v858
      %v1037 = vpop.permute.xlu0 %1036
      %1039 = vset.pattern.permute.xlu0 1
      %1040 = vperm.xlu0 %1039, %v859
      %v1041 = vpop.permute.xlu0 %1040
      %1043 = vset.pattern.permute.xlu0 1
      %1044 = vperm.xlu0 %1043, %v860
      %v1045 = vpop.permute.xlu0 %1044
      %1047 = vset.pattern.permute.xlu0 1
      %1048 = vperm.xlu0 %1047, %v861
      %v1049 = vpop.permute.xlu0 %1048
      %1051 = vset.pattern.permute.xlu0 1
      %1052 = vperm.xlu0 %1051, %v862
      %v1053 = vpop.permute.xlu0 %1052
      %v1055 = vmul.f32 %v993, %v661
      %v1056 = vmul.f32 %v997, %v663
      %v1057 = vmul.f32 %v1001, %v666
      %v1058 = vmul.f32 %v1005, %v668
      %v1059 = vmul.f32 %v1009, %v671
      %v1060 = vmul.f32 %v1013, %v673
      %v1061 = vmul.f32 %v1017, %v676
      %v1062 = vmul.f32 %v1021, %v678
      %v1063 = vmul.f32 %v1025, %v681
      %v1064 = vmul.f32 %v1029, %v683
      %v1065 = vmul.f32 %v1033, %v686
      %v1066 = vmul.f32 %v1037, %v688
      %v1067 = vmul.f32 %v1041, %v691
      %v1068 = vmul.f32 %v1045, %v693
      %v1069 = vmul.f32 %v1049, %v696
      %v1070 = vmul.f32 %v1053, %v698
      %v1071 = vadd.f32 %v975, %v1055
      %v1072 = vadd.f32 %v976, %v1056
      %v1073 = vadd.f32 %v977, %v1057
      %v1074 = vadd.f32 %v978, %v1058
      %v1075 = vadd.f32 %v979, %v1059
      %v1076 = vadd.f32 %v980, %v1060
      %v1077 = vadd.f32 %v981, %v1061
      %v1078 = vadd.f32 %v982, %v1062
      %v1079 = vadd.f32 %v983, %v1063
      %v1080 = vadd.f32 %v984, %v1064
      %v1081 = vadd.f32 %v985, %v1065
      %v1082 = vadd.f32 %v986, %v1066
      %v1083 = vadd.f32 %v987, %v1067
      %v1084 = vadd.f32 %v988, %v1068
      %v1085 = vadd.f32 %v989, %v1069
      %v1086 = vadd.f32 %v990, %v1070
      %1087 = vset.pattern.permute.xlu0 2
      %1088 = vperm.xlu0 %1087, %v847
      %v1089 = vpop.permute.xlu0 %1088
      %1091 = vset.pattern.permute.xlu0 2
      %1092 = vperm.xlu0 %1091, %v848
      %v1093 = vpop.permute.xlu0 %1092
      %1095 = vset.pattern.permute.xlu0 2
      %1096 = vperm.xlu0 %1095, %v849
      %v1097 = vpop.permute.xlu0 %1096
      %1099 = vset.pattern.permute.xlu0 2
      %1100 = vperm.xlu0 %1099, %v850
      %v1101 = vpop.permute.xlu0 %1100
      %1103 = vset.pattern.permute.xlu0 2
      %1104 = vperm.xlu0 %1103, %v851
      %v1105 = vpop.permute.xlu0 %1104
      %1107 = vset.pattern.permute.xlu0 2
      %1108 = vperm.xlu0 %1107, %v852
      %v1109 = vpop.permute.xlu0 %1108
      %1111 = vset.pattern.permute.xlu0 2
      %1112 = vperm.xlu0 %1111, %v853
      %v1113 = vpop.permute.xlu0 %1112
      %1115 = vset.pattern.permute.xlu0 2
      %1116 = vperm.xlu0 %1115, %v854
      %v1117 = vpop.permute.xlu0 %1116
      %1119 = vset.pattern.permute.xlu0 2
      %1120 = vperm.xlu0 %1119, %v855
      %v1121 = vpop.permute.xlu0 %1120
      %1123 = vset.pattern.permute.xlu0 2
      %1124 = vperm.xlu0 %1123, %v856
      %v1125 = vpop.permute.xlu0 %1124
      %1127 = vset.pattern.permute.xlu0 2
      %1128 = vperm.xlu0 %1127, %v857
      %v1129 = vpop.permute.xlu0 %1128
      %1131 = vset.pattern.permute.xlu0 2
      %1132 = vperm.xlu0 %1131, %v858
      %v1133 = vpop.permute.xlu0 %1132
      %1135 = vset.pattern.permute.xlu0 2
      %1136 = vperm.xlu0 %1135, %v859
      %v1137 = vpop.permute.xlu0 %1136
      %1139 = vset.pattern.permute.xlu0 2
      %1140 = vperm.xlu0 %1139, %v860
      %v1141 = vpop.permute.xlu0 %1140
      %1143 = vset.pattern.permute.xlu0 2
      %1144 = vperm.xlu0 %1143, %v861
      %v1145 = vpop.permute.xlu0 %1144
      %1147 = vset.pattern.permute.xlu0 2
      %1148 = vperm.xlu0 %1147, %v862
      %v1149 = vpop.permute.xlu0 %1148
      %v1151 = vmul.f32 %v1089, %v710
      %v1152 = vmul.f32 %v1093, %v712
      %v1153 = vmul.f32 %v1097, %v715
      %v1154 = vmul.f32 %v1101, %v717
      %v1155 = vmul.f32 %v1105, %v720
      %v1156 = vmul.f32 %v1109, %v722
      %v1157 = vmul.f32 %v1113, %v725
      %v1158 = vmul.f32 %v1117, %v727
      %v1159 = vmul.f32 %v1121, %v730
      %v1160 = vmul.f32 %v1125, %v732
      %v1161 = vmul.f32 %v1129, %v735
      %v1162 = vmul.f32 %v1133, %v737
      %v1163 = vmul.f32 %v1137, %v740
      %v1164 = vmul.f32 %v1141, %v742
      %v1165 = vmul.f32 %v1145, %v745
      %v1166 = vmul.f32 %v1149, %v747
      %v1167 = vadd.f32 %v1071, %v1151
      %v1168 = vadd.f32 %v1072, %v1152
      %v1169 = vadd.f32 %v1073, %v1153
      %v1170 = vadd.f32 %v1074, %v1154
      %v1171 = vadd.f32 %v1075, %v1155
      %v1172 = vadd.f32 %v1076, %v1156
      %v1173 = vadd.f32 %v1077, %v1157
      %v1174 = vadd.f32 %v1078, %v1158
      %v1175 = vadd.f32 %v1079, %v1159
      %v1176 = vadd.f32 %v1080, %v1160
      %v1177 = vadd.f32 %v1081, %v1161
      %v1178 = vadd.f32 %v1082, %v1162
      %v1179 = vadd.f32 %v1083, %v1163
      %v1180 = vadd.f32 %v1084, %v1164
      %v1181 = vadd.f32 %v1085, %v1165
      %v1182 = vadd.f32 %v1086, %v1166
      %1183 = vset.pattern.permute.xlu0 3
      %1184 = vperm.xlu0 %1183, %v847
      %v1185 = vpop.permute.xlu0 %1184
      %1187 = vset.pattern.permute.xlu0 3
      %1188 = vperm.xlu0 %1187, %v848
      %v1189 = vpop.permute.xlu0 %1188
      %1191 = vset.pattern.permute.xlu0 3
      %1192 = vperm.xlu0 %1191, %v849
      %v1193 = vpop.permute.xlu0 %1192
      %1195 = vset.pattern.permute.xlu0 3
      %1196 = vperm.xlu0 %1195, %v850
      %v1197 = vpop.permute.xlu0 %1196
      %1199 = vset.pattern.permute.xlu0 3
      %1200 = vperm.xlu0 %1199, %v851
      %v1201 = vpop.permute.xlu0 %1200
      %1203 = vset.pattern.permute.xlu0 3
      %1204 = vperm.xlu0 %1203, %v852
      %v1205 = vpop.permute.xlu0 %1204
      %1207 = vset.pattern.permute.xlu0 3
      %1208 = vperm.xlu0 %1207, %v853
      %v1209 = vpop.permute.xlu0 %1208
      %1211 = vset.pattern.permute.xlu0 3
      %1212 = vperm.xlu0 %1211, %v854
      %v1213 = vpop.permute.xlu0 %1212
      %1215 = vset.pattern.permute.xlu0 3
      %1216 = vperm.xlu0 %1215, %v855
      %v1217 = vpop.permute.xlu0 %1216
      %1219 = vset.pattern.permute.xlu0 3
      %1220 = vperm.xlu0 %1219, %v856
      %v1221 = vpop.permute.xlu0 %1220
      %1223 = vset.pattern.permute.xlu0 3
      %1224 = vperm.xlu0 %1223, %v857
      %v1225 = vpop.permute.xlu0 %1224
      %1227 = vset.pattern.permute.xlu0 3
      %1228 = vperm.xlu0 %1227, %v858
      %v1229 = vpop.permute.xlu0 %1228
      %1231 = vset.pattern.permute.xlu0 3
      %1232 = vperm.xlu0 %1231, %v859
      %v1233 = vpop.permute.xlu0 %1232
      %1235 = vset.pattern.permute.xlu0 3
      %1236 = vperm.xlu0 %1235, %v860
      %v1237 = vpop.permute.xlu0 %1236
      %1239 = vset.pattern.permute.xlu0 3
      %1240 = vperm.xlu0 %1239, %v861
      %v1241 = vpop.permute.xlu0 %1240
      %1243 = vset.pattern.permute.xlu0 3
      %1244 = vperm.xlu0 %1243, %v862
      %v1245 = vpop.permute.xlu0 %1244
      %v1247 = vmul.f32 %v1185, %v759
      %v1248 = vmul.f32 %v1189, %v761
      %v1249 = vmul.f32 %v1193, %v764
      %v1250 = vmul.f32 %v1197, %v766
      %v1251 = vmul.f32 %v1201, %v769
      %v1252 = vmul.f32 %v1205, %v771
      %v1253 = vmul.f32 %v1209, %v774
      %v1254 = vmul.f32 %v1213, %v776
      %v1255 = vmul.f32 %v1217, %v779
      %v1256 = vmul.f32 %v1221, %v781
      %v1257 = vmul.f32 %v1225, %v784
      %v1258 = vmul.f32 %v1229, %v786
      %v1259 = vmul.f32 %v1233, %v789
      %v1260 = vmul.f32 %v1237, %v791
      %v1261 = vmul.f32 %v1241, %v794
      %v1262 = vmul.f32 %v1245, %v796
      %v1263 = vadd.f32 %v1167, %v1247
      %v1264 = vadd.f32 %v1168, %v1248
      %v1265 = vadd.f32 %v1169, %v1249
      %v1266 = vadd.f32 %v1170, %v1250
      %v1267 = vadd.f32 %v1171, %v1251
      %v1268 = vadd.f32 %v1172, %v1252
      %v1269 = vadd.f32 %v1173, %v1253
      %v1270 = vadd.f32 %v1174, %v1254
      %v1271 = vadd.f32 %v1175, %v1255
      %v1272 = vadd.f32 %v1176, %v1256
      %v1273 = vadd.f32 %v1177, %v1257
      %v1274 = vadd.f32 %v1178, %v1258
      %v1275 = vadd.f32 %v1179, %v1259
      %v1276 = vadd.f32 %v1180, %v1260
      %v1277 = vadd.f32 %v1181, %v1261
      %v1278 = vadd.f32 %v1182, %v1262
      %1279 = vset.pattern.permute.xlu0 4
      %1280 = vperm.xlu0 %1279, %v847
      %v1281 = vpop.permute.xlu0 %1280
      %1283 = vset.pattern.permute.xlu0 4
      %1284 = vperm.xlu0 %1283, %v848
      %v1285 = vpop.permute.xlu0 %1284
      %1287 = vset.pattern.permute.xlu0 4
      %1288 = vperm.xlu0 %1287, %v849
      %v1289 = vpop.permute.xlu0 %1288
      %1291 = vset.pattern.permute.xlu0 4
      %1292 = vperm.xlu0 %1291, %v850
      %v1293 = vpop.permute.xlu0 %1292
      %1295 = vset.pattern.permute.xlu0 4
      %1296 = vperm.xlu0 %1295, %v851
      %v1297 = vpop.permute.xlu0 %1296
      %1299 = vset.pattern.permute.xlu0 4
      %1300 = vperm.xlu0 %1299, %v852
      %v1301 = vpop.permute.xlu0 %1300
      %1303 = vset.pattern.permute.xlu0 4
      %1304 = vperm.xlu0 %1303, %v853
      %v1305 = vpop.permute.xlu0 %1304
      %1307 = vset.pattern.permute.xlu0 4
      %1308 = vperm.xlu0 %1307, %v854
      %v1309 = vpop.permute.xlu0 %1308
      %1311 = vset.pattern.permute.xlu0 4
      %1312 = vperm.xlu0 %1311, %v855
      %v1313 = vpop.permute.xlu0 %1312
      %1315 = vset.pattern.permute.xlu0 4
      %1316 = vperm.xlu0 %1315, %v856
      %v1317 = vpop.permute.xlu0 %1316
      %1319 = vset.pattern.permute.xlu0 4
      %1320 = vperm.xlu0 %1319, %v857
      %v1321 = vpop.permute.xlu0 %1320
      %1323 = vset.pattern.permute.xlu0 4
      %1324 = vperm.xlu0 %1323, %v858
      %v1325 = vpop.permute.xlu0 %1324
      %1327 = vset.pattern.permute.xlu0 4
      %1328 = vperm.xlu0 %1327, %v859
      %v1329 = vpop.permute.xlu0 %1328
      %1331 = vset.pattern.permute.xlu0 4
      %1332 = vperm.xlu0 %1331, %v860
      %v1333 = vpop.permute.xlu0 %1332
      %1335 = vset.pattern.permute.xlu0 4
      %1336 = vperm.xlu0 %1335, %v861
      %v1337 = vpop.permute.xlu0 %1336
      %1339 = vset.pattern.permute.xlu0 4
      %1340 = vperm.xlu0 %1339, %v862
      %v1341 = vpop.permute.xlu0 %1340
      %v1343 = vmul.f32 %v1281, %v808
      %v1344 = vmul.f32 %v1285, %v810
      %v1345 = vmul.f32 %v1289, %v813
      %v1346 = vmul.f32 %v1293, %v815
      %v1347 = vmul.f32 %v1297, %v818
      %v1348 = vmul.f32 %v1301, %v820
      %v1349 = vmul.f32 %v1305, %v823
      %v1350 = vmul.f32 %v1309, %v825
      %v1351 = vmul.f32 %v1313, %v828
      %v1352 = vmul.f32 %v1317, %v830
      %v1353 = vmul.f32 %v1321, %v833
      %v1354 = vmul.f32 %v1325, %v835
      %v1355 = vmul.f32 %v1329, %v838
      %v1356 = vmul.f32 %v1333, %v840
      %v1357 = vmul.f32 %v1337, %v843
      %v1358 = vmul.f32 %v1341, %v845
      %v1359 = vadd.f32 %v1263, %v1343
      %v1360 = vadd.f32 %v1264, %v1344
      %v1361 = vadd.f32 %v1265, %v1345
      %v1362 = vadd.f32 %v1266, %v1346
      %v1363 = vadd.f32 %v1267, %v1347
      %v1364 = vadd.f32 %v1268, %v1348
      %v1365 = vadd.f32 %v1269, %v1349
      %v1366 = vadd.f32 %v1270, %v1350
      %v1367 = vadd.f32 %v1271, %v1351
      %v1368 = vadd.f32 %v1272, %v1352
      %v1369 = vadd.f32 %v1273, %v1353
      %v1370 = vadd.f32 %v1274, %v1354
      %v1371 = vadd.f32 %v1275, %v1355
      %v1372 = vadd.f32 %v1276, %v1356
      %v1373 = vadd.f32 %v1277, %v1357
      %v1374 = vadd.f32 %v1278, %v1358
      %s1375 = smul.u32 %s24, 32
      %v1376 = vlaneseq
      %v1377 = vshrl.u32 %v1376, 7
      %v1378 = vadd.s32 %v1377, 8
      %v1379 = vadd.s32 %v1377, 16
      %v1380 = vadd.s32 %v1377, 24
      %v1381 = vstv %s1375
      %v1382 = vadd.s32 %v1381, %v1377
      %v1383 = vadd.s32 %v1381, %v1378
      %v1384 = vadd.s32 %v1381, %v1379
      %v1385 = vadd.s32 %v1381, %v1380
      %v1386 = vld [vmem:[%s431] sm:$0x1]
      %v1387 = vperm.slane %v1386, 0
      %vm1388 = vcmp.eq.s32.totalorder %v1387, %v1382
      %vm1389 = vcmp.eq.s32.totalorder %v1387, %v1383
      %vm1390 = vcmp.eq.s32.totalorder %v1387, %v1384
      %vm1391 = vcmp.eq.s32.totalorder %v1387, %v1385
      %v1392 = vsel %vm1388, 1, 0
      %v1393 = vsel %vm1389, 1, 0
      %v1394 = vsel %vm1390, 1, 0
      %v1395 = vsel %vm1391, 1, 0
      %v1396 = vcvt.s32.f32 %v1392
      %v1397 = vcvt.s32.f32 %v1393
      %v1398 = vcvt.s32.f32 %v1394
      %v1399 = vcvt.s32.f32 %v1395
      %v1400 = vpack.c.bf16 %v1397, %v1396
      %v1401 = vpack.c.bf16 %v1399, %v1398
      %v1402 = vld [vmem:[#allocation2] sm:$0xff]
      %v1403 = vld [vmem:[#allocation2 + $0x8] sm:$0xff]
      %v1404 = vld [vmem:[#allocation2 + $0x10] sm:$0xff]
      %v1405 = vld [vmem:[#allocation2 + $0x18] sm:$0xff]
      %v1406 = vpack.c.bf16 %v1360, %v1359
      %v1407 = vpack.c.bf16 %v1362, %v1361
      %v1408 = vpack.c.bf16 %v1364, %v1363
      %v1409 = vpack.c.bf16 %v1366, %v1365
      %v1410 = vpack.c.bf16 %v1368, %v1367
      %v1411 = vpack.c.bf16 %v1370, %v1369
      %v1412 = vpack.c.bf16 %v1372, %v1371
      %v1413 = vpack.c.bf16 %v1374, %v1373
      %1414 = vmatpush.bf16.msra.mxu0 %v1413
      %1415 = vmatpush.bf16.msra.mxu0 %v1412
      %1416 = vmatpush.bf16.msra.mxu0 %v1411
      %1417 = vmatpush.bf16.msra.mxu0 %v1410
      %1418 = vmatpush.bf16.msra.mxu0 %v1409
      %1419 = vmatpush.bf16.msra.mxu0 %v1408
      %1420 = vmatpush.bf16.msra.mxu0 %v1407
      %1421 = vmatpush.bf16.msra.mxu0 %v1406
      %1422 = vmatmul.bf16.gmra.mxu0 %v1400
      %v1423 = vpop.f32.mrf.mxu0
      %v1424 = vadd.f32 0.0, %v1423
      %v1425 = vpop.f32.mrf.mxu0
      %v1426 = vadd.f32 0.0, %v1425
      %1427 = vmatmul.bf16.gmra.mxu0 %v1401
      %v1428 = vpop.f32.mrf.mxu0
      %v1429 = vadd.f32 0.0, %v1428
      %v1430 = vpop.f32.mrf.mxu0
      %v1431 = vadd.f32 0.0, %v1430
      %1432 = vdwg.mxu0
      %v1433 = vadd.f32 %v1402, %v1424
      %v1434 = vadd.f32 %v1403, %v1426
      %v1435 = vadd.f32 %v1404, %v1429
      %v1436 = vadd.f32 %v1405, %v1431
      %1437 = vst [vmem:[#allocation2] sm:$0xff] %v1433
      %1438 = vst [vmem:[#allocation2 + $0x8] sm:$0xff] %v1434
      %1439 = vst [vmem:[#allocation2 + $0x10] sm:$0xff] %v1435
      %1440 = vst [vmem:[#allocation2 + $0x18] sm:$0xff] %v1436
      %p1441 = scmp.eq.s32.totalorder %s25, 3
      // Predicated region
      $region61: #{net_forward.2} parent=55 // pred_check
        %p1442 = pneg %p1441
      $region62: #{net_forward.2} parent=55 // pred_check_branch
        %1444 = sbr.rel (%p1442) target = $region64
      $region63: #{net_forward.2} parent=55 // pred_region
        %v1445 = vld [vmem:[%s436] sm:$0xff]
        %v1446 = vld [vmem:[%s436 + $0x8] sm:$0xff]
        %v1447 = vld [vmem:[%s436 + $0x10] sm:$0xff]
        %v1448 = vld [vmem:[%s436 + $0x18] sm:$0xff]
        %v1449 = vpack.c.bf16 %v1446, %v1445
        %v1450 = vpack.c.bf16 %v1448, %v1447
        %v1451 = vld [vmem:[#allocation2] sm:$0xff]
        %v1452 = vld [vmem:[#allocation2 + $0x8] sm:$0xff]
        %v1453 = vld [vmem:[#allocation2 + $0x10] sm:$0xff]
        %v1454 = vld [vmem:[#allocation2 + $0x18] sm:$0xff]
        %v1455 = vld [vmem:[%s442] sm:$0xff]
        %v1456 = vld [vmem:[%s442 + $0x8] sm:$0xff]
        %v1457 = vld [vmem:[%s442 + $0x10] sm:$0xff]
        %v1458 = vld [vmem:[%s442 + $0x18] sm:$0xff]
        %1460 = vset.pattern.permute.xlu0 0
        %1461 = vperm.xlu0 %1460, %v1455
        %v1462 = vpop.permute.xlu0 %1461
        %1465 = vset.pattern.permute.xlu0 0
        %1466 = vperm.xlu0 %1465, %v1456
        %v1467 = vpop.permute.xlu0 %1466
        %1470 = vset.pattern.permute.xlu0 0
        %1471 = vperm.xlu0 %1470, %v1457
        %v1472 = vpop.permute.xlu0 %1471
        %1475 = vset.pattern.permute.xlu0 0
        %1476 = vperm.xlu0 %1475, %v1458
        %v1477 = vpop.permute.xlu0 %1476
        %v1479 = vmul.f32 %v1451, %v1462
        %v1480 = vmul.f32 %v1452, %v1467
        %v1481 = vmul.f32 %v1453, %v1472
        %v1482 = vmul.f32 %v1454, %v1477
        %v1483 = vld [vmem:[%s7] sm:$0xff]
        %v1484 = vld [vmem:[%s7 + $0x8] sm:$0xff]
        %v1485 = vld [vmem:[%s7 + $0x10] sm:$0xff]
        %v1486 = vld [vmem:[%s7 + $0x18] sm:$0xff]
        %v1487 = vld [vmem:[%s7 + $0x20] sm:$0xff]
        %v1488 = vld [vmem:[%s7 + $0x28] sm:$0xff]
        %v1489 = vld [vmem:[%s7 + $0x30] sm:$0xff]
        %v1490 = vld [vmem:[%s7 + $0x38] sm:$0xff]
        %v1491 = vld [vmem:[%s7 + $0x40] sm:$0xff]
        %v1492 = vld [vmem:[%s7 + $0x48] sm:$0xff]
        %v1493 = vld [vmem:[%s7 + $0x50] sm:$0xff]
        %v1494 = vld [vmem:[%s7 + $0x58] sm:$0xff]
        %v1495 = vld [vmem:[%s7 + $0x60] sm:$0xff]
        %v1496 = vld [vmem:[%s7 + $0x68] sm:$0xff]
        %v1497 = vld [vmem:[%s7 + $0x70] sm:$0xff]
        %v1498 = vld [vmem:[%s7 + $0x78] sm:$0xff]
        %v1499 = vpack.c.bf16 %v1484, %v1483
        %v1500 = vpack.c.bf16 %v1486, %v1485
        %v1501 = vpack.c.bf16 %v1488, %v1487
        %v1502 = vpack.c.bf16 %v1490, %v1489
        %v1503 = vpack.c.bf16 %v1492, %v1491
        %v1504 = vpack.c.bf16 %v1494, %v1493
        %v1505 = vpack.c.bf16 %v1496, %v1495
        %v1506 = vpack.c.bf16 %v1498, %v1497
        %1507 = vmatpush.bf16.msra.mxu0 %v1506
        %1508 = vmatpush.bf16.msra.mxu0 %v1505
        %1509 = vmatpush.bf16.msra.mxu0 %v1504
        %1510 = vmatpush.bf16.msra.mxu0 %v1503
        %1511 = vmatpush.bf16.msra.mxu0 %v1502
        %1512 = vmatpush.bf16.msra.mxu0 %v1501
        %1513 = vmatpush.bf16.msra.mxu0 %v1500
        %1514 = vmatpush.bf16.msra.mxu0 %v1499
        %1515 = vmatmul.bf16.gmra.mxu0 %v1449
        %v1516 = vpop.f32.mrf.mxu0
        %v1517 = vadd.f32 0.0, %v1516
        %v1518 = vpop.f32.mrf.mxu0
        %v1519 = vadd.f32 0.0, %v1518
        %1520 = vmatmul.bf16.gmra.mxu0 %v1450
        %v1521 = vpop.f32.mrf.mxu0
        %v1522 = vadd.f32 0.0, %v1521
        %v1523 = vpop.f32.mrf.mxu0
        %v1524 = vadd.f32 0.0, %v1523
        %1525 = vdwg.mxu0
        %v1526 = vadd.f32 %v1479, %v1517
        %v1527 = vadd.f32 %v1480, %v1519
        %v1528 = vadd.f32 %v1481, %v1522
        %v1529 = vadd.f32 %v1482, %v1524
        %v1530 = vld [vmem:[%s8] sm:$0x1]
        %v1532 = vperm.slane %v1530, 0
        %v1534 = vadd.f32 %v1526, %v1532
        %v1535 = vadd.f32 %v1527, %v1532
        %v1536 = vadd.f32 %v1528, %v1532
        %v1537 = vadd.f32 %v1529, %v1532
        %1538 = vst [vmem:[%s448] sm:$0xff] %v1534
        %1539 = vst [vmem:[%s448 + $0x8] sm:$0xff] %v1535
        %1540 = vst [vmem:[%s448 + $0x10] sm:$0xff] %v1536
        %1541 = vst [vmem:[%s448 + $0x18] sm:$0xff] %v1537
      $region64: #{net_forward.2} parent=55 // pred_fallthru
        _
      %s1542 = smul.u32 4, %s24
      %p1543 = scmp.lt.s32.totalorder %s1542, 7
      %s1544 = scalar_select %p1543, %s1542, 7
      %s1545 = smul.addr %s1544, 8
      %s1546 = scalar_lea.vmem %s9, %s1545
      // Predicated region
      $region65: #{net_forward.2} parent=55 // pred_check
        %p1547 = pneg %p269
      $region66: #{net_forward.2} parent=55 // pred_check_branch
        %1549 = sbr.rel (%p1547) target = $region68
      $region67: #{net_forward.2} parent=55 // pred_region
        %s1550 = smul.u32 4, %s24
      $region68: #{net_forward.2} parent=55 // pred_fallthru
        _
    $region56: #{net_forward.2} parent=5 // pred_fallthru
      _
    %p1551 = scmp.le.s32.totalorder 2, %s15
    // Predicated region
    $region69: #{net_forward.2} parent=5 // pred_check
      %p1552 = pneg %p1551
    $region70: #{net_forward.2} parent=5 // pred_check_branch
      %1554 = sbr.rel (%p1552) target = $region72
    $region71: #{net_forward.2} parent=5 // pred_region
      %s1555 = ssub.s32 %s15, 2
      // Predicated region
      $region73: #{net_forward.2} parent=71 // pred_check
        %p1556 = pneg %p275
      $region74: #{net_forward.2} parent=71 // pred_check_branch
        %1558 = sbr.rel (%p1556) target = $region76
      $region75: #{net_forward.2} parent=71 // pred_region
        %s1559 = smul.u32 4, %s26
        %p1560 = scmp.lt.s32.totalorder %s1559, 7
        %s1561 = scalar_select %p1560, %s1559, 7
        %s1562 = smul.addr %s1561, 8
        %s1563 = scalar_lea.vmem %s9, %s1562
      $region76: #{net_forward.2} parent=71 // pred_fallthru
        _
    $region72: #{net_forward.2} parent=5 // pred_fallthru
      _
  $region6: #{net_forward.2} parent=0 // loop_footer
    %s19 = sadd.s32 1, %s15
  $region7: #{net_forward.2} parent=0 // loop_footer_branch
    %14 = sbr.rel target = $region3
  $region8: #{net_forward.2} parent=0 // loop_exit
    _

// kernel: net_forward.3
$region0: #{net_forward.3}
  #allocation0 [shape = 'u32[]', space=smem, size = 0x4, offset = 0x4, fixed_abs, tag = 'smem constant byte address 0x4 - core index']
  #allocation1 [shape = 'u32[72,128]{1,0:T(1,128)}', space=vmem, size = 0x9000, scoped, tag = 'internal scratch']
  #allocation2 [shape = 'f32[32,128]{1,0:T(8,128)}', space=vmem, size = 0x4000, scoped, tag = 'scratch operand']
  %s0 = inlined_call_operand.vmem [shape: f32[512,128], index: 0, kind: input, shape index: {}]
  %s1 = inlined_call_operand.vmem [shape: f32[512,5], index: 1, kind: input, shape index: {}]
  %s2 = inlined_call_operand.vmem [shape: f32[512,128], index: 2, kind: input, shape index: {}]
  %s3 = inlined_call_operand.vmem [shape: s32[1,512], index: 3, kind: input, shape index: {}]
  %s4 = inlined_call_operand.vmem [shape: f32[64,128], index: 4, kind: input, shape index: {}]
  %s5 = inlined_call_operand.vmem [shape: f32[64,1], index: 5, kind: input, shape index: {}]
  %s6 = inlined_call_operand.vmem [shape: f32[128,640], index: 6, kind: input, shape index: {}]
  %s7 = inlined_call_operand.vmem [shape: f32[128,128], index: 7, kind: input, shape index: {}]
  %s8 = inlined_call_operand.vmem [shape: f32[1,128], index: 8, kind: input, shape index: {}]
  %s9 = inlined_call_operand.vmem [shape: f32[64,128], index: 9, kind: output, shape index: {}]
  %s10 = sld [smem:[#allocation0]]
  $region77: #{net_forward.3} parent=0
    _
  %s12 = ssub.s32 1, %s10
  %s13 = scalar_select 0, %s12, %s10
  loop: start=0, step=1, limit=10
  $region2: #{net_forward.3} parent=0 // loop_pre_header
    _
  $region3: #{net_forward.3} parent=0 // loop_header
    %s15 = sphi 0, %s19
    %p16 = scmp.ge.s32.totalorder %s15, 10
    %s22 = sphi 0, %s34
    %s23 = sphi 0, %s30
    %s24 = sphi 0, %s22
    %s25 = sphi 0, %s23
    %s26 = sphi 0, %s24
    %s27 = sphi 0, %s25
    %s37 = sphi 0, %s39
    %s40 = sphi 0, %s37
    %s41 = sphi 0, %s40
    %s57 = sphi 0, %s41
    %s63 = sphi 0, %s65
    %s66 = sphi 0, %s63
    %s67 = sphi 0, %s66
    %s83 = sphi 0, %s67
    %s89 = sphi 0, %s91
    %s92 = sphi 0, %s89
    %s93 = sphi 0, %s92
    %s109 = sphi 0, %s93
    %s115 = sphi 0, %s117
    %s118 = sphi 0, %s115
    %s119 = sphi 0, %s118
    %s135 = sphi 0, %s119
    %s141 = sphi 0, %s143
    %s144 = sphi 0, %s141
    %s145 = sphi 0, %s144
    %s161 = sphi 0, %s145
    %s167 = sphi 0, %s169
    %s170 = sphi 0, %s167
    %s171 = sphi 0, %s170
    %s187 = sphi 0, %s171
    %s191 = sphi 0, %s191
    %s193 = sphi 0, %s191
    %s194 = sphi 0, %s193
    %s208 = sphi 0, %s194
    %s212 = sphi 0, %s212
    %s214 = sphi 0, %s212
    %s215 = sphi 0, %s214
    %s229 = sphi 0, %s215
    %s233 = sphi 0, %s233
    %s235 = sphi 0, %s233
    %s236 = sphi 0, %s235
    %s250 = sphi 0, %s236
    %s256 = sphi 0, %s258
    %s259 = sphi 0, %s256
    %s260 = sphi 0, %s259
    %s276 = sphi 0, %s260
  $region4: #{net_forward.3} parent=0 // loop_header_branch
    %18 = sbr.rel (%p16) target = $region8
  $region5: #{net_forward.3} parent=0 // loop_body
    %s20 = ssub.s32 %s15, 1
    %s21 = ssub.s32 %s15, 2
    %s28 = sadd.s32 1, %s23
    %p29 = scmp.ge.s32.totalorder %s28, 4
    %s30 = scalar_select %p29, 0, %s28
    %s31 = sadd.s32 1, %s22
    %s32 = scalar_select %p29, %s31, %s22
    %p33 = scmp.ge.s32.totalorder %s32, 2
    %s34 = scalar_select %p33, 0, %s32
    %s35 = ssub.s32 %s23, %s30
    %p36 = scmp.eq.s32.totalorder %s35, 0
    %s38 = sadd.s32 %s37, 1
    %s39 = scalar_select %p36, %s37, %s38
    %p42 = pneg %p36
    %p43 = scmp.eq.s32.totalorder %s15, 7
    %p44 = por %p42, %p43
    %p45 = scmp.ne.s32.totalorder %s37, %s40
    %p46 = scmp.eq.s32.totalorder %s15, 0
    %p47 = por %p45, %p46
    %p48 = scmp.ne.s32.totalorder %s37, %s40
    %p49 = scmp.eq.s32.totalorder %s20, 7
    %p50 = por %p48, %p49
    %p51 = scmp.ne.s32.totalorder %s40, %s41
    %p52 = scmp.eq.s32.totalorder %s20, 0
    %p53 = por %p51, %p52
    %p54 = scmp.ne.s32.totalorder %s40, %s41
    %p55 = scmp.eq.s32.totalorder %s21, 7
    %p56 = por %p54, %p55
    %p58 = scmp.ne.s32.totalorder %s41, %s57
    %p59 = scmp.eq.s32.totalorder %s21, 0
    %p60 = por %p58, %p59
    %s61 = ssub.s32 %s23, %s30
    %p62 = scmp.eq.s32.totalorder %s61, 0
    %s64 = sadd.s32 %s63, 1
    %s65 = scalar_select %p62, %s63, %s64
    %p68 = pneg %p62
    %p69 = scmp.eq.s32.totalorder %s15, 7
    %p70 = por %p68, %p69
    %p71 = scmp.ne.s32.totalorder %s63, %s66
    %p72 = scmp.eq.s32.totalorder %s15, 0
    %p73 = por %p71, %p72
    %p74 = scmp.ne.s32.totalorder %s63, %s66
    %p75 = scmp.eq.s32.totalorder %s20, 7
    %p76 = por %p74, %p75
    %p77 = scmp.ne.s32.totalorder %s66, %s67
    %p78 = scmp.eq.s32.totalorder %s20, 0
    %p79 = por %p77, %p78
    %p80 = scmp.ne.s32.totalorder %s66, %s67
    %p81 = scmp.eq.s32.totalorder %s21, 7
    %p82 = por %p80, %p81
    %p84 = scmp.ne.s32.totalorder %s67, %s83
    %p85 = scmp.eq.s32.totalorder %s21, 0
    %p86 = por %p84, %p85
    %s87 = ssub.s32 %s23, %s30
    %p88 = scmp.eq.s32.totalorder %s87, 0
    %s90 = sadd.s32 %s89, 1
    %s91 = scalar_select %p88, %s89, %s90
    %p94 = pneg %p88
    %p95 = scmp.eq.s32.totalorder %s15, 7
    %p96 = por %p94, %p95
    %p97 = scmp.ne.s32.totalorder %s89, %s92
    %p98 = scmp.eq.s32.totalorder %s15, 0
    %p99 = por %p97, %p98
    %p100 = scmp.ne.s32.totalorder %s89, %s92
    %p101 = scmp.eq.s32.totalorder %s20, 7
    %p102 = por %p100, %p101
    %p103 = scmp.ne.s32.totalorder %s92, %s93
    %p104 = scmp.eq.s32.totalorder %s20, 0
    %p105 = por %p103, %p104
    %p106 = scmp.ne.s32.totalorder %s92, %s93
    %p107 = scmp.eq.s32.totalorder %s21, 7
    %p108 = por %p106, %p107
    %p110 = scmp.ne.s32.totalorder %s93, %s109
    %p111 = scmp.eq.s32.totalorder %s21, 0
    %p112 = por %p110, %p111
    %s113 = ssub.s32 %s23, %s30
    %p114 = scmp.eq.s32.totalorder %s113, 0
    %s116 = sadd.s32 %s115, 1
    %s117 = scalar_select %p114, %s115, %s116
    %p120 = pneg %p114
    %p121 = scmp.eq.s32.totalorder %s15, 7
    %p122 = por %p120, %p121
    %p123 = scmp.ne.s32.totalorder %s115, %s118
    %p124 = scmp.eq.s32.totalorder %s15, 0
    %p125 = por %p123, %p124
    %p126 = scmp.ne.s32.totalorder %s115, %s118
    %p127 = scmp.eq.s32.totalorder %s20, 7
    %p128 = por %p126, %p127
    %p129 = scmp.ne.s32.totalorder %s118, %s119
    %p130 = scmp.eq.s32.totalorder %s20, 0
    %p131 = por %p129, %p130
    %p132 = scmp.ne.s32.totalorder %s118, %s119
    %p133 = scmp.eq.s32.totalorder %s21, 7
    %p134 = por %p132, %p133
    %p136 = scmp.ne.s32.totalorder %s119, %s135
    %p137 = scmp.eq.s32.totalorder %s21, 0
    %p138 = por %p136, %p137
    %s139 = ssub.s32 %s22, %s34
    %p140 = scmp.eq.s32.totalorder %s139, 0
    %s142 = sadd.s32 %s141, 1
    %s143 = scalar_select %p140, %s141, %s142
    %p146 = pneg %p140
    %p147 = scmp.eq.s32.totalorder %s15, 7
    %p148 = por %p146, %p147
    %p149 = scmp.ne.s32.totalorder %s141, %s144
    %p150 = scmp.eq.s32.totalorder %s15, 0
    %p151 = por %p149, %p150
    %p152 = scmp.ne.s32.totalorder %s141, %s144
    %p153 = scmp.eq.s32.totalorder %s20, 7
    %p154 = por %p152, %p153
    %p155 = scmp.ne.s32.totalorder %s144, %s145
    %p156 = scmp.eq.s32.totalorder %s20, 0
    %p157 = por %p155, %p156
    %p158 = scmp.ne.s32.totalorder %s144, %s145
    %p159 = scmp.eq.s32.totalorder %s21, 7
    %p160 = por %p158, %p159
    %p162 = scmp.ne.s32.totalorder %s145, %s161
    %p163 = scmp.eq.s32.totalorder %s21, 0
    %p164 = por %p162, %p163
    %s165 = ssub.s32 %s22, %s34
    %p166 = scmp.eq.s32.totalorder %s165, 0
    %s168 = sadd.s32 %s167, 1
    %s169 = scalar_select %p166, %s167, %s168
    %p172 = pneg %p166
    %p173 = scmp.eq.s32.totalorder %s15, 7
    %p174 = por %p172, %p173
    %p175 = scmp.ne.s32.totalorder %s167, %s170
    %p176 = scmp.eq.s32.totalorder %s15, 0
    %p177 = por %p175, %p176
    %p178 = scmp.ne.s32.totalorder %s167, %s170
    %p179 = scmp.eq.s32.totalorder %s20, 7
    %p180 = por %p178, %p179
    %p181 = scmp.ne.s32.totalorder %s170, %s171
    %p182 = scmp.eq.s32.totalorder %s20, 0
    %p183 = por %p181, %p182
    %p184 = scmp.ne.s32.totalorder %s170, %s171
    %p185 = scmp.eq.s32.totalorder %s21, 7
    %p186 = por %p184, %p185
    %p188 = scmp.ne.s32.totalorder %s171, %s187
    %p189 = scmp.eq.s32.totalorder %s21, 0
    %p190 = por %p188, %p189
    %s192 = sadd.s32 %s191, 1
    %p195 = scmp.eq.s32.totalorder %s15, 7
    %p196 = scmp.ne.s32.totalorder %s191, %s193
    %p197 = scmp.eq.s32.totalorder %s15, 0
    %p198 = por %p196, %p197
    %p199 = scmp.ne.s32.totalorder %s191, %s193
    %p200 = scmp.eq.s32.totalorder %s20, 7
    %p201 = por %p199, %p200
    %p202 = scmp.ne.s32.totalorder %s193, %s194
    %p203 = scmp.eq.s32.totalorder %s20, 0
    %p204 = por %p202, %p203
    %p205 = scmp.ne.s32.totalorder %s193, %s194
    %p206 = scmp.eq.s32.totalorder %s21, 7
    %p207 = por %p205, %p206
    %p209 = scmp.ne.s32.totalorder %s194, %s208
    %p210 = scmp.eq.s32.totalorder %s21, 0
    %p211 = por %p209, %p210
    %s213 = sadd.s32 %s212, 1
    %p216 = scmp.eq.s32.totalorder %s15, 7
    %p217 = scmp.ne.s32.totalorder %s212, %s214
    %p218 = scmp.eq.s32.totalorder %s15, 0
    %p219 = por %p217, %p218
    %p220 = scmp.ne.s32.totalorder %s212, %s214
    %p221 = scmp.eq.s32.totalorder %s20, 7
    %p222 = por %p220, %p221
    %p223 = scmp.ne.s32.totalorder %s214, %s215
    %p224 = scmp.eq.s32.totalorder %s20, 0
    %p225 = por %p223, %p224
    %p226 = scmp.ne.s32.totalorder %s214, %s215
    %p227 = scmp.eq.s32.totalorder %s21, 7
    %p228 = por %p226, %p227
    %p230 = scmp.ne.s32.totalorder %s215, %s229
    %p231 = scmp.eq.s32.totalorder %s21, 0
    %p232 = por %p230, %p231
    %s234 = sadd.s32 %s233, 1
    %p237 = scmp.eq.s32.totalorder %s15, 7
    %p238 = scmp.ne.s32.totalorder %s233, %s235
    %p239 = scmp.eq.s32.totalorder %s15, 0
    %p240 = por %p238, %p239
    %p241 = scmp.ne.s32.totalorder %s233, %s235
    %p242 = scmp.eq.s32.totalorder %s20, 7
    %p243 = por %p241, %p242
    %p244 = scmp.ne.s32.totalorder %s235, %s236
    %p245 = scmp.eq.s32.totalorder %s20, 0
    %p246 = por %p244, %p245
    %p247 = scmp.ne.s32.totalorder %s235, %s236
    %p248 = scmp.eq.s32.totalorder %s21, 7
    %p249 = por %p247, %p248
    %p251 = scmp.ne.s32.totalorder %s236, %s250
    %p252 = scmp.eq.s32.totalorder %s21, 0
    %p253 = por %p251, %p252
    %s254 = ssub.s32 %s22, %s34
    %p255 = scmp.eq.s32.totalorder %s254, 0
    %s257 = sadd.s32 %s256, 1
    %s258 = scalar_select %p255, %s256, %s257
    %p261 = pneg %p255
    %p262 = scmp.eq.s32.totalorder %s15, 7
    %p263 = por %p261, %p262
    %p264 = scmp.ne.s32.totalorder %s256, %s259
    %p265 = scmp.eq.s32.totalorder %s15, 0
    %p266 = por %p264, %p265
    %p267 = scmp.ne.s32.totalorder %s256, %s259
    %p268 = scmp.eq.s32.totalorder %s20, 7
    %p269 = por %p267, %p268
    %p270 = scmp.ne.s32.totalorder %s259, %s260
    %p271 = scmp.eq.s32.totalorder %s20, 0
    %p272 = por %p270, %p271
    %p273 = scmp.ne.s32.totalorder %s259, %s260
    %p274 = scmp.eq.s32.totalorder %s21, 7
    %p275 = por %p273, %p274
    %p277 = scmp.ne.s32.totalorder %s260, %s276
    %p278 = scmp.eq.s32.totalorder %s21, 0
    %p279 = por %p277, %p278
    %p280 = scmp.le.s32.totalorder 1, %s15
    %p281 = scmp.lt.s32.totalorder %s15, 9
    %p282 = pnand %p280, %p281
    %p283 = pneg %p282
    // Predicated region
    $region9: #{net_forward.3} parent=5 // pred_check
      _
    $region10: #{net_forward.3} parent=5 // pred_check_branch
      %285 = sbr.rel (%p282) target = $region12
    $region11: #{net_forward.3} parent=5 // pred_region
      %s286 = ssub.s32 %s15, 1
      // Predicated region
      $region13: #{net_forward.3} parent=11 // pred_check
        %p287 = pneg %p204
      $region14: #{net_forward.3} parent=11 // pred_check_branch
        %289 = sbr.rel (%p287) target = $region16
      $region15: #{net_forward.3} parent=11 // pred_region
        _
      $region16: #{net_forward.3} parent=11 // pred_fallthru
        _
      // Predicated region
      $region17: #{net_forward.3} parent=11 // pred_check
        %p290 = pneg %p225
      $region18: #{net_forward.3} parent=11 // pred_check_branch
        %292 = sbr.rel (%p290) target = $region20
      $region19: #{net_forward.3} parent=11 // pred_region
        _
      $region20: #{net_forward.3} parent=11 // pred_fallthru
        _
      // Predicated region
      $region21: #{net_forward.3} parent=11 // pred_check
        %p293 = pneg %p246
      $region22: #{net_forward.3} parent=11 // pred_check_branch
        %295 = sbr.rel (%p293) target = $region24
      $region23: #{net_forward.3} parent=11 // pred_region
        _
      $region24: #{net_forward.3} parent=11 // pred_fallthru
        _
    $region12: #{net_forward.3} parent=5 // pred_fallthru
      _
    %p296 = scmp.lt.s32.totalorder %s15, 8
    // Predicated region
    $region25: #{net_forward.3} parent=5 // pred_check
      %p297 = pneg %p296
    $region26: #{net_forward.3} parent=5 // pred_check_branch
      %299 = sbr.rel (%p297) target = $region28
    $region27: #{net_forward.3} parent=5 // pred_region
      // Predicated region
      $region29: #{net_forward.3} parent=27 // pred_check
        %p300 = pneg %p47
      $region30: #{net_forward.3} parent=27 // pred_check_branch
        %302 = sbr.rel (%p300) target = $region32
      $region31: #{net_forward.3} parent=27 // pred_region
        %s303 = smul.u32 16, %s23
        %p304 = scmp.lt.s32.totalorder %s303, 63
        %s305 = scalar_select %p304, %s303, 63
        %s306 = smul.addr %s305, 8
        %s307 = scalar_lea.vmem %s0, %s306
        %s308 = smul.u32 16, %s23
      $region32: #{net_forward.3} parent=27 // pred_fallthru
        _
      // Predicated region
      $region33: #{net_forward.3} parent=27 // pred_check
        %p309 = pneg %p73
      $region34: #{net_forward.3} parent=27 // pred_check_branch
        %311 = sbr.rel (%p309) target = $region36
      $region35: #{net_forward.3} parent=27 // pred_region
        %s312 = smul.u32 16, %s23
        %p313 = scmp.lt.s32.totalorder %s312, 63
        %s314 = scalar_select %p313, %s312, 63
        %s315 = smul.addr %s314, 8
        %s316 = scalar_lea.vmem %s1, %s315
        %s317 = smul.u32 16, %s23
      $region36: #{net_forward.3} parent=27 // pred_fallthru
        _
      // Predicated region
      $region37: #{net_forward.3} parent=27 // pred_check
        %p318 = pneg %p99
      $region38: #{net_forward.3} parent=27 // pred_check_branch
        %320 = sbr.rel (%p318) target = $region40
      $region39: #{net_forward.3} parent=27 // pred_region
        %s321 = smul.u32 16, %s23
        %p322 = scmp.lt.s32.totalorder %s321, 63
        %s323 = scalar_select %p322, %s321, 63
        %s324 = smul.addr %s323, 8
        %s325 = scalar_lea.vmem %s2, %s324
        %s326 = smul.u32 16, %s23
      $region40: #{net_forward.3} parent=27 // pred_fallthru
        _
      // Predicated region
      $region41: #{net_forward.3} parent=27 // pred_check
        %p327 = pneg %p125
      $region42: #{net_forward.3} parent=27 // pred_check_branch
        %329 = sbr.rel (%p327) target = $region44
      $region43: #{net_forward.3} parent=27 // pred_region
        %p330 = scmp.lt.s32.totalorder %s23, 3
        %s331 = scalar_select %p330, %s23, 3
        %s332 = scalar_lea.vmem %s3, %s331
      $region44: #{net_forward.3} parent=27 // pred_fallthru
        _
      // Predicated region
      $region45: #{net_forward.3} parent=27 // pred_check
        %p333 = pneg %p151
      $region46: #{net_forward.3} parent=27 // pred_check_branch
        %335 = sbr.rel (%p333) target = $region48
      $region47: #{net_forward.3} parent=27 // pred_region
        %s336 = smul.u32 4, %s22
        %p337 = scmp.lt.s32.totalorder %s336, 7
        %s338 = scalar_select %p337, %s336, 7
        %s339 = smul.addr %s338, 8
        %s340 = scalar_lea.vmem %s4, %s339
        %s341 = smul.u32 4, %s22
      $region48: #{net_forward.3} parent=27 // pred_fallthru
        _
      // Predicated region
      $region49: #{net_forward.3} parent=27 // pred_check
        %p342 = pneg %p177
      $region50: #{net_forward.3} parent=27 // pred_check_branch
        %344 = sbr.rel (%p342) target = $region52
      $region51: #{net_forward.3} parent=27 // pred_region
        %s345 = smul.u32 4, %s22
        %p346 = scmp.lt.s32.totalorder %s345, 7
        %s347 = scalar_select %p346, %s345, 7
        %s348 = smul.addr %s347, 8
        %s349 = scalar_lea.vmem %s5, %s348
        %s350 = smul.u32 4, %s22
      $region52: #{net_forward.3} parent=27 // pred_fallthru
        _
    $region28: #{net_forward.3} parent=5 // pred_fallthru
      _
    %p351 = scmp.le.s32.totalorder 1, %s15
    %p352 = scmp.lt.s32.totalorder %s15, 9
    %p353 = pnand %p351, %p352
    %p354 = pneg %p353
    // Predicated region
    $region53: #{net_forward.3} parent=5 // pred_check
      _
    $region54: #{net_forward.3} parent=5 // pred_check_branch
      %356 = sbr.rel (%p353) target = $region56
    $region55: #{net_forward.3} parent=5 // pred_region
      %s357 = ssub.s32 %s15, 1
      %s358 = smul.u32 16, %s25
      %p359 = scmp.lt.s32.totalorder %s358, 63
      %s360 = scalar_select %p359, %s358, 63
      %s361 = smul.addr %s360, 8
      %s362 = scalar_lea.vmem %s0, %s361
      %p363 = pneg %p53
      %p364 = pneg %p50
      %s365 = smul.u32 16, %s25
      %p366 = scmp.lt.s32.totalorder %s365, 63
      %s367 = scalar_select %p366, %s365, 63
      %s368 = smul.addr %s367, 8
      %s369 = scalar_lea.vmem %s1, %s368
      %p370 = pneg %p79
      %p371 = pneg %p76
      %s372 = smul.u32 16, %s25
      %p373 = scmp.lt.s32.totalorder %s372, 63
      %s374 = scalar_select %p373, %s372, 63
      %s375 = smul.addr %s374, 8
      %s376 = scalar_lea.vmem %s2, %s375
      %p377 = pneg %p105
      %p378 = pneg %p102
      %p379 = scmp.lt.s32.totalorder %s25, 3
      %s380 = scalar_select %p379, %s25, 3
      %s381 = scalar_lea.vmem %s3, %s380
      %p382 = pneg %p131
      %p383 = pneg %p128
      %s384 = smul.u32 4, %s24
      %p385 = scmp.lt.s32.totalorder %s384, 7
      %s386 = scalar_select %p385, %s384, 7
      %s387 = smul.addr %s386, 8
      %s388 = scalar_lea.vmem %s4, %s387
      %p389 = pneg %p157
      %p390 = pneg %p154
      %s391 = smul.u32 4, %s24
      %p392 = scmp.lt.s32.totalorder %s391, 7
      %s393 = scalar_select %p392, %s391, 7
      %s394 = smul.addr %s393, 8
      %s395 = scalar_lea.vmem %s5, %s394
      %p396 = pneg %p183
      %p397 = pneg %p180
      %p398 = pneg %p204
      %p399 = pneg %p201
      %p400 = pneg %p225
      %p401 = pneg %p222
      %p402 = pneg %p246
      %p403 = pneg %p243
      %p404 = pneg %p272
      %p405 = pneg %p269
      %s406 = smul.u32 4, %s24
      %p407 = scmp.lt.s32.totalorder %s406, 7
      %s408 = scalar_select %p407, %s406, 7
      %s409 = smul.addr %s408, 8
      %s410 = scalar_lea.vmem %s9, %s409
      %s411 = smul.u32 16, %s25
      %p412 = scmp.lt.s32.totalorder %s411, 63
      %s413 = scalar_select %p412, %s411, 63
      %s414 = smul.addr %s413, 8
      %s415 = scalar_lea.vmem %s0, %s414
      %s416 = smul.u32 16, %s25
      %s417 = smul.u32 16, %s25
      %p418 = scmp.lt.s32.totalorder %s417, 63
      %s419 = scalar_select %p418, %s417, 63
      %s420 = smul.addr %s419, 8
      %s421 = scalar_lea.vmem %s1, %s420
      %s422 = smul.u32 16, %s25
      %s423 = smul.u32 16, %s25
      %p424 = scmp.lt.s32.totalorder %s423, 63
      %s425 = scalar_select %p424, %s423, 63
      %s426 = smul.addr %s425, 8
      %s427 = scalar_lea.vmem %s2, %s426
      %s428 = smul.u32 16, %s25
      %p429 = scmp.lt.s32.totalorder %s25, 3
      %s430 = scalar_select %p429, %s25, 3
      %s431 = scalar_lea.vmem %s3, %s430
      %s432 = smul.u32 4, %s24
      %p433 = scmp.lt.s32.totalorder %s432, 7
      %s434 = scalar_select %p433, %s432, 7
      %s435 = smul.addr %s434, 8
      %s436 = scalar_lea.vmem %s4, %s435
      %s437 = smul.u32 4, %s24
      %s438 = smul.u32 4, %s24
      %p439 = scmp.lt.s32.totalorder %s438, 7
      %s440 = scalar_select %p439, %s438, 7
      %s441 = smul.addr %s440, 8
      %s442 = scalar_lea.vmem %s5, %s441
      %s443 = smul.u32 4, %s24
      %s444 = smul.u32 4, %s24
      %p445 = scmp.lt.s32.totalorder %s444, 7
      %s446 = scalar_select %p445, %s444, 7
      %s447 = smul.addr %s446, 8
      %s448 = scalar_lea.vmem %s9, %s447
      %s449 = smul.u32 4, %s24
      %p450 = scmp.eq.s32.totalorder %s25, 0
      // Predicated region
      $region57: #{net_forward.3} parent=55 // pred_check
        %p451 = pneg %p450
      $region58: #{net_forward.3} parent=55 // pred_check_branch
        %453 = sbr.rel (%p451) target = $region60
      $region59: #{net_forward.3} parent=55 // pred_region
        %454 = vst [vmem:[#allocation2] sm:$0xff] 0.0
        %455 = vst [vmem:[#allocation2 + $0x8] sm:$0xff] 0.0
        %456 = vst [vmem:[#allocation2 + $0x10] sm:$0xff] 0.0
        %457 = vst [vmem:[#allocation2 + $0x18] sm:$0xff] 0.0
      $region60: #{net_forward.3} parent=55 // pred_fallthru
        _
      %v458 = vld [vmem:[%s415] sm:$0xff]
      %v459 = vld [vmem:[%s415 + $0x8] sm:$0xff]
      %v460 = vld [vmem:[%s415 + $0x10] sm:$0xff]
      %v461 = vld [vmem:[%s415 + $0x18] sm:$0xff]
      %v462 = vld [vmem:[%s415 + $0x20] sm:$0xff]
      %v463 = vld [vmem:[%s415 + $0x28] sm:$0xff]
      %v464 = vld [vmem:[%s415 + $0x30] sm:$0xff]
      %v465 = vld [vmem:[%s415 + $0x38] sm:$0xff]
      %v466 = vld [vmem:[%s415 + $0x40] sm:$0xff]
      %v467 = vld [vmem:[%s415 + $0x48] sm:$0xff]
      %v468 = vld [vmem:[%s415 + $0x50] sm:$0xff]
      %v469 = vld [vmem:[%s415 + $0x58] sm:$0xff]
      %v470 = vld [vmem:[%s415 + $0x60] sm:$0xff]
      %v471 = vld [vmem:[%s415 + $0x68] sm:$0xff]
      %v472 = vld [vmem:[%s415 + $0x70] sm:$0xff]
      %v473 = vld [vmem:[%s415 + $0x78] sm:$0xff]
      %v474 = vpack.c.bf16 %v459, %v458
      %v475 = vpack.c.bf16 %v461, %v460
      %v476 = vpack.c.bf16 %v463, %v462
      %v477 = vpack.c.bf16 %v465, %v464
      %v478 = vpack.c.bf16 %v467, %v466
      %v479 = vpack.c.bf16 %v469, %v468
      %v480 = vpack.c.bf16 %v471, %v470
      %v481 = vpack.c.bf16 %v473, %v472
      %v482 = vld [vmem:[%s6] sm:$0xff]
      %v483 = vld [vmem:[%s6 + $0x8] sm:$0xff]
      %v484 = vld [vmem:[%s6 + $0x10] sm:$0xff]
      %v485 = vld [vmem:[%s6 + $0x18] sm:$0xff]
      %v486 = vld [vmem:[%s6 + $0x20] sm:$0xff]
      %v487 = vld [vmem:[%s6 + $0x28] sm:$0xff]
      %v488 = vld [vmem:[%s6 + $0x30] sm:$0xff]
      %v489 = vld [vmem:[%s6 + $0x38] sm:$0xff]
      %v490 = vld [vmem:[%s6 + $0x40] sm:$0xff]
      %v491 = vld [vmem:[%s6 + $0x48] sm:$0xff]
      %v492 = vld [vmem:[%s6 + $0x50] sm:$0xff]
      %v493 = vld [vmem:[%s6 + $0x58] sm:$0xff]
      %v494 = vld [vmem:[%s6 + $0x60] sm:$0xff]
      %v495 = vld [vmem:[%s6 + $0x68] sm:$0xff]
      %v496 = vld [vmem:[%s6 + $0x70] sm:$0xff]
      %v497 = vld [vmem:[%s6 + $0x78] sm:$0xff]
      %v498 = vld [vmem:[%s6 + $0x80] sm:$0xff]
      %v499 = vld [vmem:[%s6 + $0x88] sm:$0xff]
      %v500 = vld [vmem:[%s6 + $0x90] sm:$0xff]
      %v501 = vld [vmem:[%s6 + $0x98] sm:$0xff]
      %v502 = vld [vmem:[%s6 + $0xa0] sm:$0xff]
      %v503 = vld [vmem:[%s6 + $0xa8] sm:$0xff]
      %v504 = vld [vmem:[%s6 + $0xb0] sm:$0xff]
      %v505 = vld [vmem:[%s6 + $0xb8] sm:$0xff]
      %v506 = vld [vmem:[%s6 + $0xc0] sm:$0xff]
      %v507 = vld [vmem:[%s6 + $0xc8] sm:$0xff]
      %v508 = vld [vmem:[%s6 + $0xd0] sm:$0xff]
      %v509 = vld [vmem:[%s6 + $0xd8] sm:$0xff]
      %v510 = vld [vmem:[%s6 + $0xe0] sm:$0xff]
      %v511 = vld [vmem:[%s6 + $0xe8] sm:$0xff]
      %v512 = vld [vmem:[%s6 + $0xf0] sm:$0xff]
      %v513 = vld [vmem:[%s6 + $0xf8] sm:$0xff]
      %v514 = vld [vmem:[%s6 + $0x100] sm:$0xff]
      %v515 = vld [vmem:[%s6 + $0x108] sm:$0xff]
      %v516 = vld [vmem:[%s6 + $0x110] sm:$0xff]
      %v517 = vld [vmem:[%s6 + $0x118] sm:$0xff]
      %v518 = vld [vmem:[%s6 + $0x120] sm:$0xff]
      %v519 = vld [vmem:[%s6 + $0x128] sm:$0xff]
      %v520 = vld [vmem:[%s6 + $0x130] sm:$0xff]
      %v521 = vld [vmem:[%s6 + $0x138] sm:$0xff]
      %v522 = vld [vmem:[%s6 + $0x140] sm:$0xff]
      %v523 = vld [vmem:[%s6 + $0x148] sm:$0xff]
      %v524 = vld [vmem:[%s6 + $0x150] sm:$0xff]
      %v525 = vld [vmem:[%s6 + $0x158] sm:$0xff]
      %v526 = vld [vmem:[%s6 + $0x160] sm:$0xff]
      %v527 = vld [vmem:[%s6 + $0x168] sm:$0xff]
      %v528 = vld [vmem:[%s6 + $0x170] sm:$0xff]
      %v529 = vld [vmem:[%s6 + $0x178] sm:$0xff]
      %v530 = vld [vmem:[%s6 + $0x180] sm:$0xff]
      %v531 = vld [vmem:[%s6 + $0x188] sm:$0xff]
      %v532 = vld [vmem:[%s6 + $0x190] sm:$0xff]
      %v533 = vld [vmem:[%s6 + $0x198] sm:$0xff]
      %v534 = vld [vmem:[%s6 + $0x1a0] sm:$0xff]
      %v535 = vld [vmem:[%s6 + $0x1a8] sm:$0xff]
      %v536 = vld [vmem:[%s6 + $0x1b0] sm:$0xff]
      %v537 = vld [vmem:[%s6 + $0x1b8] sm:$0xff]
      %v538 = vld [vmem:[%s6 + $0x1c0] sm:$0xff]
      %v539 = vld [vmem:[%s6 + $0x1c8] sm:$0xff]
      %v540 = vld [vmem:[%s6 + $0x1d0] sm:$0xff]
      %v541 = vld [vmem:[%s6 + $0x1d8] sm:$0xff]
      %v542 = vld [vmem:[%s6 + $0x1e0] sm:$0xff]
      %v543 = vld [vmem:[%s6 + $0x1e8] sm:$0xff]
      %v544 = vld [vmem:[%s6 + $0x1f0] sm:$0xff]
      %v545 = vld [vmem:[%s6 + $0x1f8] sm:$0xff]
      %v546 = vld [vmem:[%s6 + $0x200] sm:$0xff]
      %v547 = vld [vmem:[%s6 + $0x208] sm:$0xff]
      %v548 = vld [vmem:[%s6 + $0x210] sm:$0xff]
      %v549 = vld [vmem:[%s6 + $0x218] sm:$0xff]
      %v550 = vld [vmem:[%s6 + $0x220] sm:$0xff]
      %v551 = vld [vmem:[%s6 + $0x228] sm:$0xff]
      %v552 = vld [vmem:[%s6 + $0x230] sm:$0xff]
      %v553 = vld [vmem:[%s6 + $0x238] sm:$0xff]
      %v554 = vld [vmem:[%s6 + $0x240] sm:$0xff]
      %v555 = vld [vmem:[%s6 + $0x248] sm:$0xff]
      %v556 = vld [vmem:[%s6 + $0x250] sm:$0xff]
      %v557 = vld [vmem:[%s6 + $0x258] sm:$0xff]
      %v558 = vld [vmem:[%s6 + $0x260] sm:$0xff]
      %v559 = vld [vmem:[%s6 + $0x268] sm:$0xff]
      %v560 = vld [vmem:[%s6 + $0x270] sm:$0xff]
      %v561 = vld [vmem:[%s6 + $0x278] sm:$0xff]
      %v562 = vpack.c.bf16 %v487, %v482
      %v563 = vpack.c.bf16 %v488, %v483
      %v564 = vpack.c.bf16 %v489, %v484
      %v565 = vpack.c.bf16 %v490, %v485
      %v566 = vpack.c.bf16 %v491, %v486
      %v567 = vpack.c.bf16 %v497, %v492
      %v568 = vpack.c.bf16 %v498, %v493
      %v569 = vpack.c.bf16 %v499, %v494
      %v570 = vpack.c.bf16 %v500, %v495
      %v571 = vpack.c.bf16 %v501, %v496
      %v572 = vpack.c.bf16 %v507, %v502
      %v573 = vpack.c.bf16 %v508, %v503
      %v574 = vpack.c.bf16 %v509, %v504
      %v575 = vpack.c.bf16 %v510, %v505
      %v576 = vpack.c.bf16 %v511, %v506
      %v577 = vpack.c.bf16 %v517, %v512
      %v578 = vpack.c.bf16 %v518, %v513
      %v579 = vpack.c.bf16 %v519, %v514
      %v580 = vpack.c.bf16 %v520, %v515
      %v581 = vpack.c.bf16 %v521, %v516
      %v582 = vpack.c.bf16 %v527, %v522
      %v583 = vpack.c.bf16 %v528, %v523
      %v584 = vpack.c.bf16 %v529, %v524
      %v585 = vpack.c.bf16 %v530, %v525
      %v586 = vpack.c.bf16 %v531, %v526
      %v587 = vpack.c.bf16 %v537, %v532
      %v588 = vpack.c.bf16 %v538, %v533
      %v589 = vpack.c.bf16 %v539, %v534
      %v590 = vpack.c.bf16 %v540, %v535
      %v591 = vpack.c.bf16 %v541, %v536
      %v592 = vpack.c.bf16 %v547, %v542
      %v593 = vpack.c.bf16 %v548, %v543
      %v594 = vpack.c.bf16 %v549, %v544
      %v595 = vpack.c.bf16 %v550, %v545
      %v596 = vpack.c.bf16 %v551, %v546
      %v597 = vpack.c.bf16 %v557, %v552
      %v598 = vpack.c.bf16 %v558, %v553
      %v599 = vpack.c.bf16 %v559, %v554
      %v600 = vpack.c.bf16 %v560, %v555
      %v601 = vpack.c.bf16 %v561, %v556
      %602 = vmatpush.bf16.msra.mxu0 %v597
      %603 = vmatpush.bf16.msra.mxu0 %v592
      %604 = vmatpush.bf16.msra.mxu0 %v587
      %605 = vmatpush.bf16.msra.mxu0 %v582
      %606 = vmatpush.bf16.msra.mxu0 %v577
      %607 = vmatpush.bf16.msra.mxu0 %v572
      %608 = vmatpush.bf16.msra.mxu0 %v567
      %609 = vmatpush.bf16.msra.mxu0 %v562
      %610 = vmatmul.bf16.gmra.mxu0 %v474
      %v611 = vpop.f32.mrf.mxu0
      %v612 = vadd.f32 0.0, %v611
      %v613 = vpop.f32.mrf.mxu0
      %v614 = vadd.f32 0.0, %v613
      %615 = vmatmul.bf16.gmra.mxu0 %v475
      %v616 = vpop.f32.mrf.mxu0
      %v617 = vadd.f32 0.0, %v616
      %v618 = vpop.f32.mrf.mxu0
      %v619 = vadd.f32 0.0, %v618
      %620 = vmatmul.bf16.gmra.mxu0 %v476
      %v621 = vpop.f32.mrf.mxu0
      %v622 = vadd.f32 0.0, %v621
      %v623 = vpop.f32.mrf.mxu0
      %v624 = vadd.f32 0.0, %v623
      %625 = vmatmul.bf16.gmra.mxu0 %v477
      %v626 = vpop.f32.mrf.mxu0
      %v627 = vadd.f32 0.0, %v626
      %v628 = vpop.f32.mrf.mxu0
      %v629 = vadd.f32 0.0, %v628
      %630 = vmatmul.bf16.gmra.mxu0 %v478
      %v631 = vpop.f32.mrf.mxu0
      %v632 = vadd.f32 0.0, %v631
      %v633 = vpop.f32.mrf.mxu0
      %v634 = vadd.f32 0.0, %v633
      %635 = vmatmul.bf16.gmra.mxu0 %v479
      %v636 = vpop.f32.mrf.mxu0
      %v637 = vadd.f32 0.0, %v636
      %v638 = vpop.f32.mrf.mxu0
      %v639 = vadd.f32 0.0, %v638
      %640 = vmatmul.bf16.gmra.mxu0 %v480
      %v641 = vpop.f32.mrf.mxu0
      %v642 = vadd.f32 0.0, %v641
      %v643 = vpop.f32.mrf.mxu0
      %v644 = vadd.f32 0.0, %v643
      %645 = vmatmul.bf16.gmra.mxu0 %v481
      %v646 = vpop.f32.mrf.mxu0
      %v647 = vadd.f32 0.0, %v646
      %v648 = vpop.f32.mrf.mxu0
      %v649 = vadd.f32 0.0, %v648
      %650 = vdwg.mxu0
      %651 = vmatpush.bf16.msra.mxu0 %v598
      %652 = vmatpush.bf16.msra.mxu0 %v593
      %653 = vmatpush.bf16.msra.mxu0 %v588
      %654 = vmatpush.bf16.msra.mxu0 %v583
      %655 = vmatpush.bf16.msra.mxu0 %v578
      %656 = vmatpush.bf16.msra.mxu0 %v573
      %657 = vmatpush.bf16.msra.mxu0 %v568
      %658 = vmatpush.bf16.msra.mxu0 %v563
      %659 = vmatmul.bf16.gmra.mxu0 %v474
      %v660 = vpop.f32.mrf.mxu0
      %v661 = vadd.f32 0.0, %v660
      %v662 = vpop.f32.mrf.mxu0
      %v663 = vadd.f32 0.0, %v662
      %664 = vmatmul.bf16.gmra.mxu0 %v475
      %v665 = vpop.f32.mrf.mxu0
      %v666 = vadd.f32 0.0, %v665
      %v667 = vpop.f32.mrf.mxu0
      %v668 = vadd.f32 0.0, %v667
      %669 = vmatmul.bf16.gmra.mxu0 %v476
      %v670 = vpop.f32.mrf.mxu0
      %v671 = vadd.f32 0.0, %v670
      %v672 = vpop.f32.mrf.mxu0
      %v673 = vadd.f32 0.0, %v672
      %674 = vmatmul.bf16.gmra.mxu0 %v477
      %v675 = vpop.f32.mrf.mxu0
      %v676 = vadd.f32 0.0, %v675
      %v677 = vpop.f32.mrf.mxu0
      %v678 = vadd.f32 0.0, %v677
      %679 = vmatmul.bf16.gmra.mxu0 %v478
      %v680 = vpop.f32.mrf.mxu0
      %v681 = vadd.f32 0.0, %v680
      %v682 = vpop.f32.mrf.mxu0
      %v683 = vadd.f32 0.0, %v682
      %684 = vmatmul.bf16.gmra.mxu0 %v479
      %v685 = vpop.f32.mrf.mxu0
      %v686 = vadd.f32 0.0, %v685
      %v687 = vpop.f32.mrf.mxu0
      %v688 = vadd.f32 0.0, %v687
      %689 = vmatmul.bf16.gmra.mxu0 %v480
      %v690 = vpop.f32.mrf.mxu0
      %v691 = vadd.f32 0.0, %v690
      %v692 = vpop.f32.mrf.mxu0
      %v693 = vadd.f32 0.0, %v692
      %694 = vmatmul.bf16.gmra.mxu0 %v481
      %v695 = vpop.f32.mrf.mxu0
      %v696 = vadd.f32 0.0, %v695
      %v697 = vpop.f32.mrf.mxu0
      %v698 = vadd.f32 0.0, %v697
      %699 = vdwg.mxu0
      %700 = vmatpush.bf16.msra.mxu0 %v599
      %701 = vmatpush.bf16.msra.mxu0 %v594
      %702 = vmatpush.bf16.msra.mxu0 %v589
      %703 = vmatpush.bf16.msra.mxu0 %v584
      %704 = vmatpush.bf16.msra.mxu0 %v579
      %705 = vmatpush.bf16.msra.mxu0 %v574
      %706 = vmatpush.bf16.msra.mxu0 %v569
      %707 = vmatpush.bf16.msra.mxu0 %v564
      %708 = vmatmul.bf16.gmra.mxu0 %v474
      %v709 = vpop.f32.mrf.mxu0
      %v710 = vadd.f32 0.0, %v709
      %v711 = vpop.f32.mrf.mxu0
      %v712 = vadd.f32 0.0, %v711
      %713 = vmatmul.bf16.gmra.mxu0 %v475
      %v714 = vpop.f32.mrf.mxu0
      %v715 = vadd.f32 0.0, %v714
      %v716 = vpop.f32.mrf.mxu0
      %v717 = vadd.f32 0.0, %v716
      %718 = vmatmul.bf16.gmra.mxu0 %v476
      %v719 = vpop.f32.mrf.mxu0
      %v720 = vadd.f32 0.0, %v719
      %v721 = vpop.f32.mrf.mxu0
      %v722 = vadd.f32 0.0, %v721
      %723 = vmatmul.bf16.gmra.mxu0 %v477
      %v724 = vpop.f32.mrf.mxu0
      %v725 = vadd.f32 0.0, %v724
      %v726 = vpop.f32.mrf.mxu0
      %v727 = vadd.f32 0.0, %v726
      %728 = vmatmul.bf16.gmra.mxu0 %v478
      %v729 = vpop.f32.mrf.mxu0
      %v730 = vadd.f32 0.0, %v729
      %v731 = vpop.f32.mrf.mxu0
      %v732 = vadd.f32 0.0, %v731
      %733 = vmatmul.bf16.gmra.mxu0 %v479
      %v734 = vpop.f32.mrf.mxu0
      %v735 = vadd.f32 0.0, %v734
      %v736 = vpop.f32.mrf.mxu0
      %v737 = vadd.f32 0.0, %v736
      %738 = vmatmul.bf16.gmra.mxu0 %v480
      %v739 = vpop.f32.mrf.mxu0
      %v740 = vadd.f32 0.0, %v739
      %v741 = vpop.f32.mrf.mxu0
      %v742 = vadd.f32 0.0, %v741
      %743 = vmatmul.bf16.gmra.mxu0 %v481
      %v744 = vpop.f32.mrf.mxu0
      %v745 = vadd.f32 0.0, %v744
      %v746 = vpop.f32.mrf.mxu0
      %v747 = vadd.f32 0.0, %v746
      %748 = vdwg.mxu0
      %749 = vmatpush.bf16.msra.mxu0 %v600
      %750 = vmatpush.bf16.msra.mxu0 %v595
      %751 = vmatpush.bf16.msra.mxu0 %v590
      %752 = vmatpush.bf16.msra.mxu0 %v585
      %753 = vmatpush.bf16.msra.mxu0 %v580
      %754 = vmatpush.bf16.msra.mxu0 %v575
      %755 = vmatpush.bf16.msra.mxu0 %v570
      %756 = vmatpush.bf16.msra.mxu0 %v565
      %757 = vmatmul.bf16.gmra.mxu0 %v474
      %v758 = vpop.f32.mrf.mxu0
      %v759 = vadd.f32 0.0, %v758
      %v760 = vpop.f32.mrf.mxu0
      %v761 = vadd.f32 0.0, %v760
      %762 = vmatmul.bf16.gmra.mxu0 %v475
      %v763 = vpop.f32.mrf.mxu0
      %v764 = vadd.f32 0.0, %v763
      %v765 = vpop.f32.mrf.mxu0
      %v766 = vadd.f32 0.0, %v765
      %767 = vmatmul.bf16.gmra.mxu0 %v476
      %v768 = vpop.f32.mrf.mxu0
      %v769 = vadd.f32 0.0, %v768
      %v770 = vpop.f32.mrf.mxu0
      %v771 = vadd.f32 0.0, %v770
      %772 = vmatmul.bf16.gmra.mxu0 %v477
      %v773 = vpop.f32.mrf.mxu0
      %v774 = vadd.f32 0.0, %v773
      %v775 = vpop.f32.mrf.mxu0
      %v776 = vadd.f32 0.0, %v775
      %777 = vmatmul.bf16.gmra.mxu0 %v478
      %v778 = vpop.f32.mrf.mxu0
      %v779 = vadd.f32 0.0, %v778
      %v780 = vpop.f32.mrf.mxu0
      %v781 = vadd.f32 0.0, %v780
      %782 = vmatmul.bf16.gmra.mxu0 %v479
      %v783 = vpop.f32.mrf.mxu0
      %v784 = vadd.f32 0.0, %v783
      %v785 = vpop.f32.mrf.mxu0
      %v786 = vadd.f32 0.0, %v785
      %787 = vmatmul.bf16.gmra.mxu0 %v480
      %v788 = vpop.f32.mrf.mxu0
      %v789 = vadd.f32 0.0, %v788
      %v790 = vpop.f32.mrf.mxu0
      %v791 = vadd.f32 0.0, %v790
      %792 = vmatmul.bf16.gmra.mxu0 %v481
      %v793 = vpop.f32.mrf.mxu0
      %v794 = vadd.f32 0.0, %v793
      %v795 = vpop.f32.mrf.mxu0
      %v796 = vadd.f32 0.0, %v795
      %797 = vdwg.mxu0
      %798 = vmatpush.bf16.msra.mxu0 %v601
      %799 = vmatpush.bf16.msra.mxu0 %v596
      %800 = vmatpush.bf16.msra.mxu0 %v591
      %801 = vmatpush.bf16.msra.mxu0 %v586
      %802 = vmatpush.bf16.msra.mxu0 %v581
      %803 = vmatpush.bf16.msra.mxu0 %v576
      %804 = vmatpush.bf16.msra.mxu0 %v571
      %805 = vmatpush.bf16.msra.mxu0 %v566
      %806 = vmatmul.bf16.gmra.mxu0 %v474
      %v807 = vpop.f32.mrf.mxu0
      %v808 = vadd.f32 0.0, %v807
      %v809 = vpop.f32.mrf.mxu0
      %v810 = vadd.f32 0.0, %v809
      %811 = vmatmul.bf16.gmra.mxu0 %v475
      %v812 = vpop.f32.mrf.mxu0
      %v813 = vadd.f32 0.0, %v812
      %v814 = vpop.f32.mrf.mxu0
      %v815 = vadd.f32 0.0, %v814
      %816 = vmatmul.bf16.gmra.mxu0 %v476
      %v817 = vpop.f32.mrf.mxu0
      %v818 = vadd.f32 0.0, %v817
      %v819 = vpop.f32.mrf.mxu0
      %v820 = vadd.f32 0.0, %v819
      %821 = vmatmul.bf16.gmra.mxu0 %v477
      %v822 = vpop.f32.mrf.mxu0
      %v823 = vadd.f32 0.0, %v822
      %v824 = vpop.f32.mrf.mxu0
      %v825 = vadd.f32 0.0, %v824
      %826 = vmatmul.bf16.gmra.mxu0 %v478
      %v827 = vpop.f32.mrf.mxu0
      %v828 = vadd.f32 0.0, %v827
      %v829 = vpop.f32.mrf.mxu0
      %v830 = vadd.f32 0.0, %v829
      %831 = vmatmul.bf16.gmra.mxu0 %v479
      %v832 = vpop.f32.mrf.mxu0
      %v833 = vadd.f32 0.0, %v832
      %v834 = vpop.f32.mrf.mxu0
      %v835 = vadd.f32 0.0, %v834
      %836 = vmatmul.bf16.gmra.mxu0 %v480
      %v837 = vpop.f32.mrf.mxu0
      %v838 = vadd.f32 0.0, %v837
      %v839 = vpop.f32.mrf.mxu0
      %v840 = vadd.f32 0.0, %v839
      %841 = vmatmul.bf16.gmra.mxu0 %v481
      %v842 = vpop.f32.mrf.mxu0
      %v843 = vadd.f32 0.0, %v842
      %v844 = vpop.f32.mrf.mxu0
      %v845 = vadd.f32 0.0, %v844
      %846 = vdwg.mxu0
      %v847 = vld [vmem:[%s421] sm:$0xff]
      %v848 = vld [vmem:[%s421 + $0x8] sm:$0xff]
      %v849 = vld [vmem:[%s421 + $0x10] sm:$0xff]
      %v850 = vld [vmem:[%s421 + $0x18] sm:$0xff]
      %v851 = vld [vmem:[%s421 + $0x20] sm:$0xff]
      %v852 = vld [vmem:[%s421 + $0x28] sm:$0xff]
      %v853 = vld [vmem:[%s421 + $0x30] sm:$0xff]
      %v854 = vld [vmem:[%s421 + $0x38] sm:$0xff]
      %v855 = vld [vmem:[%s421 + $0x40] sm:$0xff]
      %v856 = vld [vmem:[%s421 + $0x48] sm:$0xff]
      %v857 = vld [vmem:[%s421 + $0x50] sm:$0xff]
      %v858 = vld [vmem:[%s421 + $0x58] sm:$0xff]
      %v859 = vld [vmem:[%s421 + $0x60] sm:$0xff]
      %v860 = vld [vmem:[%s421 + $0x68] sm:$0xff]
      %v861 = vld [vmem:[%s421 + $0x70] sm:$0xff]
      %v862 = vld [vmem:[%s421 + $0x78] sm:$0xff]
      %v863 = vld [vmem:[%s427] sm:$0xff]
      %v864 = vld [vmem:[%s427 + $0x8] sm:$0xff]
      %v865 = vld [vmem:[%s427 + $0x10] sm:$0xff]
      %v866 = vld [vmem:[%s427 + $0x18] sm:$0xff]
      %v867 = vld [vmem:[%s427 + $0x20] sm:$0xff]
      %v868 = vld [vmem:[%s427 + $0x28] sm:$0xff]
      %v869 = vld [vmem:[%s427 + $0x30] sm:$0xff]
      %v870 = vld [vmem:[%s427 + $0x38] sm:$0xff]
      %v871 = vld [vmem:[%s427 + $0x40] sm:$0xff]
      %v872 = vld [vmem:[%s427 + $0x48] sm:$0xff]
      %v873 = vld [vmem:[%s427 + $0x50] sm:$0xff]
      %v874 = vld [vmem:[%s427 + $0x58] sm:$0xff]
      %v875 = vld [vmem:[%s427 + $0x60] sm:$0xff]
      %v876 = vld [vmem:[%s427 + $0x68] sm:$0xff]
      %v877 = vld [vmem:[%s427 + $0x70] sm:$0xff]
      %v878 = vld [vmem:[%s427 + $0x78] sm:$0xff]
      %880 = vset.pattern.permute.xlu0 0
      %881 = vperm.xlu0 %880, %v847
      %v882 = vpop.permute.xlu0 %881
      %885 = vset.pattern.permute.xlu0 0
      %886 = vperm.xlu0 %885, %v848
      %v887 = vpop.permute.xlu0 %886
      %890 = vset.pattern.permute.xlu0 0
      %891 = vperm.xlu0 %890, %v849
      %v892 = vpop.permute.xlu0 %891
      %895 = vset.pattern.permute.xlu0 0
      %896 = vperm.xlu0 %895, %v850
      %v897 = vpop.permute.xlu0 %896
      %900 = vset.pattern.permute.xlu0 0
      %901 = vperm.xlu0 %900, %v851
      %v902 = vpop.permute.xlu0 %901
      %905 = vset.pattern.permute.xlu0 0
      %906 = vperm.xlu0 %905, %v852
      %v907 = vpop.permute.xlu0 %906
      %910 = vset.pattern.permute.xlu0 0
      %911 = vperm.xlu0 %910, %v853
      %v912 = vpop.permute.xlu0 %911
      %915 = vset.pattern.permute.xlu0 0
      %916 = vperm.xlu0 %915, %v854
      %v917 = vpop.permute.xlu0 %916
      %920 = vset.pattern.permute.xlu0 0
      %921 = vperm.xlu0 %920, %v855
      %v922 = vpop.permute.xlu0 %921
      %925 = vset.pattern.permute.xlu0 0
      %926 = vperm.xlu0 %925, %v856
      %v927 = vpop.permute.xlu0 %926
      %930 = vset.pattern.permute.xlu0 0
      %931 = vperm.xlu0 %930, %v857
      %v932 = vpop.permute.xlu0 %931
      %935 = vset.pattern.permute.xlu0 0
      %936 = vperm.xlu0 %935, %v858
      %v937 = vpop.permute.xlu0 %936
      %940 = vset.pattern.permute.xlu0 0
      %941 = vperm.xlu0 %940, %v859
      %v942 = vpop.permute.xlu0 %941
      %945 = vset.pattern.permute.xlu0 0
      %946 = vperm.xlu0 %945, %v860
      %v947 = vpop.permute.xlu0 %946
      %950 = vset.pattern.permute.xlu0 0
      %951 = vperm.xlu0 %950, %v861
      %v952 = vpop.permute.xlu0 %951
      %955 = vset.pattern.permute.xlu0 0
      %956 = vperm.xlu0 %955, %v862
      %v957 = vpop.permute.xlu0 %956
      %v959 = vmul.f32 %v882, %v612
      %v960 = vmul.f32 %v887, %v614
      %v961 = vmul.f32 %v892, %v617
      %v962 = vmul.f32 %v897, %v619
      %v963 = vmul.f32 %v902, %v622
      %v964 = vmul.f32 %v907, %v624
      %v965 = vmul.f32 %v912, %v627
      %v966 = vmul.f32 %v917, %v629
      %v967 = vmul.f32 %v922, %v632
      %v968 = vmul.f32 %v927, %v634
      %v969 = vmul.f32 %v932, %v637
      %v970 = vmul.f32 %v937, %v639
      %v971 = vmul.f32 %v942, %v642
      %v972 = vmul.f32 %v947, %v644
      %v973 = vmul.f32 %v952, %v647
      %v974 = vmul.f32 %v957, %v649
      %v975 = vadd.f32 %v863, %v959
      %v976 = vadd.f32 %v864, %v960
      %v977 = vadd.f32 %v865, %v961
      %v978 = vadd.f32 %v866, %v962
      %v979 = vadd.f32 %v867, %v963
      %v980 = vadd.f32 %v868, %v964
      %v981 = vadd.f32 %v869, %v965
      %v982 = vadd.f32 %v870, %v966
      %v983 = vadd.f32 %v871, %v967
      %v984 = vadd.f32 %v872, %v968
      %v985 = vadd.f32 %v873, %v969
      %v986 = vadd.f32 %v874, %v970
      %v987 = vadd.f32 %v875, %v971
      %v988 = vadd.f32 %v876, %v972
      %v989 = vadd.f32 %v877, %v973
      %v990 = vadd.f32 %v878, %v974
      %991 = vset.pattern.permute.xlu0 1
      %992 = vperm.xlu0 %991, %v847
      %v993 = vpop.permute.xlu0 %992
      %995 = vset.pattern.permute.xlu0 1
      %996 = vperm.xlu0 %995, %v848
      %v997 = vpop.permute.xlu0 %996
      %999 = vset.pattern.permute.xlu0 1
      %1000 = vperm.xlu0 %999, %v849
      %v1001 = vpop.permute.xlu0 %1000
      %1003 = vset.pattern.permute.xlu0 1
      %1004 = vperm.xlu0 %1003, %v850
      %v1005 = vpop.permute.xlu0 %1004
      %1007 = vset.pattern.permute.xlu0 1
      %1008 = vperm.xlu0 %1007, %v851
      %v1009 = vpop.permute.xlu0 %1008
      %1011 = vset.pattern.permute.xlu0 1
      %1012 = vperm.xlu0 %1011, %v852
      %v1013 = vpop.permute.xlu0 %1012
      %1015 = vset.pattern.permute.xlu0 1
      %1016 = vperm.xlu0 %1015, %v853
      %v1017 = vpop.permute.xlu0 %1016
      %1019 = vset.pattern.permute.xlu0 1
      %1020 = vperm.xlu0 %1019, %v854
      %v1021 = vpop.permute.xlu0 %1020
      %1023 = vset.pattern.permute.xlu0 1
      %1024 = vperm.xlu0 %1023, %v855
      %v1025 = vpop.permute.xlu0 %1024
      %1027 = vset.pattern.permute.xlu0 1
      %1028 = vperm.xlu0 %1027, %v856
      %v1029 = vpop.permute.xlu0 %1028
      %1031 = vset.pattern.permute.xlu0 1
      %1032 = vperm.xlu0 %1031, %v857
      %v1033 = vpop.permute.xlu0 %1032
      %1035 = vset.pattern.permute.xlu0 1
      %1036 = vperm.xlu0 %1035, %v858
      %v1037 = vpop.permute.xlu0 %1036
      %1039 = vset.pattern.permute.xlu0 1
      %1040 = vperm.xlu0 %1039, %v859
      %v1041 = vpop.permute.xlu0 %1040
      %1043 = vset.pattern.permute.xlu0 1
      %1044 = vperm.xlu0 %1043, %v860
      %v1045 = vpop.permute.xlu0 %1044
      %1047 = vset.pattern.permute.xlu0 1
      %1048 = vperm.xlu0 %1047, %v861
      %v1049 = vpop.permute.xlu0 %1048
      %1051 = vset.pattern.permute.xlu0 1
      %1052 = vperm.xlu0 %1051, %v862
      %v1053 = vpop.permute.xlu0 %1052
      %v1055 = vmul.f32 %v993, %v661
      %v1056 = vmul.f32 %v997, %v663
      %v1057 = vmul.f32 %v1001, %v666
      %v1058 = vmul.f32 %v1005, %v668
      %v1059 = vmul.f32 %v1009, %v671
      %v1060 = vmul.f32 %v1013, %v673
      %v1061 = vmul.f32 %v1017, %v676
      %v1062 = vmul.f32 %v1021, %v678
      %v1063 = vmul.f32 %v1025, %v681
      %v1064 = vmul.f32 %v1029, %v683
      %v1065 = vmul.f32 %v1033, %v686
      %v1066 = vmul.f32 %v1037, %v688
      %v1067 = vmul.f32 %v1041, %v691
      %v1068 = vmul.f32 %v1045, %v693
      %v1069 = vmul.f32 %v1049, %v696
      %v1070 = vmul.f32 %v1053, %v698
      %v1071 = vadd.f32 %v975, %v1055
      %v1072 = vadd.f32 %v976, %v1056
      %v1073 = vadd.f32 %v977, %v1057
      %v1074 = vadd.f32 %v978, %v1058
      %v1075 = vadd.f32 %v979, %v1059
      %v1076 = vadd.f32 %v980, %v1060
      %v1077 = vadd.f32 %v981, %v1061
      %v1078 = vadd.f32 %v982, %v1062
      %v1079 = vadd.f32 %v983, %v1063
      %v1080 = vadd.f32 %v984, %v1064
      %v1081 = vadd.f32 %v985, %v1065
      %v1082 = vadd.f32 %v986, %v1066
      %v1083 = vadd.f32 %v987, %v1067
      %v1084 = vadd.f32 %v988, %v1068
      %v1085 = vadd.f32 %v989, %v1069
      %v1086 = vadd.f32 %v990, %v1070
      %1087 = vset.pattern.permute.xlu0 2
      %1088 = vperm.xlu0 %1087, %v847
      %v1089 = vpop.permute.xlu0 %1088
      %1091 = vset.pattern.permute.xlu0 2
      %1092 = vperm.xlu0 %1091, %v848
      %v1093 = vpop.permute.xlu0 %1092
      %1095 = vset.pattern.permute.xlu0 2
      %1096 = vperm.xlu0 %1095, %v849
      %v1097 = vpop.permute.xlu0 %1096
      %1099 = vset.pattern.permute.xlu0 2
      %1100 = vperm.xlu0 %1099, %v850
      %v1101 = vpop.permute.xlu0 %1100
      %1103 = vset.pattern.permute.xlu0 2
      %1104 = vperm.xlu0 %1103, %v851
      %v1105 = vpop.permute.xlu0 %1104
      %1107 = vset.pattern.permute.xlu0 2
      %1108 = vperm.xlu0 %1107, %v852
      %v1109 = vpop.permute.xlu0 %1108
      %1111 = vset.pattern.permute.xlu0 2
      %1112 = vperm.xlu0 %1111, %v853
      %v1113 = vpop.permute.xlu0 %1112
      %1115 = vset.pattern.permute.xlu0 2
      %1116 = vperm.xlu0 %1115, %v854
      %v1117 = vpop.permute.xlu0 %1116
      %1119 = vset.pattern.permute.xlu0 2
      %1120 = vperm.xlu0 %1119, %v855
      %v1121 = vpop.permute.xlu0 %1120
      %1123 = vset.pattern.permute.xlu0 2
      %1124 = vperm.xlu0 %1123, %v856
      %v1125 = vpop.permute.xlu0 %1124
      %1127 = vset.pattern.permute.xlu0 2
      %1128 = vperm.xlu0 %1127, %v857
      %v1129 = vpop.permute.xlu0 %1128
      %1131 = vset.pattern.permute.xlu0 2
      %1132 = vperm.xlu0 %1131, %v858
      %v1133 = vpop.permute.xlu0 %1132
      %1135 = vset.pattern.permute.xlu0 2
      %1136 = vperm.xlu0 %1135, %v859
      %v1137 = vpop.permute.xlu0 %1136
      %1139 = vset.pattern.permute.xlu0 2
      %1140 = vperm.xlu0 %1139, %v860
      %v1141 = vpop.permute.xlu0 %1140
      %1143 = vset.pattern.permute.xlu0 2
      %1144 = vperm.xlu0 %1143, %v861
      %v1145 = vpop.permute.xlu0 %1144
      %1147 = vset.pattern.permute.xlu0 2
      %1148 = vperm.xlu0 %1147, %v862
      %v1149 = vpop.permute.xlu0 %1148
      %v1151 = vmul.f32 %v1089, %v710
      %v1152 = vmul.f32 %v1093, %v712
      %v1153 = vmul.f32 %v1097, %v715
      %v1154 = vmul.f32 %v1101, %v717
      %v1155 = vmul.f32 %v1105, %v720
      %v1156 = vmul.f32 %v1109, %v722
      %v1157 = vmul.f32 %v1113, %v725
      %v1158 = vmul.f32 %v1117, %v727
      %v1159 = vmul.f32 %v1121, %v730
      %v1160 = vmul.f32 %v1125, %v732
      %v1161 = vmul.f32 %v1129, %v735
      %v1162 = vmul.f32 %v1133, %v737
      %v1163 = vmul.f32 %v1137, %v740
      %v1164 = vmul.f32 %v1141, %v742
      %v1165 = vmul.f32 %v1145, %v745
      %v1166 = vmul.f32 %v1149, %v747
      %v1167 = vadd.f32 %v1071, %v1151
      %v1168 = vadd.f32 %v1072, %v1152
      %v1169 = vadd.f32 %v1073, %v1153
      %v1170 = vadd.f32 %v1074, %v1154
      %v1171 = vadd.f32 %v1075, %v1155
      %v1172 = vadd.f32 %v1076, %v1156
      %v1173 = vadd.f32 %v1077, %v1157
      %v1174 = vadd.f32 %v1078, %v1158
      %v1175 = vadd.f32 %v1079, %v1159
      %v1176 = vadd.f32 %v1080, %v1160
      %v1177 = vadd.f32 %v1081, %v1161
      %v1178 = vadd.f32 %v1082, %v1162
      %v1179 = vadd.f32 %v1083, %v1163
      %v1180 = vadd.f32 %v1084, %v1164
      %v1181 = vadd.f32 %v1085, %v1165
      %v1182 = vadd.f32 %v1086, %v1166
      %1183 = vset.pattern.permute.xlu0 3
      %1184 = vperm.xlu0 %1183, %v847
      %v1185 = vpop.permute.xlu0 %1184
      %1187 = vset.pattern.permute.xlu0 3
      %1188 = vperm.xlu0 %1187, %v848
      %v1189 = vpop.permute.xlu0 %1188
      %1191 = vset.pattern.permute.xlu0 3
      %1192 = vperm.xlu0 %1191, %v849
      %v1193 = vpop.permute.xlu0 %1192
      %1195 = vset.pattern.permute.xlu0 3
      %1196 = vperm.xlu0 %1195, %v850
      %v1197 = vpop.permute.xlu0 %1196
      %1199 = vset.pattern.permute.xlu0 3
      %1200 = vperm.xlu0 %1199, %v851
      %v1201 = vpop.permute.xlu0 %1200
      %1203 = vset.pattern.permute.xlu0 3
      %1204 = vperm.xlu0 %1203, %v852
      %v1205 = vpop.permute.xlu0 %1204
      %1207 = vset.pattern.permute.xlu0 3
      %1208 = vperm.xlu0 %1207, %v853
      %v1209 = vpop.permute.xlu0 %1208
      %1211 = vset.pattern.permute.xlu0 3
      %1212 = vperm.xlu0 %1211, %v854
      %v1213 = vpop.permute.xlu0 %1212
      %1215 = vset.pattern.permute.xlu0 3
      %1216 = vperm.xlu0 %1215, %v855
      %v1217 = vpop.permute.xlu0 %1216
      %1219 = vset.pattern.permute.xlu0 3
      %1220 = vperm.xlu0 %1219, %v856
      %v1221 = vpop.permute.xlu0 %1220
      %1223 = vset.pattern.permute.xlu0 3
      %1224 = vperm.xlu0 %1223, %v857
      %v1225 = vpop.permute.xlu0 %1224
      %1227 = vset.pattern.permute.xlu0 3
      %1228 = vperm.xlu0 %1227, %v858
      %v1229 = vpop.permute.xlu0 %1228
      %1231 = vset.pattern.permute.xlu0 3
      %1232 = vperm.xlu0 %1231, %v859
      %v1233 = vpop.permute.xlu0 %1232
      %1235 = vset.pattern.permute.xlu0 3
      %1236 = vperm.xlu0 %1235, %v860
      %v1237 = vpop.permute.xlu0 %1236
      %1239 = vset.pattern.permute.xlu0 3
      %1240 = vperm.xlu0 %1239, %v861
      %v1241 = vpop.permute.xlu0 %1240
      %1243 = vset.pattern.permute.xlu0 3
      %1244 = vperm.xlu0 %1243, %v862
      %v1245 = vpop.permute.xlu0 %1244
      %v1247 = vmul.f32 %v1185, %v759
      %v1248 = vmul.f32 %v1189, %v761
      %v1249 = vmul.f32 %v1193, %v764
      %v1250 = vmul.f32 %v1197, %v766
      %v1251 = vmul.f32 %v1201, %v769
      %v1252 = vmul.f32 %v1205, %v771
      %v1253 = vmul.f32 %v1209, %v774
      %v1254 = vmul.f32 %v1213, %v776
      %v1255 = vmul.f32 %v1217, %v779
      %v1256 = vmul.f32 %v1221, %v781
      %v1257 = vmul.f32 %v1225, %v784
      %v1258 = vmul.f32 %v1229, %v786
      %v1259 = vmul.f32 %v1233, %v789
      %v1260 = vmul.f32 %v1237, %v791
      %v1261 = vmul.f32 %v1241, %v794
      %v1262 = vmul.f32 %v1245, %v796
      %v1263 = vadd.f32 %v1167, %v1247
      %v1264 = vadd.f32 %v1168, %v1248
      %v1265 = vadd.f32 %v1169, %v1249
      %v1266 = vadd.f32 %v1170, %v1250
      %v1267 = vadd.f32 %v1171, %v1251
      %v1268 = vadd.f32 %v1172, %v1252
      %v1269 = vadd.f32 %v1173, %v1253
      %v1270 = vadd.f32 %v1174, %v1254
      %v1271 = vadd.f32 %v1175, %v1255
      %v1272 = vadd.f32 %v1176, %v1256
      %v1273 = vadd.f32 %v1177, %v1257
      %v1274 = vadd.f32 %v1178, %v1258
      %v1275 = vadd.f32 %v1179, %v1259
      %v1276 = vadd.f32 %v1180, %v1260
      %v1277 = vadd.f32 %v1181, %v1261
      %v1278 = vadd.f32 %v1182, %v1262
      %1279 = vset.pattern.permute.xlu0 4
      %1280 = vperm.xlu0 %1279, %v847
      %v1281 = vpop.permute.xlu0 %1280
      %1283 = vset.pattern.permute.xlu0 4
      %1284 = vperm.xlu0 %1283, %v848
      %v1285 = vpop.permute.xlu0 %1284
      %1287 = vset.pattern.permute.xlu0 4
      %1288 = vperm.xlu0 %1287, %v849
      %v1289 = vpop.permute.xlu0 %1288
      %1291 = vset.pattern.permute.xlu0 4
      %1292 = vperm.xlu0 %1291, %v850
      %v1293 = vpop.permute.xlu0 %1292
      %1295 = vset.pattern.permute.xlu0 4
      %1296 = vperm.xlu0 %1295, %v851
      %v1297 = vpop.permute.xlu0 %1296
      %1299 = vset.pattern.permute.xlu0 4
      %1300 = vperm.xlu0 %1299, %v852
      %v1301 = vpop.permute.xlu0 %1300
      %1303 = vset.pattern.permute.xlu0 4
      %1304 = vperm.xlu0 %1303, %v853
      %v1305 = vpop.permute.xlu0 %1304
      %1307 = vset.pattern.permute.xlu0 4
      %1308 = vperm.xlu0 %1307, %v854
      %v1309 = vpop.permute.xlu0 %1308
      %1311 = vset.pattern.permute.xlu0 4
      %1312 = vperm.xlu0 %1311, %v855
      %v1313 = vpop.permute.xlu0 %1312
      %1315 = vset.pattern.permute.xlu0 4
      %1316 = vperm.xlu0 %1315, %v856
      %v1317 = vpop.permute.xlu0 %1316
      %1319 = vset.pattern.permute.xlu0 4
      %1320 = vperm.xlu0 %1319, %v857
      %v1321 = vpop.permute.xlu0 %1320
      %1323 = vset.pattern.permute.xlu0 4
      %1324 = vperm.xlu0 %1323, %v858
      %v1325 = vpop.permute.xlu0 %1324
      %1327 = vset.pattern.permute.xlu0 4
      %1328 = vperm.xlu0 %1327, %v859
      %v1329 = vpop.permute.xlu0 %1328
      %1331 = vset.pattern.permute.xlu0 4
      %1332 = vperm.xlu0 %1331, %v860
      %v1333 = vpop.permute.xlu0 %1332
      %1335 = vset.pattern.permute.xlu0 4
      %1336 = vperm.xlu0 %1335, %v861
      %v1337 = vpop.permute.xlu0 %1336
      %1339 = vset.pattern.permute.xlu0 4
      %1340 = vperm.xlu0 %1339, %v862
      %v1341 = vpop.permute.xlu0 %1340
      %v1343 = vmul.f32 %v1281, %v808
      %v1344 = vmul.f32 %v1285, %v810
      %v1345 = vmul.f32 %v1289, %v813
      %v1346 = vmul.f32 %v1293, %v815
      %v1347 = vmul.f32 %v1297, %v818
      %v1348 = vmul.f32 %v1301, %v820
      %v1349 = vmul.f32 %v1305, %v823
      %v1350 = vmul.f32 %v1309, %v825
      %v1351 = vmul.f32 %v1313, %v828
      %v1352 = vmul.f32 %v1317, %v830
      %v1353 = vmul.f32 %v1321, %v833
      %v1354 = vmul.f32 %v1325, %v835
      %v1355 = vmul.f32 %v1329, %v838
      %v1356 = vmul.f32 %v1333, %v840
      %v1357 = vmul.f32 %v1337, %v843
      %v1358 = vmul.f32 %v1341, %v845
      %v1359 = vadd.f32 %v1263, %v1343
      %v1360 = vadd.f32 %v1264, %v1344
      %v1361 = vadd.f32 %v1265, %v1345
      %v1362 = vadd.f32 %v1266, %v1346
      %v1363 = vadd.f32 %v1267, %v1347
      %v1364 = vadd.f32 %v1268, %v1348
      %v1365 = vadd.f32 %v1269, %v1349
      %v1366 = vadd.f32 %v1270, %v1350
      %v1367 = vadd.f32 %v1271, %v1351
      %v1368 = vadd.f32 %v1272, %v1352
      %v1369 = vadd.f32 %v1273, %v1353
      %v1370 = vadd.f32 %v1274, %v1354
      %v1371 = vadd.f32 %v1275, %v1355
      %v1372 = vadd.f32 %v1276, %v1356
      %v1373 = vadd.f32 %v1277, %v1357
      %v1374 = vadd.f32 %v1278, %v1358
      %s1375 = smul.u32 %s24, 32
      %v1376 = vlaneseq
      %v1377 = vshrl.u32 %v1376, 7
      %v1378 = vadd.s32 %v1377, 8
      %v1379 = vadd.s32 %v1377, 16
      %v1380 = vadd.s32 %v1377, 24
      %v1381 = vstv %s1375
      %v1382 = vadd.s32 %v1381, %v1377
      %v1383 = vadd.s32 %v1381, %v1378
      %v1384 = vadd.s32 %v1381, %v1379
      %v1385 = vadd.s32 %v1381, %v1380
      %v1386 = vld [vmem:[%s431] sm:$0x1]
      %v1387 = vperm.slane %v1386, 0
      %vm1388 = vcmp.eq.s32.totalorder %v1387, %v1382
      %vm1389 = vcmp.eq.s32.totalorder %v1387, %v1383
      %vm1390 = vcmp.eq.s32.totalorder %v1387, %v1384
      %vm1391 = vcmp.eq.s32.totalorder %v1387, %v1385
      %v1392 = vsel %vm1388, 1, 0
      %v1393 = vsel %vm1389, 1, 0
      %v1394 = vsel %vm1390, 1, 0
      %v1395 = vsel %vm1391, 1, 0
      %v1396 = vcvt.s32.f32 %v1392
      %v1397 = vcvt.s32.f32 %v1393
      %v1398 = vcvt.s32.f32 %v1394
      %v1399 = vcvt.s32.f32 %v1395
      %v1400 = vpack.c.bf16 %v1397, %v1396
      %v1401 = vpack.c.bf16 %v1399, %v1398
      %v1402 = vld [vmem:[#allocation2] sm:$0xff]
      %v1403 = vld [vmem:[#allocation2 + $0x8] sm:$0xff]
      %v1404 = vld [vmem:[#allocation2 + $0x10] sm:$0xff]
      %v1405 = vld [vmem:[#allocation2 + $0x18] sm:$0xff]
      %v1406 = vpack.c.bf16 %v1360, %v1359
      %v1407 = vpack.c.bf16 %v1362, %v1361
      %v1408 = vpack.c.bf16 %v1364, %v1363
      %v1409 = vpack.c.bf16 %v1366, %v1365
      %v1410 = vpack.c.bf16 %v1368, %v1367
      %v1411 = vpack.c.bf16 %v1370, %v1369
      %v1412 = vpack.c.bf16 %v1372, %v1371
      %v1413 = vpack.c.bf16 %v1374, %v1373
      %1414 = vmatpush.bf16.msra.mxu0 %v1413
      %1415 = vmatpush.bf16.msra.mxu0 %v1412
      %1416 = vmatpush.bf16.msra.mxu0 %v1411
      %1417 = vmatpush.bf16.msra.mxu0 %v1410
      %1418 = vmatpush.bf16.msra.mxu0 %v1409
      %1419 = vmatpush.bf16.msra.mxu0 %v1408
      %1420 = vmatpush.bf16.msra.mxu0 %v1407
      %1421 = vmatpush.bf16.msra.mxu0 %v1406
      %1422 = vmatmul.bf16.gmra.mxu0 %v1400
      %v1423 = vpop.f32.mrf.mxu0
      %v1424 = vadd.f32 0.0, %v1423
      %v1425 = vpop.f32.mrf.mxu0
      %v1426 = vadd.f32 0.0, %v1425
      %1427 = vmatmul.bf16.gmra.mxu0 %v1401
      %v1428 = vpop.f32.mrf.mxu0
      %v1429 = vadd.f32 0.0, %v1428
      %v1430 = vpop.f32.mrf.mxu0
      %v1431 = vadd.f32 0.0, %v1430
      %1432 = vdwg.mxu0
      %v1433 = vadd.f32 %v1402, %v1424
      %v1434 = vadd.f32 %v1403, %v1426
      %v1435 = vadd.f32 %v1404, %v1429
      %v1436 = vadd.f32 %v1405, %v1431
      %1437 = vst [vmem:[#allocation2] sm:$0xff] %v1433
      %1438 = vst [vmem:[#allocation2 + $0x8] sm:$0xff] %v1434
      %1439 = vst [vmem:[#allocation2 + $0x10] sm:$0xff] %v1435
      %1440 = vst [vmem:[#allocation2 + $0x18] sm:$0xff] %v1436
      %p1441 = scmp.eq.s32.totalorder %s25, 3
      // Predicated region
      $region61: #{net_forward.3} parent=55 // pred_check
        %p1442 = pneg %p1441
      $region62: #{net_forward.3} parent=55 // pred_check_branch
        %1444 = sbr.rel (%p1442) target = $region64
      $region63: #{net_forward.3} parent=55 // pred_region
        %v1445 = vld [vmem:[%s436] sm:$0xff]
        %v1446 = vld [vmem:[%s436 + $0x8] sm:$0xff]
        %v1447 = vld [vmem:[%s436 + $0x10] sm:$0xff]
        %v1448 = vld [vmem:[%s436 + $0x18] sm:$0xff]
        %v1449 = vpack.c.bf16 %v1446, %v1445
        %v1450 = vpack.c.bf16 %v1448, %v1447
        %v1451 = vld [vmem:[#allocation2] sm:$0xff]
        %v1452 = vld [vmem:[#allocation2 + $0x8] sm:$0xff]
        %v1453 = vld [vmem:[#allocation2 + $0x10] sm:$0xff]
        %v1454 = vld [vmem:[#allocation2 + $0x18] sm:$0xff]
        %v1455 = vld [vmem:[%s442] sm:$0xff]
        %v1456 = vld [vmem:[%s442 + $0x8] sm:$0xff]
        %v1457 = vld [vmem:[%s442 + $0x10] sm:$0xff]
        %v1458 = vld [vmem:[%s442 + $0x18] sm:$0xff]
        %1460 = vset.pattern.permute.xlu0 0
        %1461 = vperm.xlu0 %1460, %v1455
        %v1462 = vpop.permute.xlu0 %1461
        %1465 = vset.pattern.permute.xlu0 0
        %1466 = vperm.xlu0 %1465, %v1456
        %v1467 = vpop.permute.xlu0 %1466
        %1470 = vset.pattern.permute.xlu0 0
        %1471 = vperm.xlu0 %1470, %v1457
        %v1472 = vpop.permute.xlu0 %1471
        %1475 = vset.pattern.permute.xlu0 0
        %1476 = vperm.xlu0 %1475, %v1458
        %v1477 = vpop.permute.xlu0 %1476
        %v1479 = vmul.f32 %v1451, %v1462
        %v1480 = vmul.f32 %v1452, %v1467
        %v1481 = vmul.f32 %v1453, %v1472
        %v1482 = vmul.f32 %v1454, %v1477
        %v1483 = vld [vmem:[%s7] sm:$0xff]
        %v1484 = vld [vmem:[%s7 + $0x8] sm:$0xff]
        %v1485 = vld [vmem:[%s7 + $0x10] sm:$0xff]
        %v1486 = vld [vmem:[%s7 + $0x18] sm:$0xff]
        %v1487 = vld [vmem:[%s7 + $0x20] sm:$0xff]
        %v1488 = vld [vmem:[%s7 + $0x28] sm:$0xff]
        %v1489 = vld [vmem:[%s7 + $0x30] sm:$0xff]
        %v1490 = vld [vmem:[%s7 + $0x38] sm:$0xff]
        %v1491 = vld [vmem:[%s7 + $0x40] sm:$0xff]
        %v1492 = vld [vmem:[%s7 + $0x48] sm:$0xff]
        %v1493 = vld [vmem:[%s7 + $0x50] sm:$0xff]
        %v1494 = vld [vmem:[%s7 + $0x58] sm:$0xff]
        %v1495 = vld [vmem:[%s7 + $0x60] sm:$0xff]
        %v1496 = vld [vmem:[%s7 + $0x68] sm:$0xff]
        %v1497 = vld [vmem:[%s7 + $0x70] sm:$0xff]
        %v1498 = vld [vmem:[%s7 + $0x78] sm:$0xff]
        %v1499 = vpack.c.bf16 %v1484, %v1483
        %v1500 = vpack.c.bf16 %v1486, %v1485
        %v1501 = vpack.c.bf16 %v1488, %v1487
        %v1502 = vpack.c.bf16 %v1490, %v1489
        %v1503 = vpack.c.bf16 %v1492, %v1491
        %v1504 = vpack.c.bf16 %v1494, %v1493
        %v1505 = vpack.c.bf16 %v1496, %v1495
        %v1506 = vpack.c.bf16 %v1498, %v1497
        %1507 = vmatpush.bf16.msra.mxu0 %v1506
        %1508 = vmatpush.bf16.msra.mxu0 %v1505
        %1509 = vmatpush.bf16.msra.mxu0 %v1504
        %1510 = vmatpush.bf16.msra.mxu0 %v1503
        %1511 = vmatpush.bf16.msra.mxu0 %v1502
        %1512 = vmatpush.bf16.msra.mxu0 %v1501
        %1513 = vmatpush.bf16.msra.mxu0 %v1500
        %1514 = vmatpush.bf16.msra.mxu0 %v1499
        %1515 = vmatmul.bf16.gmra.mxu0 %v1449
        %v1516 = vpop.f32.mrf.mxu0
        %v1517 = vadd.f32 0.0, %v1516
        %v1518 = vpop.f32.mrf.mxu0
        %v1519 = vadd.f32 0.0, %v1518
        %1520 = vmatmul.bf16.gmra.mxu0 %v1450
        %v1521 = vpop.f32.mrf.mxu0
        %v1522 = vadd.f32 0.0, %v1521
        %v1523 = vpop.f32.mrf.mxu0
        %v1524 = vadd.f32 0.0, %v1523
        %1525 = vdwg.mxu0
        %v1526 = vadd.f32 %v1479, %v1517
        %v1527 = vadd.f32 %v1480, %v1519
        %v1528 = vadd.f32 %v1481, %v1522
        %v1529 = vadd.f32 %v1482, %v1524
        %v1530 = vld [vmem:[%s8] sm:$0x1]
        %v1532 = vperm.slane %v1530, 0
        %v1534 = vadd.f32 %v1526, %v1532
        %v1535 = vadd.f32 %v1527, %v1532
        %v1536 = vadd.f32 %v1528, %v1532
        %v1537 = vadd.f32 %v1529, %v1532
        %v1538 = vlaneseq
        %v1539 = vand.u32 %v1538, 127
        %vm1540 = vcmp.lt.s32.totalorder %v1539, 8
        %v1541 = vsel %vm1540, %v1534, -inf
        %v1542 = vsel %vm1540, %v1535, -inf
        %v1543 = vsel %vm1540, %v1536, -inf
        %v1544 = vsel %vm1540, %v1537, -inf
        %1545 = vmax.xlane.f32.xlu0 %v1541
        %v1546 = vpop.xlane.xlu0 %1545
        %1547 = vmax.xlane.f32.xlu0 %v1542
        %v1548 = vpop.xlane.xlu0 %1547
        %1549 = vmax.xlane.f32.xlu0 %v1543
        %v1550 = vpop.xlane.xlu0 %1549
        %1551 = vmax.xlane.f32.xlu0 %v1544
        %v1552 = vpop.xlane.xlu0 %1551
        %v1553 = vsub.f32 %v1541, %v1546
        %v1554 = vsub.f32 %v1542, %v1548
        %v1555 = vsub.f32 %v1543, %v1550
        %v1556 = vsub.f32 %v1544, %v1552
        %v1557 = vmul.f32 %v1553, 1.442695
        %v1558 = vpow.pop %v1557
        %v1559 = vmul.f32 %v1554, 1.442695
        %v1560 = vpow.pop %v1559
        %v1561 = vmul.f32 %v1555, 1.442695
        %v1562 = vpow.pop %v1561
        %v1563 = vmul.f32 %v1556, 1.442695
        %v1564 = vpow.pop %v1563
        %v1565 = vsel %vm1540, %v1558, 0.0
        %v1566 = vsel %vm1540, %v1560, 0.0
        %v1567 = vsel %vm1540, %v1562, 0.0
        %v1568 = vsel %vm1540, %v1564, 0.0
        %1569 = vadd.xlane.f32.xlu0 %v1565
        %v1570 = vpop.xlane.xlu0 %1569
        %1571 = vadd.xlane.f32.xlu0 %v1566
        %v1572 = vpop.xlane.xlu0 %1571
        %1573 = vadd.xlane.f32.xlu0 %v1567
        %v1574 = vpop.xlane.xlu0 %1573
        %1575 = vadd.xlane.f32.xlu0 %v1568
        %v1576 = vpop.xlane.xlu0 %1575
        %v1577 = vlog2.pop %v1570
        %v1578 = vmul.f32 %v1577, 0.6931472
        %v1579 = vlog2.pop %v1572
        %v1580 = vmul.f32 %v1579, 0.6931472
        %v1581 = vlog2.pop %v1574
        %v1582 = vmul.f32 %v1581, 0.6931472
        %v1583 = vlog2.pop %v1576
        %v1584 = vmul.f32 %v1583, 0.6931472
        %v1585 = vsub.f32 %v1553, %v1578
        %v1586 = vsub.f32 %v1554, %v1580
        %v1587 = vsub.f32 %v1555, %v1582
        %v1588 = vsub.f32 %v1556, %v1584
        %v1589 = vsel %vm1540, %v1585, 0.0
        %v1590 = vsel %vm1540, %v1586, 0.0
        %v1591 = vsel %vm1540, %v1587, 0.0
        %v1592 = vsel %vm1540, %v1588, 0.0
        %1593 = vst [vmem:[%s448] sm:$0xff] %v1589
        %1594 = vst [vmem:[%s448 + $0x8] sm:$0xff] %v1590
        %1595 = vst [vmem:[%s448 + $0x10] sm:$0xff] %v1591
        %1596 = vst [vmem:[%s448 + $0x18] sm:$0xff] %v1592
      $region64: #{net_forward.3} parent=55 // pred_fallthru
        _
      %s1597 = smul.u32 4, %s24
      %p1598 = scmp.lt.s32.totalorder %s1597, 7
      %s1599 = scalar_select %p1598, %s1597, 7
      %s1600 = smul.addr %s1599, 8
      %s1601 = scalar_lea.vmem %s9, %s1600
      // Predicated region
      $region65: #{net_forward.3} parent=55 // pred_check
        %p1602 = pneg %p269
      $region66: #{net_forward.3} parent=55 // pred_check_branch
        %1604 = sbr.rel (%p1602) target = $region68
      $region67: #{net_forward.3} parent=55 // pred_region
        %s1605 = smul.u32 4, %s24
      $region68: #{net_forward.3} parent=55 // pred_fallthru
        _
    $region56: #{net_forward.3} parent=5 // pred_fallthru
      _
    %p1606 = scmp.le.s32.totalorder 2, %s15
    // Predicated region
    $region69: #{net_forward.3} parent=5 // pred_check
      %p1607 = pneg %p1606
    $region70: #{net_forward.3} parent=5 // pred_check_branch
      %1609 = sbr.rel (%p1607) target = $region72
    $region71: #{net_forward.3} parent=5 // pred_region
      %s1610 = ssub.s32 %s15, 2
      // Predicated region
      $region73: #{net_forward.3} parent=71 // pred_check
        %p1611 = pneg %p275
      $region74: #{net_forward.3} parent=71 // pred_check_branch
        %1613 = sbr.rel (%p1611) target = $region76
      $region75: #{net_forward.3} parent=71 // pred_region
        %s1614 = smul.u32 4, %s26
        %p1615 = scmp.lt.s32.totalorder %s1614, 7
        %s1616 = scalar_select %p1615, %s1614, 7
        %s1617 = smul.addr %s1616, 8
        %s1618 = scalar_lea.vmem %s9, %s1617
      $region76: #{net_forward.3} parent=71 // pred_fallthru
        _
    $region72: #{net_forward.3} parent=5 // pred_fallthru
      _
  $region6: #{net_forward.3} parent=0 // loop_footer
    %s19 = sadd.s32 1, %s15
  $region7: #{net_forward.3} parent=0 // loop_footer_branch
    %14 = sbr.rel target = $region3
  $region8: #{net_forward.3} parent=0 // loop_exit
    _

</llo_original>
